<compile_context>
chip_gen: v5e
topology: v5e:2x2
jax: 0.10.0
libtpu: 0.0.40
codegen_flags: <defaults>
</compile_context>

<pallas_src>
import numpy as np
import jax
import jax.numpy as jnp
from jax import lax
from jax.experimental import pallas as pl
from jax.experimental.pallas import tpu as pltpu


def _round_up(x, m):
    return ((x + m - 1) // m) * m


# ----------------------------- fused forward -------------------------------

def up_forward(params, x1_nchw, x2_nchw):
    """Matches Up(in_channels, out_channels, bilinear=False).forward(x1, x2)."""
    x1 = x1_nchw.astype(jnp.float32)
    x2 = x2_nchw.astype(jnp.float32)
    N, Cin, H, W = x1.shape
    _, Ch, H2, W2 = x2.shape
    assert Cin == 2 * Ch
    Cmid = params["c1_w"].shape[0]
    Cout = params["c2_w"].shape[0]
    HW = H * W
    M = H2 * W2
    dy0 = (H2 - 2 * H) // 2           # F.pad offsets (top / left)
    dx0 = (W2 - 2 * W) // 2
    eps = 1e-5

    CP1 = _round_up(2 * Ch, 8)        # conv1 im2col per-tap sublane block
    CP2 = _round_up(Cmid, 8)          # conv2 im2col per-tap sublane block

    # channel-major flat-pixel views (contiguous reshapes, free)
    x1f = x1.reshape(N, Cin, HW)
    x2f = x2.reshape(N, Ch, M)

    # ---- compile-time constants (numpy, shape-dependent only) ----
    yy = np.arange(H2).reshape(H2, 1)
    xx = np.arange(W2).reshape(1, W2)
    ysrc = yy - dy0
    xsrc = xx - dx0
    inside = (ysrc >= 0) & (ysrc < 2 * H) & (xsrc >= 0) & (xsrc < 2 * W)
    h_idx = np.clip(ysrc // 2, 0, H - 1)
    w_idx = np.clip(xsrc // 2, 0, W - 1)
    src = np.broadcast_to(h_idx * W + w_idx, (H2, W2)).reshape(-1)
    # 0/1 replication matrix: xrep = x1_flat @ e_rep realizes the 2x nearest-
    # neighbour upsample + F.pad placement on the MXU (no lane scatter).
    e_rep = np.zeros((HW, M), np.float32)
    e_rep[src, np.arange(M)] = inside.reshape(-1).astype(np.float32)

    # transposed-conv parity masks (which 2x2 tap owns each output pixel)
    pmask = np.zeros((4, M), np.float32)
    for p in range(2):
        for q in range(2):
            m = inside & ((ysrc % 2) == p) & ((xsrc % 2) == q)
            pmask[p * 2 + q] = np.broadcast_to(m, (H2, W2)).reshape(-1)

    # 3x3 SAME-conv boundary masks per tap (row + column validity)
    cmask = np.zeros((9, M), np.float32)
    for kh in range(3):
        for kw in range(3):
            dh, dw = kh - 1, kw - 1
            v = ((yy + dh >= 0) & (yy + dh < H2) &
                 (xx + dw >= 0) & (xx + dw < W2))
            cmask[kh * 3 + kw] = np.broadcast_to(v, (H2, W2)).reshape(-1)

    e_rep = jnp.asarray(e_rep)
    pmask = jnp.asarray(pmask)
    cmask = jnp.asarray(cmask)

    # ---- weight repacking (tiny, once per call in XLA) ----
    # ConvTranspose2d weight (Cin, Ch, 2, 2) -> per-parity-tap (4, Ch, Cin)
    wt = jnp.transpose(params["up_w"], (2, 3, 1, 0)).reshape(4, Ch, Cin)
    upb = params["up_b"].reshape(Ch, 1)
    # conv1 (Cmid, 2Ch, 3, 3) -> (Cmid, 9*CP1): tap-major, channel block = CP1
    w1 = jnp.transpose(params["c1_w"], (0, 2, 3, 1))                # (Cmid,3,3,2Ch)
    w1 = jnp.pad(w1, ((0, 0), (0, 0), (0, 0), (0, CP1 - 2 * Ch)))
    w1_all = w1.reshape(Cmid, 9 * CP1)
    # conv2 (Cout, Cmid, 3, 3) -> (Cout, 9*CP2)
    w2 = jnp.transpose(params["c2_w"], (0, 2, 3, 1))
    w2 = jnp.pad(w2, ((0, 0), (0, 0), (0, 0), (0, CP2 - Cmid)))
    w2_all = w2.reshape(Cout, 9 * CP2)

    cparams = pltpu.CompilerParams(
        dimension_semantics=("parallel",),
        vmem_limit_bytes=32 * 1024 * 1024,
    )

    def build_slab(slab_ref, base, cm):
        """base: (CPx, M) channel-major frame -> 9-tap im2col slab in VMEM."""
        rows = base.shape[0]
        for kh in range(3):
            for kw in range(3):
                t = kh * 3 + kw
                off = (kh - 1) * W2 + (kw - 1)
                sh = base if off == 0 else pltpu.roll(base, shift=(-off) % M, axis=1)
                slab_ref[t * rows:(t + 1) * rows, :] = sh * cm[t:t + 1, :]

    # -------- kernel 1: tconv-up + pad + concat + conv1 + BN1 stats ---------
    def k1(x1_ref, x2_ref, erep_ref, pmask_ref, cmask_ref, wt_ref, upb_ref,
           w1_ref, h1_ref, s1_ref, ss1_ref, slab_ref):
        # ConvTranspose2d(k=2, s=2): MXU-based replication + parity-masked taps
        xrep = jnp.dot(x1_ref[0], erep_ref[...],
                       preferred_element_type=jnp.float32)           # (Cin, M)
        pm = pmask_ref[...]
        b = upb_ref[...]
        up = jnp.zeros((Ch, M), jnp.float32)
        for t in range(4):
            tap = jnp.dot(wt_ref[t], xrep,
                          preferred_element_type=jnp.float32)        # (Ch, M)
            up = up + pm[t:t + 1, :] * (tap + b)
        # torch.cat([x2, up], dim=1) in channel-major layout (+ pad rows)
        parts = [x2_ref[0], up]
        if CP1 > 2 * Ch:
            parts.append(jnp.zeros((CP1 - 2 * Ch, M), jnp.float32))
        base = jnp.concatenate(parts, axis=0)                        # (CP1, M)
        # conv1 (3x3 SAME) as a single im2col matmul
        build_slab(slab_ref, base, cmask_ref[...])
        acc = jnp.dot(w1_ref[...], slab_ref[...],
                      preferred_element_type=jnp.float32)            # (Cmid, M)
        h1_ref[0] = acc
        s1_ref[0] = jnp.sum(acc, axis=1, keepdims=True)
        ss1_ref[0] = jnp.sum(acc * acc, axis=1, keepdims=True)

    h1, s1, ss1 = pl.pallas_call(
        k1,
        grid=(N,),
        in_specs=[
            pl.BlockSpec((1, Cin, HW), lambda n: (n, 0, 0)),
            pl.BlockSpec((1, Ch, M), lambda n: (n, 0, 0)),
            pl.BlockSpec((HW, M), lambda n: (0, 0)),
            pl.BlockSpec((4, M), lambda n: (0, 0)),
            pl.BlockSpec((9, M), lambda n: (0, 0)),
            pl.BlockSpec((4, Ch, Cin), lambda n: (0, 0, 0)),
            pl.BlockSpec((Ch, 1), lambda n: (0, 0)),
            pl.BlockSpec((Cmid, 9 * CP1), lambda n: (0, 0)),
        ],
        out_specs=(
            pl.BlockSpec((1, Cmid, M), lambda n: (n, 0, 0)),
            pl.BlockSpec((1, Cmid, 1), lambda n: (n, 0, 0)),
            pl.BlockSpec((1, Cmid, 1), lambda n: (n, 0, 0)),
        ),
        out_shape=(
            jax.ShapeDtypeStruct((N, Cmid, M), jnp.float32),
            jax.ShapeDtypeStruct((N, Cmid, 1), jnp.float32),
            jax.ShapeDtypeStruct((N, Cmid, 1), jnp.float32),
        ),
        scratch_shapes=[pltpu.VMEM((9 * CP1, M), jnp.float32)],
        compiler_params=cparams,
    )(x1f, x2f, e_rep, pmask, cmask, wt, upb, w1_all)

    # tiny cross-batch BN1 reduction (training-mode batch stats, biased var)
    cnt = float(N * M)
    mean1 = jnp.sum(s1, axis=0) / cnt                                 # (Cmid, 1)
    var1 = jnp.maximum(jnp.sum(ss1, axis=0) / cnt - mean1 * mean1, 0.0)
    a1 = params["bn1_g"].reshape(Cmid, 1) * lax.rsqrt(var1 + eps)
    b1 = params["bn1_b"].reshape(Cmid, 1) - mean1 * a1

    # -------- kernel 2: BN1 + ReLU + conv2 + BN2 stats -----------------------
    def k2(h1_ref, a1_ref, b1_ref, cmask_ref, w2_ref,
           h2_ref, s2_ref, ss2_ref, slab_ref):
        act = jnp.maximum(h1_ref[0] * a1_ref[...] + b1_ref[...], 0.0)  # (Cmid, M)
        if CP2 > Cmid:
            base = jnp.concatenate(
                [act, jnp.zeros((CP2 - Cmid, M), jnp.float32)], axis=0)
        else:
            base = act
        build_slab(slab_ref, base, cmask_ref[...])
        acc = jnp.dot(w2_ref[...], slab_ref[...],
                      preferred_element_type=jnp.float32)              # (Cout, M)
        h2_ref[0] = acc
        s2_ref[0] = jnp.sum(acc, axis=1, keepdims=True)
        ss2_ref[0] = jnp.sum(acc * acc, axis=1, keepdims=True)

    h2, s2, ss2 = pl.pallas_call(
        k2,
        grid=(N,),
        in_specs=[
            pl.BlockSpec((1, Cmid, M), lambda n: (n, 0, 0)),
            pl.BlockSpec((Cmid, 1), lambda n: (0, 0)),
            pl.BlockSpec((Cmid, 1), lambda n: (0, 0)),
            pl.BlockSpec((9, M), lambda n: (0, 0)),
            pl.BlockSpec((Cout, 9 * CP2), lambda n: (0, 0)),
        ],
        out_specs=(
            pl.BlockSpec((1, Cout, M), lambda n: (n, 0, 0)),
            pl.BlockSpec((1, Cout, 1), lambda n: (n, 0, 0)),
            pl.BlockSpec((1, Cout, 1), lambda n: (n, 0, 0)),
        ),
        out_shape=(
            jax.ShapeDtypeStruct((N, Cout, M), jnp.float32),
            jax.ShapeDtypeStruct((N, Cout, 1), jnp.float32),
            jax.ShapeDtypeStruct((N, Cout, 1), jnp.float32),
        ),
        scratch_shapes=[pltpu.VMEM((9 * CP2, M), jnp.float32)],
        compiler_params=cparams,
    )(h1, a1, b1, cmask, w2_all)

    mean2 = jnp.sum(s2, axis=0) / cnt
    var2 = jnp.maximum(jnp.sum(ss2, axis=0) / cnt - mean2 * mean2, 0.0)
    a2 = params["bn2_g"].reshape(Cout, 1) * lax.rsqrt(var2 + eps)
    b2 = params["bn2_b"].reshape(Cout, 1) - mean2 * a2

    # BN2 affine + ReLU + reshape left to XLA (fuses for free; K3 dropped).
    out = jnp.maximum(h2 * a2 + b2, 0.0)
    return out.reshape(N, Cout, H2, W2)


# ----------------------------- pure-JAX reference ---------------------------

def _ref_conv(x, w_oihw):
    w_hwio = jnp.transpose(w_oihw, (2, 3, 1, 0))
    return lax.conv_general_dilated(
        x, w_hwio, (1, 1), "SAME",
        dimension_numbers=("NHWC", "HWIO", "NHWC"),
        precision=lax.Precision.HIGHEST)


def _ref_bn_relu(x, g, b):
    mean = jnp.mean(x, axis=(0, 1, 2), keepdims=True)
    var = jnp.var(x, axis=(0, 1, 2), keepdims=True)
    return jnp.maximum((x - mean) * lax.rsqrt(var + 1e-5) * g + b, 0.0)


def ref_up_forward(params, x1_nchw, x2_nchw):
    x1 = jnp.transpose(x1_nchw, (0, 2, 3, 1)).astype(jnp.float32)
    x2 = jnp.transpose(x2_nchw, (0, 2, 3, 1)).astype(jnp.float32)
    N, H, W, _ = x1.shape
    Co = params["up_w"].shape[1]
    up = jnp.einsum("nhwi,iokl->nhkwlo", x1, params["up_w"],
                    precision=lax.Precision.HIGHEST)
    up = up.reshape(N, 2 * H, 2 * W, Co) + params["up_b"]
    diffY = x2.shape[1] - up.shape[1]
    diffX = x2.shape[2] - up.shape[2]
    up = jnp.pad(up, ((0, 0),
                      (diffY // 2, diffY - diffY // 2),
                      (diffX // 2, diffX - diffX // 2),
                      (0, 0)))
    x = jnp.concatenate([x2, up], axis=-1)
    h = _ref_bn_relu(_ref_conv(x, params["c1_w"]), params["bn1_g"], params["bn1_b"])
    h = _ref_bn_relu(_ref_conv(h, params["c2_w"]), params["bn2_g"], params["bn2_b"])
    return jnp.transpose(h, (0, 3, 1, 2))


# ----------------------------- main ------------------------------------------

if __name__ == "__main__":
    key = jax.random.PRNGKey(0)
    ks = jax.random.split(key, 10)

    # Up(in_channels=8, out_channels=4, bilinear=False)
    N, in_ch, out_ch = 2, 8, 4
    H = W = 16                      # x1 spatial; x2 (skip) is 2x
    half = in_ch // 2

    params = {
        # ConvTranspose2d(in_ch, in_ch//2, kernel_size=2, stride=2): (Cin, Co, 2, 2)
        "up_w": 0.1 * jax.random.normal(ks[0], (in_ch, half, 2, 2), jnp.float32),
        "up_b": 0.1 * jax.random.normal(ks[1], (half,), jnp.float32),
        # DoubleConv(in_ch, out_ch): OIHW weights, bias=False
        "c1_w": 0.1 * jax.random.normal(ks[2], (out_ch, in_ch, 3, 3), jnp.float32),
        "c2_w": 0.1 * jax.random.normal(ks[3], (out_ch, out_ch, 3, 3), jnp.float32),
        "bn1_g": 1.0 + 0.1 * jax.random.normal(ks[4], (out_ch,), jnp.float32),
        "bn1_b": 0.1 * jax.random.normal(ks[5], (out_ch,), jnp.float32),
        "bn2_g": 1.0 + 0.1 * jax.random.normal(ks[6], (out_ch,), jnp.float32),
        "bn2_b": 0.1 * jax.random.normal(ks[7], (out_ch,), jnp.float32),
    }

    x1 = jax.random.normal(ks[8], (N, in_ch, H, W), jnp.float32)          # decoder feature
    x2 = jax.random.normal(ks[9], (N, half, 2 * H, 2 * W), jnp.float32)   # encoder skip

    up_fn = jax.jit(up_forward)
    out = jax.block_until_ready(up_fn(params, x1, x2))
    ref = jax.block_until_ready(ref_up_forward(params, x1, x2))

    assert out.shape == (N, out_ch, 2 * H, 2 * W), out.shape
    err = float(jnp.max(jnp.abs(out - ref)))
    assert jnp.allclose(out, ref, rtol=1e-3, atol=1e-3), err
    print("KERNEL_OK")
</pallas_src>

<mosaic_0001>
module attributes {stable_mosaic.version = 11 : i64} {
  func.func @k1(%arg0: i32, %arg1: memref<1x8x256xf32, #tpu.memory_space<vmem>>, %arg2: memref<1x4x1024xf32, #tpu.memory_space<vmem>>, %arg3: memref<256x1024xf32, #tpu.memory_space<vmem>>, %arg4: memref<4x1024xf32, #tpu.memory_space<vmem>>, %arg5: memref<9x1024xf32, #tpu.memory_space<vmem>>, %arg6: memref<4x4x8xf32, #tpu.memory_space<vmem>>, %arg7: memref<4x1xf32, #tpu.memory_space<vmem>>, %arg8: memref<4x72xf32, #tpu.memory_space<vmem>>, %arg9: memref<1x4x1024xf32, #tpu.memory_space<vmem>>, %arg10: memref<1x4x1xf32, #tpu.memory_space<vmem>>, %arg11: memref<1x4x1xf32, #tpu.memory_space<vmem>>, %arg12: memref<72x1024xf32, #tpu.memory_space<vmem>>) attributes {dimension_semantics = [#tpu.dimension_semantics<parallel>], iteration_bounds = array<i64: 2>, scalar_prefetch = 0 : i64, scratch_operands = 1 : i64, tpu.core_type = #tpu.core_type<tc>, window_params = [{transform_indices = @transform_0, window_bounds = array<i64: 1, 8, 256>}, {transform_indices = @transform_1, window_bounds = array<i64: 1, 4, 1024>}, {pipeline_mode = #tpu.pipeline_mode<synchronous>, transform_indices = @transform_2, window_bounds = array<i64: 256, 1024>}, {pipeline_mode = #tpu.pipeline_mode<synchronous>, transform_indices = @transform_3, window_bounds = array<i64: 4, 1024>}, {pipeline_mode = #tpu.pipeline_mode<synchronous>, transform_indices = @transform_4, window_bounds = array<i64: 9, 1024>}, {pipeline_mode = #tpu.pipeline_mode<synchronous>, transform_indices = @transform_5, window_bounds = array<i64: 4, 4, 8>}, {pipeline_mode = #tpu.pipeline_mode<synchronous>, transform_indices = @transform_6, window_bounds = array<i64: 4, 1>}, {pipeline_mode = #tpu.pipeline_mode<synchronous>, transform_indices = @transform_7, window_bounds = array<i64: 4, 72>}, {transform_indices = @transform_8, window_bounds = array<i64: 1, 4, 1024>}, {transform_indices = @transform_9, window_bounds = array<i64: 1, 4, 1>}, {transform_indices = @transform_10, window_bounds = array<i64: 1, 4, 1>}]} {
    %c0 = arith.constant 0 : index
    %c0_0 = arith.constant 0 : index
    %c0_1 = arith.constant 0 : index
    %0 = vector.load %arg1[%c0, %c0_0, %c0_1] : memref<1x8x256xf32, #tpu.memory_space<vmem>>, vector<1x8x256xf32>
    %1 = vector.shape_cast %0 : vector<1x8x256xf32> to vector<8x256xf32>
    %c0_2 = arith.constant 0 : index
    %c0_3 = arith.constant 0 : index
    %2 = vector.load %arg3[%c0_2, %c0_3] : memref<256x1024xf32, #tpu.memory_space<vmem>>, vector<256x1024xf32>
    %cst = arith.constant dense<0.000000e+00> : vector<8x1024xf32>
    %3 = tpu.matmul %1, %2, %cst {dimension_numbers = #tpu.dot_dimension_numbers<[1], [0], [0], [1], [0, 0, 1, 1], [], []>} : vector<8x256xf32>, vector<256x1024xf32>, vector<8x1024xf32> -> vector<8x1024xf32>
    %c0_4 = arith.constant 0 : index
    %c0_5 = arith.constant 0 : index
    %4 = vector.load %arg4[%c0_4, %c0_5] : memref<4x1024xf32, #tpu.memory_space<vmem>>, vector<4x1024xf32>
    %c0_6 = arith.constant 0 : index
    %c0_7 = arith.constant 0 : index
    %5 = vector.load %arg7[%c0_6, %c0_7] : memref<4x1xf32, #tpu.memory_space<vmem>>, vector<4x1xf32>
    %cst_8 = arith.constant 0.000000e+00 : f32
    %6 = vector.broadcast %cst_8 : f32 to vector<4x1024xf32>
    %c0_9 = arith.constant 0 : index
    %c0_10 = arith.constant 0 : index
    %c0_11 = arith.constant 0 : index
    %7 = vector.load %arg6[%c0_9, %c0_10, %c0_11] : memref<4x4x8xf32, #tpu.memory_space<vmem>>, vector<1x4x8xf32>
    %8 = vector.shape_cast %7 : vector<1x4x8xf32> to vector<4x8xf32>
    %cst_12 = arith.constant dense<0.000000e+00> : vector<4x1024xf32>
    %9 = tpu.matmul %8, %3, %cst_12 {dimension_numbers = #tpu.dot_dimension_numbers<[1], [0], [0], [1], [0, 0, 1, 1], [], []>} : vector<4x8xf32>, vector<8x1024xf32>, vector<4x1024xf32> -> vector<4x1024xf32>
    %10 = vector.extract_strided_slice %4 {offsets = [0, 0], sizes = [1, 1024], strides = [1, 1]} : vector<4x1024xf32> to vector<1x1024xf32>
    %11 = vector.broadcast %5 : vector<4x1xf32> to vector<4x1024xf32>
    %12 = arith.addf %9, %11 : vector<4x1024xf32>
    %13 = vector.broadcast %10 : vector<1x1024xf32> to vector<4x1024xf32>
    %14 = arith.mulf %13, %12 : vector<4x1024xf32>
    %15 = arith.addf %6, %14 : vector<4x1024xf32>
    %c1 = arith.constant 1 : index
    %c0_13 = arith.constant 0 : index
    %c0_14 = arith.constant 0 : index
    %16 = vector.load %arg6[%c1, %c0_13, %c0_14] : memref<4x4x8xf32, #tpu.memory_space<vmem>>, vector<1x4x8xf32>
    %17 = vector.shape_cast %16 : vector<1x4x8xf32> to vector<4x8xf32>
    %cst_15 = arith.constant dense<0.000000e+00> : vector<4x1024xf32>
    %18 = tpu.matmul %17, %3, %cst_15 {dimension_numbers = #tpu.dot_dimension_numbers<[1], [0], [0], [1], [0, 0, 1, 1], [], []>} : vector<4x8xf32>, vector<8x1024xf32>, vector<4x1024xf32> -> vector<4x1024xf32>
    %19 = vector.extract_strided_slice %4 {offsets = [1, 0], sizes = [1, 1024], strides = [1, 1]} : vector<4x1024xf32> to vector<1x1024xf32>
    %20 = vector.broadcast %5 : vector<4x1xf32> to vector<4x1024xf32>
    %21 = arith.addf %18, %20 : vector<4x1024xf32>
    %22 = vector.broadcast %19 : vector<1x1024xf32> to vector<4x1024xf32>
    %23 = arith.mulf %22, %21 : vector<4x1024xf32>
    %24 = arith.addf %15, %23 : vector<4x1024xf32>
    %c2 = arith.constant 2 : index
    %c0_16 = arith.constant 0 : index
    %c0_17 = arith.constant 0 : index
    %25 = vector.load %arg6[%c2, %c0_16, %c0_17] : memref<4x4x8xf32, #tpu.memory_space<vmem>>, vector<1x4x8xf32>
    %26 = vector.shape_cast %25 : vector<1x4x8xf32> to vector<4x8xf32>
    %cst_18 = arith.constant dense<0.000000e+00> : vector<4x1024xf32>
    %27 = tpu.matmul %26, %3, %cst_18 {dimension_numbers = #tpu.dot_dimension_numbers<[1], [0], [0], [1], [0, 0, 1, 1], [], []>} : vector<4x8xf32>, vector<8x1024xf32>, vector<4x1024xf32> -> vector<4x1024xf32>
    %28 = vector.extract_strided_slice %4 {offsets = [2, 0], sizes = [1, 1024], strides = [1, 1]} : vector<4x1024xf32> to vector<1x1024xf32>
    %29 = vector.broadcast %5 : vector<4x1xf32> to vector<4x1024xf32>
    %30 = arith.addf %27, %29 : vector<4x1024xf32>
    %31 = vector.broadcast %28 : vector<1x1024xf32> to vector<4x1024xf32>
    %32 = arith.mulf %31, %30 : vector<4x1024xf32>
    %33 = arith.addf %24, %32 : vector<4x1024xf32>
    %c3 = arith.constant 3 : index
    %c0_19 = arith.constant 0 : index
    %c0_20 = arith.constant 0 : index
    %34 = vector.load %arg6[%c3, %c0_19, %c0_20] : memref<4x4x8xf32, #tpu.memory_space<vmem>>, vector<1x4x8xf32>
    %35 = vector.shape_cast %34 : vector<1x4x8xf32> to vector<4x8xf32>
    %cst_21 = arith.constant dense<0.000000e+00> : vector<4x1024xf32>
    %36 = tpu.matmul %35, %3, %cst_21 {dimension_numbers = #tpu.dot_dimension_numbers<[1], [0], [0], [1], [0, 0, 1, 1], [], []>} : vector<4x8xf32>, vector<8x1024xf32>, vector<4x1024xf32> -> vector<4x1024xf32>
    %37 = vector.extract_strided_slice %4 {offsets = [3, 0], sizes = [1, 1024], strides = [1, 1]} : vector<4x1024xf32> to vector<1x1024xf32>
    %38 = vector.broadcast %5 : vector<4x1xf32> to vector<4x1024xf32>
    %39 = arith.addf %36, %38 : vector<4x1024xf32>
    %40 = vector.broadcast %37 : vector<1x1024xf32> to vector<4x1024xf32>
    %41 = arith.mulf %40, %39 : vector<4x1024xf32>
    %42 = arith.addf %33, %41 : vector<4x1024xf32>
    %c0_22 = arith.constant 0 : index
    %c0_23 = arith.constant 0 : index
    %c0_24 = arith.constant 0 : index
    %43 = vector.load %arg2[%c0_22, %c0_23, %c0_24] : memref<1x4x1024xf32, #tpu.memory_space<vmem>>, vector<1x4x1024xf32>
    %44 = vector.shape_cast %43 : vector<1x4x1024xf32> to vector<4x1024xf32>
    %45 = tpu.concatenate %44, %42 in 0 : vector<4x1024xf32>, vector<4x1024xf32> -> vector<8x1024xf32>
    %c0_25 = arith.constant 0 : index
    %c0_26 = arith.constant 0 : index
    %46 = vector.load %arg5[%c0_25, %c0_26] : memref<9x1024xf32, #tpu.memory_space<vmem>>, vector<9x1024xf32>
    %c33_i32 = arith.constant 33 : i32
    %47 = tpu.dynamic_rotate %45 by %c33_i32 dim 1 : vector<8x1024xf32>, i32 -> vector<8x1024xf32>
    %48 = vector.extract_strided_slice %46 {offsets = [0, 0], sizes = [1, 1024], strides = [1, 1]} : vector<9x1024xf32> to vector<1x1024xf32>
    %49 = vector.broadcast %48 : vector<1x1024xf32> to vector<8x1024xf32>
    %50 = arith.mulf %47, %49 : vector<8x1024xf32>
    %c0_27 = arith.constant 0 : index
    %c0_28 = arith.constant 0 : index
    %51 = vector.load %arg12[%c0_27, %c0_28] : memref<72x1024xf32, #tpu.memory_space<vmem>>, vector<8x1024xf32>
    tpu.vector_store %arg12[%c0_27, %c0_28], %50 {strides = array<i32>} : memref<72x1024xf32, #tpu.memory_space<vmem>>, vector<8x1024xf32>,
    %c32_i32 = arith.constant 32 : i32
    %52 = tpu.dynamic_rotate %45 by %c32_i32 dim 1 : vector<8x1024xf32>, i32 -> vector<8x1024xf32>
    %53 = vector.extract_strided_slice %46 {offsets = [1, 0], sizes = [1, 1024], strides = [1, 1]} : vector<9x1024xf32> to vector<1x1024xf32>
    %54 = vector.broadcast %53 : vector<1x1024xf32> to vector<8x1024xf32>
    %55 = arith.mulf %52, %54 : vector<8x1024xf32>
    %c8 = arith.constant 8 : index
    %c0_29 = arith.constant 0 : index
    %56 = vector.load %arg12[%c8, %c0_29] : memref<72x1024xf32, #tpu.memory_space<vmem>>, vector<8x1024xf32>
    tpu.vector_store %arg12[%c8, %c0_29], %55 {strides = array<i32>} : memref<72x1024xf32, #tpu.memory_space<vmem>>, vector<8x1024xf32>,
    %c31_i32 = arith.constant 31 : i32
    %57 = tpu.dynamic_rotate %45 by %c31_i32 dim 1 : vector<8x1024xf32>, i32 -> vector<8x1024xf32>
    %58 = vector.extract_strided_slice %46 {offsets = [2, 0], sizes = [1, 1024], strides = [1, 1]} : vector<9x1024xf32> to vector<1x1024xf32>
    %59 = vector.broadcast %58 : vector<1x1024xf32> to vector<8x1024xf32>
    %60 = arith.mulf %57, %59 : vector<8x1024xf32>
    %c16 = arith.constant 16 : index
    %c0_30 = arith.constant 0 : index
    %61 = vector.load %arg12[%c16, %c0_30] : memref<72x1024xf32, #tpu.memory_space<vmem>>, vector<8x1024xf32>
    tpu.vector_store %arg12[%c16, %c0_30], %60 {strides = array<i32>} : memref<72x1024xf32, #tpu.memory_space<vmem>>, vector<8x1024xf32>,
    %c1_i32 = arith.constant 1 : i32
    %62 = tpu.dynamic_rotate %45 by %c1_i32 dim 1 : vector<8x1024xf32>, i32 -> vector<8x1024xf32>
    %63 = vector.extract_strided_slice %46 {offsets = [3, 0], sizes = [1, 1024], strides = [1, 1]} : vector<9x1024xf32> to vector<1x1024xf32>
    %64 = vector.broadcast %63 : vector<1x1024xf32> to vector<8x1024xf32>
    %65 = arith.mulf %62, %64 : vector<8x1024xf32>
    %c24 = arith.constant 24 : index
    %c0_31 = arith.constant 0 : index
    %66 = vector.load %arg12[%c24, %c0_31] : memref<72x1024xf32, #tpu.memory_space<vmem>>, vector<8x1024xf32>
    tpu.vector_store %arg12[%c24, %c0_31], %65 {strides = array<i32>} : memref<72x1024xf32, #tpu.memory_space<vmem>>, vector<8x1024xf32>,
    %67 = vector.extract_strided_slice %46 {offsets = [4, 0], sizes = [1, 1024], strides = [1, 1]} : vector<9x1024xf32> to vector<1x1024xf32>
    %68 = vector.broadcast %67 : vector<1x1024xf32> to vector<8x1024xf32>
    %69 = arith.mulf %45, %68 : vector<8x1024xf32>
    %c32 = arith.constant 32 : index
    %c0_32 = arith.constant 0 : index
    %70 = vector.load %arg12[%c32, %c0_32] : memref<72x1024xf32, #tpu.memory_space<vmem>>, vector<8x1024xf32>
    tpu.vector_store %arg12[%c32, %c0_32], %69 {strides = array<i32>} : memref<72x1024xf32, #tpu.memory_space<vmem>>, vector<8x1024xf32>,
    %c1023_i32 = arith.constant 1023 : i32
    %71 = tpu.dynamic_rotate %45 by %c1023_i32 dim 1 : vector<8x1024xf32>, i32 -> vector<8x1024xf32>
    %72 = vector.extract_strided_slice %46 {offsets = [5, 0], sizes = [1, 1024], strides = [1, 1]} : vector<9x1024xf32> to vector<1x1024xf32>
    %73 = vector.broadcast %72 : vector<1x1024xf32> to vector<8x1024xf32>
    %74 = arith.mulf %71, %73 : vector<8x1024xf32>
    %c40 = arith.constant 40 : index
    %c0_33 = arith.constant 0 : index
    %75 = vector.load %arg12[%c40, %c0_33] : memref<72x1024xf32, #tpu.memory_space<vmem>>, vector<8x1024xf32>
    tpu.vector_store %arg12[%c40, %c0_33], %74 {strides = array<i32>} : memref<72x1024xf32, #tpu.memory_space<vmem>>, vector<8x1024xf32>,
    %c993_i32 = arith.constant 993 : i32
    %76 = tpu.dynamic_rotate %45 by %c993_i32 dim 1 : vector<8x1024xf32>, i32 -> vector<8x1024xf32>
    %77 = vector.extract_strided_slice %46 {offsets = [6, 0], sizes = [1, 1024], strides = [1, 1]} : vector<9x1024xf32> to vector<1x1024xf32>
    %78 = vector.broadcast %77 : vector<1x1024xf32> to vector<8x1024xf32>
    %79 = arith.mulf %76, %78 : vector<8x1024xf32>
    %c48 = arith.constant 48 : index
    %c0_34 = arith.constant 0 : index
    %80 = vector.load %arg12[%c48, %c0_34] : memref<72x1024xf32, #tpu.memory_space<vmem>>, vector<8x1024xf32>
    tpu.vector_store %arg12[%c48, %c0_34], %79 {strides = array<i32>} : memref<72x1024xf32, #tpu.memory_space<vmem>>, vector<8x1024xf32>,
    %c992_i32 = arith.constant 992 : i32
    %81 = tpu.dynamic_rotate %45 by %c992_i32 dim 1 : vector<8x1024xf32>, i32 -> vector<8x1024xf32>
    %82 = vector.extract_strided_slice %46 {offsets = [7, 0], sizes = [1, 1024], strides = [1, 1]} : vector<9x1024xf32> to vector<1x1024xf32>
    %83 = vector.broadcast %82 : vector<1x1024xf32> to vector<8x1024xf32>
    %84 = arith.mulf %81, %83 : vector<8x1024xf32>
    %c56 = arith.constant 56 : index
    %c0_35 = arith.constant 0 : index
    %85 = vector.load %arg12[%c56, %c0_35] : memref<72x1024xf32, #tpu.memory_space<vmem>>, vector<8x1024xf32>
    tpu.vector_store %arg12[%c56, %c0_35], %84 {strides = array<i32>} : memref<72x1024xf32, #tpu.memory_space<vmem>>, vector<8x1024xf32>,
    %c991_i32 = arith.constant 991 : i32
    %86 = tpu.dynamic_rotate %45 by %c991_i32 dim 1 : vector<8x1024xf32>, i32 -> vector<8x1024xf32>
    %87 = vector.extract_strided_slice %46 {offsets = [8, 0], sizes = [1, 1024], strides = [1, 1]} : vector<9x1024xf32> to vector<1x1024xf32>
    %88 = vector.broadcast %87 : vector<1x1024xf32> to vector<8x1024xf32>
    %89 = arith.mulf %86, %88 : vector<8x1024xf32>
    %c64 = arith.constant 64 : index
    %c0_36 = arith.constant 0 : index
    %90 = vector.load %arg12[%c64, %c0_36] : memref<72x1024xf32, #tpu.memory_space<vmem>>, vector<8x1024xf32>
    tpu.vector_store %arg12[%c64, %c0_36], %89 {strides = array<i32>} : memref<72x1024xf32, #tpu.memory_space<vmem>>, vector<8x1024xf32>,
    %c0_37 = arith.constant 0 : index
    %c0_38 = arith.constant 0 : index
    %91 = vector.load %arg8[%c0_37, %c0_38] : memref<4x72xf32, #tpu.memory_space<vmem>>, vector<4x72xf32>
    %c0_39 = arith.constant 0 : index
    %c0_40 = arith.constant 0 : index
    %92 = vector.load %arg12[%c0_39, %c0_40] : memref<72x1024xf32, #tpu.memory_space<vmem>>, vector<72x1024xf32>
    %cst_41 = arith.constant dense<0.000000e+00> : vector<4x1024xf32>
    %93 = tpu.matmul %91, %92, %cst_41 {dimension_numbers = #tpu.dot_dimension_numbers<[1], [0], [0], [1], [0, 0, 1, 1], [], []>} : vector<4x72xf32>, vector<72x1024xf32>, vector<4x1024xf32> -> vector<4x1024xf32>
    %c0_42 = arith.constant 0 : index
    %c0_43 = arith.constant 0 : index
    %c0_44 = arith.constant 0 : index
    %94 = vector.load %arg9[%c0_42, %c0_43, %c0_44] : memref<1x4x1024xf32, #tpu.memory_space<vmem>>, vector<1x4x1024xf32>
    %95 = vector.shape_cast %94 : vector<1x4x1024xf32> to vector<4x1024xf32>
    %96 = vector.shape_cast %93 : vector<4x1024xf32> to vector<1x4x1024xf32>
    tpu.vector_store %arg9[%c0_42, %c0_43, %c0_44], %96 {strides = array<i32>} : memref<1x4x1024xf32, #tpu.memory_space<vmem>>, vector<1x4x1024xf32>,
    %cst_45 = arith.constant dense<0.000000e+00> : vector<4xf32>
    %97 = vector.multi_reduction <add>, %93, %cst_45 [1] : vector<4x1024xf32> to vector<4xf32>
    %98 = vector.shape_cast %97 : vector<4xf32> to vector<4x1xf32>
    %c0_46 = arith.constant 0 : index
    %c0_47 = arith.constant 0 : index
    %c0_48 = arith.constant 0 : index
    %99 = vector.load %arg10[%c0_46, %c0_47, %c0_48] : memref<1x4x1xf32, #tpu.memory_space<vmem>>, vector<1x4x1xf32>
    %100 = vector.shape_cast %99 : vector<1x4x1xf32> to vector<4x1xf32>
    %101 = vector.shape_cast %98 : vector<4x1xf32> to vector<1x4x1xf32>
    tpu.vector_store %arg10[%c0_46, %c0_47, %c0_48], %101 {strides = array<i32>} : memref<1x4x1xf32, #tpu.memory_space<vmem>>, vector<1x4x1xf32>,
    %102 = arith.mulf %93, %93 : vector<4x1024xf32>
    %cst_49 = arith.constant dense<0.000000e+00> : vector<4xf32>
    %103 = vector.multi_reduction <add>, %102, %cst_49 [1] : vector<4x1024xf32> to vector<4xf32>
    %104 = vector.shape_cast %103 : vector<4xf32> to vector<4x1xf32>
    %c0_50 = arith.constant 0 : index
    %c0_51 = arith.constant 0 : index
    %c0_52 = arith.constant 0 : index
    %105 = vector.load %arg11[%c0_50, %c0_51, %c0_52] : memref<1x4x1xf32, #tpu.memory_space<vmem>>, vector<1x4x1xf32>
    %106 = vector.shape_cast %105 : vector<1x4x1xf32> to vector<4x1xf32>
    %107 = vector.shape_cast %104 : vector<4x1xf32> to vector<1x4x1xf32>
    tpu.vector_store %arg11[%c0_50, %c0_51, %c0_52], %107 {strides = array<i32>} : memref<1x4x1xf32, #tpu.memory_space<vmem>>, vector<1x4x1xf32>,
    return
  }
  func.func @transform_0(%arg0: i32) -> (i32, i32, i32) {
    %c0_i32 = arith.constant 0 : i32
    %c0_i32_0 = arith.constant 0 : i32
    %c0_i32_1 = arith.constant 0 : i32
    return %arg0, %c0_i32, %c0_i32_0 : i32, i32, i32
  }
  func.func @transform_1(%arg0: i32) -> (i32, i32, i32) {
    %c0_i32 = arith.constant 0 : i32
    %c0_i32_0 = arith.constant 0 : i32
    %c0_i32_1 = arith.constant 0 : i32
    return %arg0, %c0_i32, %c0_i32_0 : i32, i32, i32
  }
  func.func @transform_2(%arg0: i32) -> (i32, i32) {
    %c0_i32 = arith.constant 0 : i32
    %c0_i32_0 = arith.constant 0 : i32
    %c0_i32_1 = arith.constant 0 : i32
    return %c0_i32, %c0_i32_0 : i32, i32
  }
  func.func @transform_3(%arg0: i32) -> (i32, i32) {
    %c0_i32 = arith.constant 0 : i32
    %c0_i32_0 = arith.constant 0 : i32
    %c0_i32_1 = arith.constant 0 : i32
    return %c0_i32, %c0_i32_0 : i32, i32
  }
  func.func @transform_4(%arg0: i32) -> (i32, i32) {
    %c0_i32 = arith.constant 0 : i32
    %c0_i32_0 = arith.constant 0 : i32
    %c0_i32_1 = arith.constant 0 : i32
    return %c0_i32, %c0_i32_0 : i32, i32
  }
  func.func @transform_5(%arg0: i32) -> (i32, i32, i32) {
    %c0_i32 = arith.constant 0 : i32
    %c0_i32_0 = arith.constant 0 : i32
    %c0_i32_1 = arith.constant 0 : i32
    %c0_i32_2 = arith.constant 0 : i32
    return %c0_i32, %c0_i32_0, %c0_i32_1 : i32, i32, i32
  }
  func.func @transform_6(%arg0: i32) -> (i32, i32) {
    %c0_i32 = arith.constant 0 : i32
    %c0_i32_0 = arith.constant 0 : i32
    %c0_i32_1 = arith.constant 0 : i32
    return %c0_i32, %c0_i32_0 : i32, i32
  }
  func.func @transform_7(%arg0: i32) -> (i32, i32) {
    %c0_i32 = arith.constant 0 : i32
    %c0_i32_0 = arith.constant 0 : i32
    %c0_i32_1 = arith.constant 0 : i32
    return %c0_i32, %c0_i32_0 : i32, i32
  }
  func.func @transform_8(%arg0: i32) -> (i32, i32, i32) {
    %c0_i32 = arith.constant 0 : i32
    %c0_i32_0 = arith.constant 0 : i32
    %c0_i32_1 = arith.constant 0 : i32
    return %arg0, %c0_i32, %c0_i32_0 : i32, i32, i32
  }
  func.func @transform_9(%arg0: i32) -> (i32, i32, i32) {
    %c0_i32 = arith.constant 0 : i32
    %c0_i32_0 = arith.constant 0 : i32
    %c0_i32_1 = arith.constant 0 : i32
    return %arg0, %c0_i32, %c0_i32_0 : i32, i32, i32
  }
  func.func @transform_10(%arg0: i32) -> (i32, i32, i32) {
    %c0_i32 = arith.constant 0 : i32
    %c0_i32_0 = arith.constant 0 : i32
    %c0_i32_1 = arith.constant 0 : i32
    return %arg0, %c0_i32, %c0_i32_0 : i32, i32, i32
  }
}

module attributes {stable_mosaic.version = 11 : i64} {
  func.func @k2(%arg0: i32, %arg1: memref<1x4x1024xf32, #tpu.memory_space<vmem>>, %arg2: memref<4x1xf32, #tpu.memory_space<vmem>>, %arg3: memref<4x1xf32, #tpu.memory_space<vmem>>, %arg4: memref<9x1024xf32, #tpu.memory_space<vmem>>, %arg5: memref<4x72xf32, #tpu.memory_space<vmem>>, %arg6: memref<1x4x1024xf32, #tpu.memory_space<vmem>>, %arg7: memref<1x4x1xf32, #tpu.memory_space<vmem>>, %arg8: memref<1x4x1xf32, #tpu.memory_space<vmem>>, %arg9: memref<72x1024xf32, #tpu.memory_space<vmem>>) attributes {dimension_semantics = [#tpu.dimension_semantics<parallel>], iteration_bounds = array<i64: 2>, scalar_prefetch = 0 : i64, scratch_operands = 1 : i64, tpu.core_type = #tpu.core_type<tc>, window_params = [{transform_indices = @transform_0, window_bounds = array<i64: 1, 4, 1024>}, {pipeline_mode = #tpu.pipeline_mode<synchronous>, transform_indices = @transform_1, window_bounds = array<i64: 4, 1>}, {pipeline_mode = #tpu.pipeline_mode<synchronous>, transform_indices = @transform_2, window_bounds = array<i64: 4, 1>}, {pipeline_mode = #tpu.pipeline_mode<synchronous>, transform_indices = @transform_3, window_bounds = array<i64: 9, 1024>}, {pipeline_mode = #tpu.pipeline_mode<synchronous>, transform_indices = @transform_4, window_bounds = array<i64: 4, 72>}, {transform_indices = @transform_5, window_bounds = array<i64: 1, 4, 1024>}, {transform_indices = @transform_6, window_bounds = array<i64: 1, 4, 1>}, {transform_indices = @transform_7, window_bounds = array<i64: 1, 4, 1>}]} {
    %c0 = arith.constant 0 : index
    %c0_0 = arith.constant 0 : index
    %c0_1 = arith.constant 0 : index
    %0 = vector.load %arg1[%c0, %c0_0, %c0_1] : memref<1x4x1024xf32, #tpu.memory_space<vmem>>, vector<1x4x1024xf32>
    %1 = vector.shape_cast %0 : vector<1x4x1024xf32> to vector<4x1024xf32>
    %c0_2 = arith.constant 0 : index
    %c0_3 = arith.constant 0 : index
    %2 = vector.load %arg2[%c0_2, %c0_3] : memref<4x1xf32, #tpu.memory_space<vmem>>, vector<4x1xf32>
    %3 = vector.broadcast %2 : vector<4x1xf32> to vector<4x1024xf32>
    %4 = arith.mulf %1, %3 : vector<4x1024xf32>
    %c0_4 = arith.constant 0 : index
    %c0_5 = arith.constant 0 : index
    %5 = vector.load %arg3[%c0_4, %c0_5] : memref<4x1xf32, #tpu.memory_space<vmem>>, vector<4x1xf32>
    %6 = vector.broadcast %5 : vector<4x1xf32> to vector<4x1024xf32>
    %7 = arith.addf %4, %6 : vector<4x1024xf32>
    %cst = arith.constant 0.000000e+00 : f32
    %8 = vector.broadcast %cst : f32 to vector<4x1024xf32>
    %9 = arith.maximumf %7, %8 : vector<4x1024xf32>
    %cst_6 = arith.constant 0.000000e+00 : f32
    %10 = vector.broadcast %cst_6 : f32 to vector<4x1024xf32>
    %11 = tpu.concatenate %9, %10 in 0 : vector<4x1024xf32>, vector<4x1024xf32> -> vector<8x1024xf32>
    %c0_7 = arith.constant 0 : index
    %c0_8 = arith.constant 0 : index
    %12 = vector.load %arg4[%c0_7, %c0_8] : memref<9x1024xf32, #tpu.memory_space<vmem>>, vector<9x1024xf32>
    %c33_i32 = arith.constant 33 : i32
    %13 = tpu.dynamic_rotate %11 by %c33_i32 dim 1 : vector<8x1024xf32>, i32 -> vector<8x1024xf32>
    %14 = vector.extract_strided_slice %12 {offsets = [0, 0], sizes = [1, 1024], strides = [1, 1]} : vector<9x1024xf32> to vector<1x1024xf32>
    %15 = vector.broadcast %14 : vector<1x1024xf32> to vector<8x1024xf32>
    %16 = arith.mulf %13, %15 : vector<8x1024xf32>
    %c0_9 = arith.constant 0 : index
    %c0_10 = arith.constant 0 : index
    %17 = vector.load %arg9[%c0_9, %c0_10] : memref<72x1024xf32, #tpu.memory_space<vmem>>, vector<8x1024xf32>
    tpu.vector_store %arg9[%c0_9, %c0_10], %16 {strides = array<i32>} : memref<72x1024xf32, #tpu.memory_space<vmem>>, vector<8x1024xf32>,
    %c32_i32 = arith.constant 32 : i32
    %18 = tpu.dynamic_rotate %11 by %c32_i32 dim 1 : vector<8x1024xf32>, i32 -> vector<8x1024xf32>
    %19 = vector.extract_strided_slice %12 {offsets = [1, 0], sizes = [1, 1024], strides = [1, 1]} : vector<9x1024xf32> to vector<1x1024xf32>
    %20 = vector.broadcast %19 : vector<1x1024xf32> to vector<8x1024xf32>
    %21 = arith.mulf %18, %20 : vector<8x1024xf32>
    %c8 = arith.constant 8 : index
    %c0_11 = arith.constant 0 : index
    %22 = vector.load %arg9[%c8, %c0_11] : memref<72x1024xf32, #tpu.memory_space<vmem>>, vector<8x1024xf32>
    tpu.vector_store %arg9[%c8, %c0_11], %21 {strides = array<i32>} : memref<72x1024xf32, #tpu.memory_space<vmem>>, vector<8x1024xf32>,
    %c31_i32 = arith.constant 31 : i32
    %23 = tpu.dynamic_rotate %11 by %c31_i32 dim 1 : vector<8x1024xf32>, i32 -> vector<8x1024xf32>
    %24 = vector.extract_strided_slice %12 {offsets = [2, 0], sizes = [1, 1024], strides = [1, 1]} : vector<9x1024xf32> to vector<1x1024xf32>
    %25 = vector.broadcast %24 : vector<1x1024xf32> to vector<8x1024xf32>
    %26 = arith.mulf %23, %25 : vector<8x1024xf32>
    %c16 = arith.constant 16 : index
    %c0_12 = arith.constant 0 : index
    %27 = vector.load %arg9[%c16, %c0_12] : memref<72x1024xf32, #tpu.memory_space<vmem>>, vector<8x1024xf32>
    tpu.vector_store %arg9[%c16, %c0_12], %26 {strides = array<i32>} : memref<72x1024xf32, #tpu.memory_space<vmem>>, vector<8x1024xf32>,
    %c1_i32 = arith.constant 1 : i32
    %28 = tpu.dynamic_rotate %11 by %c1_i32 dim 1 : vector<8x1024xf32>, i32 -> vector<8x1024xf32>
    %29 = vector.extract_strided_slice %12 {offsets = [3, 0], sizes = [1, 1024], strides = [1, 1]} : vector<9x1024xf32> to vector<1x1024xf32>
    %30 = vector.broadcast %29 : vector<1x1024xf32> to vector<8x1024xf32>
    %31 = arith.mulf %28, %30 : vector<8x1024xf32>
    %c24 = arith.constant 24 : index
    %c0_13 = arith.constant 0 : index
    %32 = vector.load %arg9[%c24, %c0_13] : memref<72x1024xf32, #tpu.memory_space<vmem>>, vector<8x1024xf32>
    tpu.vector_store %arg9[%c24, %c0_13], %31 {strides = array<i32>} : memref<72x1024xf32, #tpu.memory_space<vmem>>, vector<8x1024xf32>,
    %33 = vector.extract_strided_slice %12 {offsets = [4, 0], sizes = [1, 1024], strides = [1, 1]} : vector<9x1024xf32> to vector<1x1024xf32>
    %34 = vector.broadcast %33 : vector<1x1024xf32> to vector<8x1024xf32>
    %35 = arith.mulf %11, %34 : vector<8x1024xf32>
    %c32 = arith.constant 32 : index
    %c0_14 = arith.constant 0 : index
    %36 = vector.load %arg9[%c32, %c0_14] : memref<72x1024xf32, #tpu.memory_space<vmem>>, vector<8x1024xf32>
    tpu.vector_store %arg9[%c32, %c0_14], %35 {strides = array<i32>} : memref<72x1024xf32, #tpu.memory_space<vmem>>, vector<8x1024xf32>,
    %c1023_i32 = arith.constant 1023 : i32
    %37 = tpu.dynamic_rotate %11 by %c1023_i32 dim 1 : vector<8x1024xf32>, i32 -> vector<8x1024xf32>
    %38 = vector.extract_strided_slice %12 {offsets = [5, 0], sizes = [1, 1024], strides = [1, 1]} : vector<9x1024xf32> to vector<1x1024xf32>
    %39 = vector.broadcast %38 : vector<1x1024xf32> to vector<8x1024xf32>
    %40 = arith.mulf %37, %39 : vector<8x1024xf32>
    %c40 = arith.constant 40 : index
    %c0_15 = arith.constant 0 : index
    %41 = vector.load %arg9[%c40, %c0_15] : memref<72x1024xf32, #tpu.memory_space<vmem>>, vector<8x1024xf32>
    tpu.vector_store %arg9[%c40, %c0_15], %40 {strides = array<i32>} : memref<72x1024xf32, #tpu.memory_space<vmem>>, vector<8x1024xf32>,
    %c993_i32 = arith.constant 993 : i32
    %42 = tpu.dynamic_rotate %11 by %c993_i32 dim 1 : vector<8x1024xf32>, i32 -> vector<8x1024xf32>
    %43 = vector.extract_strided_slice %12 {offsets = [6, 0], sizes = [1, 1024], strides = [1, 1]} : vector<9x1024xf32> to vector<1x1024xf32>
    %44 = vector.broadcast %43 : vector<1x1024xf32> to vector<8x1024xf32>
    %45 = arith.mulf %42, %44 : vector<8x1024xf32>
    %c48 = arith.constant 48 : index
    %c0_16 = arith.constant 0 : index
    %46 = vector.load %arg9[%c48, %c0_16] : memref<72x1024xf32, #tpu.memory_space<vmem>>, vector<8x1024xf32>
    tpu.vector_store %arg9[%c48, %c0_16], %45 {strides = array<i32>} : memref<72x1024xf32, #tpu.memory_space<vmem>>, vector<8x1024xf32>,
    %c992_i32 = arith.constant 992 : i32
    %47 = tpu.dynamic_rotate %11 by %c992_i32 dim 1 : vector<8x1024xf32>, i32 -> vector<8x1024xf32>
    %48 = vector.extract_strided_slice %12 {offsets = [7, 0], sizes = [1, 1024], strides = [1, 1]} : vector<9x1024xf32> to vector<1x1024xf32>
    %49 = vector.broadcast %48 : vector<1x1024xf32> to vector<8x1024xf32>
    %50 = arith.mulf %47, %49 : vector<8x1024xf32>
    %c56 = arith.constant 56 : index
    %c0_17 = arith.constant 0 : index
    %51 = vector.load %arg9[%c56, %c0_17] : memref<72x1024xf32, #tpu.memory_space<vmem>>, vector<8x1024xf32>
    tpu.vector_store %arg9[%c56, %c0_17], %50 {strides = array<i32>} : memref<72x1024xf32, #tpu.memory_space<vmem>>, vector<8x1024xf32>,
    %c991_i32 = arith.constant 991 : i32
    %52 = tpu.dynamic_rotate %11 by %c991_i32 dim 1 : vector<8x1024xf32>, i32 -> vector<8x1024xf32>
    %53 = vector.extract_strided_slice %12 {offsets = [8, 0], sizes = [1, 1024], strides = [1, 1]} : vector<9x1024xf32> to vector<1x1024xf32>
    %54 = vector.broadcast %53 : vector<1x1024xf32> to vector<8x1024xf32>
    %55 = arith.mulf %52, %54 : vector<8x1024xf32>
    %c64 = arith.constant 64 : index
    %c0_18 = arith.constant 0 : index
    %56 = vector.load %arg9[%c64, %c0_18] : memref<72x1024xf32, #tpu.memory_space<vmem>>, vector<8x1024xf32>
    tpu.vector_store %arg9[%c64, %c0_18], %55 {strides = array<i32>} : memref<72x1024xf32, #tpu.memory_space<vmem>>, vector<8x1024xf32>,
    %c0_19 = arith.constant 0 : index
    %c0_20 = arith.constant 0 : index
    %57 = vector.load %arg5[%c0_19, %c0_20] : memref<4x72xf32, #tpu.memory_space<vmem>>, vector<4x72xf32>
    %c0_21 = arith.constant 0 : index
    %c0_22 = arith.constant 0 : index
    %58 = vector.load %arg9[%c0_21, %c0_22] : memref<72x1024xf32, #tpu.memory_space<vmem>>, vector<72x1024xf32>
    %cst_23 = arith.constant dense<0.000000e+00> : vector<4x1024xf32>
    %59 = tpu.matmul %57, %58, %cst_23 {dimension_numbers = #tpu.dot_dimension_numbers<[1], [0], [0], [1], [0, 0, 1, 1], [], []>} : vector<4x72xf32>, vector<72x1024xf32>, vector<4x1024xf32> -> vector<4x1024xf32>
    %c0_24 = arith.constant 0 : index
    %c0_25 = arith.constant 0 : index
    %c0_26 = arith.constant 0 : index
    %60 = vector.load %arg6[%c0_24, %c0_25, %c0_26] : memref<1x4x1024xf32, #tpu.memory_space<vmem>>, vector<1x4x1024xf32>
    %61 = vector.shape_cast %60 : vector<1x4x1024xf32> to vector<4x1024xf32>
    %62 = vector.shape_cast %59 : vector<4x1024xf32> to vector<1x4x1024xf32>
    tpu.vector_store %arg6[%c0_24, %c0_25, %c0_26], %62 {strides = array<i32>} : memref<1x4x1024xf32, #tpu.memory_space<vmem>>, vector<1x4x1024xf32>,
    %cst_27 = arith.constant dense<0.000000e+00> : vector<4xf32>
    %63 = vector.multi_reduction <add>, %59, %cst_27 [1] : vector<4x1024xf32> to vector<4xf32>
    %64 = vector.shape_cast %63 : vector<4xf32> to vector<4x1xf32>
    %c0_28 = arith.constant 0 : index
    %c0_29 = arith.constant 0 : index
    %c0_30 = arith.constant 0 : index
    %65 = vector.load %arg7[%c0_28, %c0_29, %c0_30] : memref<1x4x1xf32, #tpu.memory_space<vmem>>, vector<1x4x1xf32>
    %66 = vector.shape_cast %65 : vector<1x4x1xf32> to vector<4x1xf32>
    %67 = vector.shape_cast %64 : vector<4x1xf32> to vector<1x4x1xf32>
    tpu.vector_store %arg7[%c0_28, %c0_29, %c0_30], %67 {strides = array<i32>} : memref<1x4x1xf32, #tpu.memory_space<vmem>>, vector<1x4x1xf32>,
    %68 = arith.mulf %59, %59 : vector<4x1024xf32>
    %cst_31 = arith.constant dense<0.000000e+00> : vector<4xf32>
    %69 = vector.multi_reduction <add>, %68, %cst_31 [1] : vector<4x1024xf32> to vector<4xf32>
    %70 = vector.shape_cast %69 : vector<4xf32> to vector<4x1xf32>
    %c0_32 = arith.constant 0 : index
    %c0_33 = arith.constant 0 : index
    %c0_34 = arith.constant 0 : index
    %71 = vector.load %arg8[%c0_32, %c0_33, %c0_34] : memref<1x4x1xf32, #tpu.memory_space<vmem>>, vector<1x4x1xf32>
    %72 = vector.shape_cast %71 : vector<1x4x1xf32> to vector<4x1xf32>
    %73 = vector.shape_cast %70 : vector<4x1xf32> to vector<1x4x1xf32>
    tpu.vector_store %arg8[%c0_32, %c0_33, %c0_34], %73 {strides = array<i32>} : memref<1x4x1xf32, #tpu.memory_space<vmem>>, vector<1x4x1xf32>,
    return
  }
  func.func @transform_0(%arg0: i32) -> (i32, i32, i32) {
    %c0_i32 = arith.constant 0 : i32
    %c0_i32_0 = arith.constant 0 : i32
    %c0_i32_1 = arith.constant 0 : i32
    return %arg0, %c0_i32, %c0_i32_0 : i32, i32, i32
  }
  func.func @transform_1(%arg0: i32) -> (i32, i32) {
    %c0_i32 = arith.constant 0 : i32
    %c0_i32_0 = arith.constant 0 : i32
    %c0_i32_1 = arith.constant 0 : i32
    return %c0_i32, %c0_i32_0 : i32, i32
  }
  func.func @transform_2(%arg0: i32) -> (i32, i32) {
    %c0_i32 = arith.constant 0 : i32
    %c0_i32_0 = arith.constant 0 : i32
    %c0_i32_1 = arith.constant 0 : i32
    return %c0_i32, %c0_i32_0 : i32, i32
  }
  func.func @transform_3(%arg0: i32) -> (i32, i32) {
    %c0_i32 = arith.constant 0 : i32
    %c0_i32_0 = arith.constant 0 : i32
    %c0_i32_1 = arith.constant 0 : i32
    return %c0_i32, %c0_i32_0 : i32, i32
  }
  func.func @transform_4(%arg0: i32) -> (i32, i32) {
    %c0_i32 = arith.constant 0 : i32
    %c0_i32_0 = arith.constant 0 : i32
    %c0_i32_1 = arith.constant 0 : i32
    return %c0_i32, %c0_i32_0 : i32, i32
  }
  func.func @transform_5(%arg0: i32) -> (i32, i32, i32) {
    %c0_i32 = arith.constant 0 : i32
    %c0_i32_0 = arith.constant 0 : i32
    %c0_i32_1 = arith.constant 0 : i32
    return %arg0, %c0_i32, %c0_i32_0 : i32, i32, i32
  }
  func.func @transform_6(%arg0: i32) -> (i32, i32, i32) {
    %c0_i32 = arith.constant 0 : i32
    %c0_i32_0 = arith.constant 0 : i32
    %c0_i32_1 = arith.constant 0 : i32
    return %arg0, %c0_i32, %c0_i32_0 : i32, i32, i32
  }
  func.func @transform_7(%arg0: i32) -> (i32, i32, i32) {
    %c0_i32 = arith.constant 0 : i32
    %c0_i32_0 = arith.constant 0 : i32
    %c0_i32_1 = arith.constant 0 : i32
    return %arg0, %c0_i32, %c0_i32_0 : i32, i32, i32
  }
}

</mosaic_0001>

<llo_original>
// kernel: up_forward.3
$region0: #{up_forward.3}
  #allocation0 [shape = 'u32[]', space=smem, size = 0x4, offset = 0x4, fixed_abs, tag = 'smem constant byte address 0x4 - core index']
  #allocation1 [shape = 'u32[72,128]{1,0:T(1,128)}', space=vmem, size = 0x9000, scoped, tag = 'internal scratch']
  #allocation2 [shape = 'f32[72,1024]{1,0:T(8,128)}', space=vmem, size = 0x48000, scoped, tag = 'scratch operand']
  %s0 = inlined_call_operand.vmem [shape: f32[2,4,1024], index: 0, kind: input, shape index: {}]
  %s1 = inlined_call_operand.vmem [shape: f32[4,1], index: 1, kind: input, shape index: {}]
  %s2 = inlined_call_operand.vmem [shape: f32[4,1], index: 2, kind: input, shape index: {}]
  %s3 = inlined_call_operand.vmem [shape: f32[9,1024], index: 3, kind: input, shape index: {}]
  %s4 = inlined_call_operand.vmem [shape: f32[4,72], index: 4, kind: input, shape index: {}]
  %s5 = inlined_call_operand.vmem [shape: f32[2,4,1024], index: 5, kind: output, shape index: {0}]
  %s6 = inlined_call_operand.vmem [shape: f32[2,4,1], index: 6, kind: output, shape index: {1}]
  %s7 = inlined_call_operand.vmem [shape: f32[2,4,1], index: 7, kind: output, shape index: {2}]
  %8 = xla_tuple %s5, %s6, %s7
  %s9 = sld [smem:[#allocation0]]
  $region69: #{up_forward.3} parent=0
    _
  %s11 = ssub.s32 1, %s9
  %s12 = scalar_select 0, %s11, %s9
  loop: start=0, step=1, limit=4
  $region2: #{up_forward.3} parent=0 // loop_pre_header
    _
  $region3: #{up_forward.3} parent=0 // loop_header
    %s14 = sphi 0, %s18
    %p15 = scmp.ge.s32.totalorder %s14, 4
    %s24 = sphi 0, %s26
    %s27 = sphi 0, %s24
    %s28 = sphi 0, %s27
    %s44 = sphi 0, %s28
    %s48 = sphi 0, %s48
    %s50 = sphi 0, %s48
    %s51 = sphi 0, %s50
    %s65 = sphi 0, %s51
    %s69 = sphi 0, %s69
    %s71 = sphi 0, %s69
    %s72 = sphi 0, %s71
    %s86 = sphi 0, %s72
    %s90 = sphi 0, %s90
    %s92 = sphi 0, %s90
    %s93 = sphi 0, %s92
    %s107 = sphi 0, %s93
    %s111 = sphi 0, %s111
    %s113 = sphi 0, %s111
    %s114 = sphi 0, %s113
    %s128 = sphi 0, %s114
    %s134 = sphi 0, %s136
    %s137 = sphi 0, %s134
    %s138 = sphi 0, %s137
    %s154 = sphi 0, %s138
    %s160 = sphi 0, %s162
    %s163 = sphi 0, %s160
    %s164 = sphi 0, %s163
    %s180 = sphi 0, %s164
    %s186 = sphi 0, %s188
    %s189 = sphi 0, %s186
    %s190 = sphi 0, %s189
    %s206 = sphi 0, %s190
  $region4: #{up_forward.3} parent=0 // loop_header_branch
    %17 = sbr.rel (%p15) target = $region8
  $region5: #{up_forward.3} parent=0 // loop_body
    %s19 = ssub.s32 %s14, 1
    %s20 = ssub.s32 %s14, 2
    %s21 = sadd.s32 %s14, 1
    %s22 = ssub.s32 %s14, %s21
    %p23 = scmp.eq.s32.totalorder %s22, 0
    %s25 = sadd.s32 %s24, 1
    %s26 = scalar_select %p23, %s24, %s25
    %p29 = pneg %p23
    %p30 = scmp.eq.s32.totalorder %s14, 1
    %p31 = por %p29, %p30
    %p32 = scmp.ne.s32.totalorder %s24, %s27
    %p33 = scmp.eq.s32.totalorder %s14, 0
    %p34 = por %p32, %p33
    %p35 = scmp.ne.s32.totalorder %s24, %s27
    %p36 = scmp.eq.s32.totalorder %s19, 1
    %p37 = por %p35, %p36
    %p38 = scmp.ne.s32.totalorder %s27, %s28
    %p39 = scmp.eq.s32.totalorder %s19, 0
    %p40 = por %p38, %p39
    %p41 = scmp.ne.s32.totalorder %s27, %s28
    %p42 = scmp.eq.s32.totalorder %s20, 1
    %p43 = por %p41, %p42
    %p45 = scmp.ne.s32.totalorder %s28, %s44
    %p46 = scmp.eq.s32.totalorder %s20, 0
    %p47 = por %p45, %p46
    %s49 = sadd.s32 %s48, 1
    %p52 = scmp.eq.s32.totalorder %s14, 1
    %p53 = scmp.ne.s32.totalorder %s48, %s50
    %p54 = scmp.eq.s32.totalorder %s14, 0
    %p55 = por %p53, %p54
    %p56 = scmp.ne.s32.totalorder %s48, %s50
    %p57 = scmp.eq.s32.totalorder %s19, 1
    %p58 = por %p56, %p57
    %p59 = scmp.ne.s32.totalorder %s50, %s51
    %p60 = scmp.eq.s32.totalorder %s19, 0
    %p61 = por %p59, %p60
    %p62 = scmp.ne.s32.totalorder %s50, %s51
    %p63 = scmp.eq.s32.totalorder %s20, 1
    %p64 = por %p62, %p63
    %p66 = scmp.ne.s32.totalorder %s51, %s65
    %p67 = scmp.eq.s32.totalorder %s20, 0
    %p68 = por %p66, %p67
    %s70 = sadd.s32 %s69, 1
    %p73 = scmp.eq.s32.totalorder %s14, 1
    %p74 = scmp.ne.s32.totalorder %s69, %s71
    %p75 = scmp.eq.s32.totalorder %s14, 0
    %p76 = por %p74, %p75
    %p77 = scmp.ne.s32.totalorder %s69, %s71
    %p78 = scmp.eq.s32.totalorder %s19, 1
    %p79 = por %p77, %p78
    %p80 = scmp.ne.s32.totalorder %s71, %s72
    %p81 = scmp.eq.s32.totalorder %s19, 0
    %p82 = por %p80, %p81
    %p83 = scmp.ne.s32.totalorder %s71, %s72
    %p84 = scmp.eq.s32.totalorder %s20, 1
    %p85 = por %p83, %p84
    %p87 = scmp.ne.s32.totalorder %s72, %s86
    %p88 = scmp.eq.s32.totalorder %s20, 0
    %p89 = por %p87, %p88
    %s91 = sadd.s32 %s90, 1
    %p94 = scmp.eq.s32.totalorder %s14, 1
    %p95 = scmp.ne.s32.totalorder %s90, %s92
    %p96 = scmp.eq.s32.totalorder %s14, 0
    %p97 = por %p95, %p96
    %p98 = scmp.ne.s32.totalorder %s90, %s92
    %p99 = scmp.eq.s32.totalorder %s19, 1
    %p100 = por %p98, %p99
    %p101 = scmp.ne.s32.totalorder %s92, %s93
    %p102 = scmp.eq.s32.totalorder %s19, 0
    %p103 = por %p101, %p102
    %p104 = scmp.ne.s32.totalorder %s92, %s93
    %p105 = scmp.eq.s32.totalorder %s20, 1
    %p106 = por %p104, %p105
    %p108 = scmp.ne.s32.totalorder %s93, %s107
    %p109 = scmp.eq.s32.totalorder %s20, 0
    %p110 = por %p108, %p109
    %s112 = sadd.s32 %s111, 1
    %p115 = scmp.eq.s32.totalorder %s14, 1
    %p116 = scmp.ne.s32.totalorder %s111, %s113
    %p117 = scmp.eq.s32.totalorder %s14, 0
    %p118 = por %p116, %p117
    %p119 = scmp.ne.s32.totalorder %s111, %s113
    %p120 = scmp.eq.s32.totalorder %s19, 1
    %p121 = por %p119, %p120
    %p122 = scmp.ne.s32.totalorder %s113, %s114
    %p123 = scmp.eq.s32.totalorder %s19, 0
    %p124 = por %p122, %p123
    %p125 = scmp.ne.s32.totalorder %s113, %s114
    %p126 = scmp.eq.s32.totalorder %s20, 1
    %p127 = por %p125, %p126
    %p129 = scmp.ne.s32.totalorder %s114, %s128
    %p130 = scmp.eq.s32.totalorder %s20, 0
    %p131 = por %p129, %p130
    %s132 = ssub.s32 %s14, %s21
    %p133 = scmp.eq.s32.totalorder %s132, 0
    %s135 = sadd.s32 %s134, 1
    %s136 = scalar_select %p133, %s134, %s135
    %p139 = pneg %p133
    %p140 = scmp.eq.s32.totalorder %s14, 1
    %p141 = por %p139, %p140
    %p142 = scmp.ne.s32.totalorder %s134, %s137
    %p143 = scmp.eq.s32.totalorder %s14, 0
    %p144 = por %p142, %p143
    %p145 = scmp.ne.s32.totalorder %s134, %s137
    %p146 = scmp.eq.s32.totalorder %s19, 1
    %p147 = por %p145, %p146
    %p148 = scmp.ne.s32.totalorder %s137, %s138
    %p149 = scmp.eq.s32.totalorder %s19, 0
    %p150 = por %p148, %p149
    %p151 = scmp.ne.s32.totalorder %s137, %s138
    %p152 = scmp.eq.s32.totalorder %s20, 1
    %p153 = por %p151, %p152
    %p155 = scmp.ne.s32.totalorder %s138, %s154
    %p156 = scmp.eq.s32.totalorder %s20, 0
    %p157 = por %p155, %p156
    %s158 = ssub.s32 %s14, %s21
    %p159 = scmp.eq.s32.totalorder %s158, 0
    %s161 = sadd.s32 %s160, 1
    %s162 = scalar_select %p159, %s160, %s161
    %p165 = pneg %p159
    %p166 = scmp.eq.s32.totalorder %s14, 1
    %p167 = por %p165, %p166
    %p168 = scmp.ne.s32.totalorder %s160, %s163
    %p169 = scmp.eq.s32.totalorder %s14, 0
    %p170 = por %p168, %p169
    %p171 = scmp.ne.s32.totalorder %s160, %s163
    %p172 = scmp.eq.s32.totalorder %s19, 1
    %p173 = por %p171, %p172
    %p174 = scmp.ne.s32.totalorder %s163, %s164
    %p175 = scmp.eq.s32.totalorder %s19, 0
    %p176 = por %p174, %p175
    %p177 = scmp.ne.s32.totalorder %s163, %s164
    %p178 = scmp.eq.s32.totalorder %s20, 1
    %p179 = por %p177, %p178
    %p181 = scmp.ne.s32.totalorder %s164, %s180
    %p182 = scmp.eq.s32.totalorder %s20, 0
    %p183 = por %p181, %p182
    %s184 = ssub.s32 %s14, %s21
    %p185 = scmp.eq.s32.totalorder %s184, 0
    %s187 = sadd.s32 %s186, 1
    %s188 = scalar_select %p185, %s186, %s187
    %p191 = pneg %p185
    %p192 = scmp.eq.s32.totalorder %s14, 1
    %p193 = por %p191, %p192
    %p194 = scmp.ne.s32.totalorder %s186, %s189
    %p195 = scmp.eq.s32.totalorder %s14, 0
    %p196 = por %p194, %p195
    %p197 = scmp.ne.s32.totalorder %s186, %s189
    %p198 = scmp.eq.s32.totalorder %s19, 1
    %p199 = por %p197, %p198
    %p200 = scmp.ne.s32.totalorder %s189, %s190
    %p201 = scmp.eq.s32.totalorder %s19, 0
    %p202 = por %p200, %p201
    %p203 = scmp.ne.s32.totalorder %s189, %s190
    %p204 = scmp.eq.s32.totalorder %s20, 1
    %p205 = por %p203, %p204
    %p207 = scmp.ne.s32.totalorder %s190, %s206
    %p208 = scmp.eq.s32.totalorder %s20, 0
    %p209 = por %p207, %p208
    %p210 = scmp.le.s32.totalorder 1, %s14
    %p211 = scmp.lt.s32.totalorder %s14, 3
    %p212 = pnand %p210, %p211
    %p213 = pneg %p212
    // Predicated region
    $region9: #{up_forward.3} parent=5 // pred_check
      _
    $region10: #{up_forward.3} parent=5 // pred_check_branch
      %215 = sbr.rel (%p212) target = $region12
    $region11: #{up_forward.3} parent=5 // pred_region
      %s216 = ssub.s32 %s14, 1
      // Predicated region
      $region13: #{up_forward.3} parent=11 // pred_check
        %p217 = pneg %p61
      $region14: #{up_forward.3} parent=11 // pred_check_branch
        %219 = sbr.rel (%p217) target = $region16
      $region15: #{up_forward.3} parent=11 // pred_region
        _
      $region16: #{up_forward.3} parent=11 // pred_fallthru
        _
      // Predicated region
      $region17: #{up_forward.3} parent=11 // pred_check
        %p220 = pneg %p82
      $region18: #{up_forward.3} parent=11 // pred_check_branch
        %222 = sbr.rel (%p220) target = $region20
      $region19: #{up_forward.3} parent=11 // pred_region
        _
      $region20: #{up_forward.3} parent=11 // pred_fallthru
        _
      // Predicated region
      $region21: #{up_forward.3} parent=11 // pred_check
        %p223 = pneg %p103
      $region22: #{up_forward.3} parent=11 // pred_check_branch
        %225 = sbr.rel (%p223) target = $region24
      $region23: #{up_forward.3} parent=11 // pred_region
        _
      $region24: #{up_forward.3} parent=11 // pred_fallthru
        _
      // Predicated region
      $region25: #{up_forward.3} parent=11 // pred_check
        %p226 = pneg %p124
      $region26: #{up_forward.3} parent=11 // pred_check_branch
        %228 = sbr.rel (%p226) target = $region28
      $region27: #{up_forward.3} parent=11 // pred_region
        _
      $region28: #{up_forward.3} parent=11 // pred_fallthru
        _
    $region12: #{up_forward.3} parent=5 // pred_fallthru
      _
    %p229 = scmp.lt.s32.totalorder %s14, 2
    // Predicated region
    $region29: #{up_forward.3} parent=5 // pred_check
      %p230 = pneg %p229
    $region30: #{up_forward.3} parent=5 // pred_check_branch
      %232 = sbr.rel (%p230) target = $region32
    $region31: #{up_forward.3} parent=5 // pred_region
      // Predicated region
      $region33: #{up_forward.3} parent=31 // pred_check
        %p233 = pneg %p34
      $region34: #{up_forward.3} parent=31 // pred_check_branch
        %235 = sbr.rel (%p233) target = $region36
      $region35: #{up_forward.3} parent=31 // pred_region
        %p236 = scmp.lt.s32.totalorder %s14, 1
        %s237 = scalar_select %p236, %s14, 1
        %s238 = smul.addr %s237, 8
        %s239 = smul.addr %s238, 4
        %s240 = scalar_lea.vmem %s0, %s239
      $region36: #{up_forward.3} parent=31 // pred_fallthru
        _
    $region32: #{up_forward.3} parent=5 // pred_fallthru
      _
    %p241 = scmp.le.s32.totalorder 1, %s14
    %p242 = scmp.lt.s32.totalorder %s14, 3
    %p243 = pnand %p241, %p242
    %p244 = pneg %p243
    // Predicated region
    $region37: #{up_forward.3} parent=5 // pred_check
      _
    $region38: #{up_forward.3} parent=5 // pred_check_branch
      %246 = sbr.rel (%p243) target = $region40
    $region39: #{up_forward.3} parent=5 // pred_region
      %s247 = ssub.s32 %s14, 1
      %p248 = scmp.lt.s32.totalorder %s19, 1
      %s249 = scalar_select %p248, %s19, 1
      %s250 = smul.addr %s249, 8
      %s251 = smul.addr %s250, 4
      %s252 = scalar_lea.vmem %s0, %s251
      %p253 = pneg %p40
      %p254 = pneg %p37
      %p255 = pneg %p61
      %p256 = pneg %p58
      %p257 = pneg %p82
      %p258 = pneg %p79
      %p259 = pneg %p103
      %p260 = pneg %p100
      %p261 = pneg %p124
      %p262 = pneg %p121
      %p263 = pneg %p150
      %p264 = pneg %p147
      %p265 = scmp.lt.s32.totalorder %s19, 1
      %s266 = scalar_select %p265, %s19, 1
      %s267 = smul.addr %s266, 8
      %s268 = smul.addr %s267, 4
      %s269 = scalar_lea.vmem %s5, %s268
      %p270 = pneg %p176
      %p271 = pneg %p173
      %p272 = scmp.lt.s32.totalorder %s19, 1
      %s273 = scalar_select %p272, %s19, 1
      %s274 = smul.addr %s273, 4
      %s275 = scalar_lea.vmem %s6, %s274
      %p276 = pneg %p202
      %p277 = pneg %p199
      %p278 = scmp.lt.s32.totalorder %s19, 1
      %s279 = scalar_select %p278, %s19, 1
      %s280 = smul.addr %s279, 4
      %s281 = scalar_lea.vmem %s7, %s280
      %p282 = scmp.lt.s32.totalorder %s19, 1
      %s283 = scalar_select %p282, %s19, 1
      %s284 = smul.addr %s283, 8
      %s285 = smul.addr %s284, 4
      %s286 = scalar_lea.vmem %s0, %s285
      %p287 = scmp.lt.s32.totalorder %s19, 1
      %s288 = scalar_select %p287, %s19, 1
      %s289 = smul.addr %s288, 8
      %s290 = smul.addr %s289, 4
      %s291 = scalar_lea.vmem %s5, %s290
      %p292 = scmp.lt.s32.totalorder %s19, 1
      %s293 = scalar_select %p292, %s19, 1
      %s294 = smul.addr %s293, 4
      %s295 = scalar_lea.vmem %s6, %s294
      %p296 = scmp.lt.s32.totalorder %s19, 1
      %s297 = scalar_select %p296, %s19, 1
      %s298 = smul.addr %s297, 4
      %s299 = scalar_lea.vmem %s7, %s298
      %v300 = vld [vmem:[%s286] sm:$0xff]
      %v301 = vld [vmem:[%s286 + $0x8] sm:$0xff]
      %v302 = vld [vmem:[%s286 + $0x10] sm:$0xff]
      %v303 = vld [vmem:[%s286 + $0x18] sm:$0xff]
      %v304 = vld [vmem:[%s1] sm:$0xf]
      %306 = vset.pattern.permute.xlu0 0
      %307 = vperm.xlu0 %306, %v304
      %v308 = vpop.permute.xlu0 %307
      %v310 = vunpack.c.l.s4 839922192
      %v311 = vunpack.c.0.s8 %v310
      %v312 = vperm.slane %v308, %v311
      %v314 = vmul.f32 %v300, %v312
      %v315 = vmul.f32 %v301, %v312
      %v316 = vmul.f32 %v302, %v312
      %v317 = vmul.f32 %v303, %v312
      %v318 = vld [vmem:[%s2] sm:$0xf]
      %320 = vset.pattern.permute.xlu0 0
      %321 = vperm.xlu0 %320, %v318
      %v322 = vpop.permute.xlu0 %321
      %v324 = vunpack.c.l.s4 839922192
      %v325 = vunpack.c.0.s8 %v324
      %v326 = vperm.slane %v322, %v325
      %v328 = vadd.f32 %v314, %v326
      %v329 = vadd.f32 %v315, %v326
      %v330 = vadd.f32 %v316, %v326
      %v331 = vadd.f32 %v317, %v326
      %v332 = vmax.f32 %v328, 0.0
      %v333 = vmax.f32 %v329, 0.0
      %v334 = vmax.f32 %v330, 0.0
      %v335 = vmax.f32 %v331, 0.0
      %340 = vst [vmem:[#allocation1] ss:$2 sm:$0xff] %v332
      %s341 = scalar_lea.vmem [#allocation1], 16
      %342 = vst [vmem:[%s341] ss:$2 sm:$0xff] %v333
      %s343 = scalar_lea.vmem [#allocation1], 32
      %344 = vst [vmem:[%s343] ss:$2 sm:$0xff] %v334
      %s345 = scalar_lea.vmem [#allocation1], 48
      %346 = vst [vmem:[%s345] ss:$2 sm:$0xff] %v335
      %v347 = vld.sshfl [vmem:[#allocation1] sm:$0xff pattern:$0x75316420]
      %v348 = vld.sshfl [vmem:[#allocation1 + $0x8] sm:$0xff pattern:$0x75316420]
      %v349 = vld.sshfl [vmem:[#allocation1 + $0x10] sm:$0xff pattern:$0x75316420]
      %v350 = vld.sshfl [vmem:[#allocation1 + $0x18] sm:$0xff pattern:$0x75316420]
      %v351 = vld.sshfl [vmem:[#allocation1 + $0x20] sm:$0xff pattern:$0x75316420]
      %v352 = vld.sshfl [vmem:[#allocation1 + $0x28] sm:$0xff pattern:$0x75316420]
      %v353 = vld.sshfl [vmem:[#allocation1 + $0x30] sm:$0xff pattern:$0x75316420]
      %v354 = vld.sshfl [vmem:[#allocation1 + $0x38] sm:$0xff pattern:$0x75316420]
      %vm363 = vcmask 1043456
      %v364 = vsel %vm363, %v347, 0.0
      %v365 = vsel %vm363, %v348, 0.0
      %v366 = vsel %vm363, %v349, 0.0
      %v367 = vsel %vm363, %v350, 0.0
      %v368 = vsel %vm363, %v351, 0.0
      %v369 = vsel %vm363, %v352, 0.0
      %v370 = vsel %vm363, %v353, 0.0
      %v371 = vsel %vm363, %v354, 0.0
      %v372 = vld [vmem:[%s3] sm:$0xff]
      %v373 = vld [vmem:[%s3 + $0x8] sm:$0xff]
      %v374 = vld [vmem:[%s3 + $0x10] sm:$0xff]
      %v375 = vld [vmem:[%s3 + $0x18] sm:$0xff]
      %v376 = vld [vmem:[%s3 + $0x20] sm:$0xff]
      %v377 = vld [vmem:[%s3 + $0x28] sm:$0xff]
      %v378 = vld [vmem:[%s3 + $0x30] sm:$0xff]
      %v379 = vld [vmem:[%s3 + $0x38] sm:$0xff]
      %v380 = vld [vmem:[%s3 + $0x40] sm:$0x1]
      %v381 = vld [vmem:[%s3 + $0x48] sm:$0x1]
      %v382 = vld [vmem:[%s3 + $0x50] sm:$0x1]
      %v383 = vld [vmem:[%s3 + $0x58] sm:$0x1]
      %v384 = vld [vmem:[%s3 + $0x60] sm:$0x1]
      %v385 = vld [vmem:[%s3 + $0x68] sm:$0x1]
      %v386 = vld [vmem:[%s3 + $0x70] sm:$0x1]
      %v387 = vld [vmem:[%s3 + $0x78] sm:$0x1]
      %388 = vrot.lane.b32.xlu0 %v364, 33
      %v389 = vpop.permute.xlu0 %388
      %390 = vrot.lane.b32.xlu0 %v365, 33
      %v391 = vpop.permute.xlu0 %390
      %392 = vrot.lane.b32.xlu0 %v366, 33
      %v393 = vpop.permute.xlu0 %392
      %394 = vrot.lane.b32.xlu0 %v367, 33
      %v395 = vpop.permute.xlu0 %394
      %396 = vrot.lane.b32.xlu0 %v368, 33
      %v397 = vpop.permute.xlu0 %396
      %398 = vrot.lane.b32.xlu0 %v369, 33
      %v399 = vpop.permute.xlu0 %398
      %400 = vrot.lane.b32.xlu0 %v370, 33
      %v401 = vpop.permute.xlu0 %400
      %402 = vrot.lane.b32.xlu0 %v371, 33
      %v403 = vpop.permute.xlu0 %402
      %v404 = vlaneseq
      %v405 = vand.u32 %v404, 127
      %vm406 = vcmp.lt.s32.totalorder %v405, 33
      %v407 = vsel %vm406, %v401, %v403
      %v408 = vsel %vm406, %v399, %v401
      %v409 = vsel %vm406, %v397, %v399
      %v410 = vsel %vm406, %v395, %v397
      %v411 = vsel %vm406, %v393, %v395
      %v412 = vsel %vm406, %v391, %v393
      %v413 = vsel %vm406, %v389, %v391
      %v414 = vsel %vm406, %v403, %v389
      %v415 = vperm.slane %v372, 0
      %v416 = vperm.slane %v373, 0
      %v417 = vperm.slane %v374, 0
      %v418 = vperm.slane %v375, 0
      %v419 = vperm.slane %v376, 0
      %v420 = vperm.slane %v377, 0
      %v421 = vperm.slane %v378, 0
      %v422 = vperm.slane %v379, 0
      %v423 = vmul.f32 %v414, %v415
      %v424 = vmul.f32 %v413, %v416
      %v425 = vmul.f32 %v412, %v417
      %v426 = vmul.f32 %v411, %v418
      %v427 = vmul.f32 %v410, %v419
      %v428 = vmul.f32 %v409, %v420
      %v429 = vmul.f32 %v408, %v421
      %v430 = vmul.f32 %v407, %v422
      %431 = vst [vmem:[#allocation2] sm:$0xff] %v423
      %432 = vst [vmem:[#allocation2 + $0x8] sm:$0xff] %v424
      %433 = vst [vmem:[#allocation2 + $0x10] sm:$0xff] %v425
      %434 = vst [vmem:[#allocation2 + $0x18] sm:$0xff] %v426
      %435 = vst [vmem:[#allocation2 + $0x20] sm:$0xff] %v427
      %436 = vst [vmem:[#allocation2 + $0x28] sm:$0xff] %v428
      %437 = vst [vmem:[#allocation2 + $0x30] sm:$0xff] %v429
      %438 = vst [vmem:[#allocation2 + $0x38] sm:$0xff] %v430
      %439 = vrot.lane.b32.xlu0 %v364, 32
      %v440 = vpop.permute.xlu0 %439
      %441 = vrot.lane.b32.xlu0 %v365, 32
      %v442 = vpop.permute.xlu0 %441
      %443 = vrot.lane.b32.xlu0 %v366, 32
      %v444 = vpop.permute.xlu0 %443
      %445 = vrot.lane.b32.xlu0 %v367, 32
      %v446 = vpop.permute.xlu0 %445
      %447 = vrot.lane.b32.xlu0 %v368, 32
      %v448 = vpop.permute.xlu0 %447
      %449 = vrot.lane.b32.xlu0 %v369, 32
      %v450 = vpop.permute.xlu0 %449
      %451 = vrot.lane.b32.xlu0 %v370, 32
      %v452 = vpop.permute.xlu0 %451
      %453 = vrot.lane.b32.xlu0 %v371, 32
      %v454 = vpop.permute.xlu0 %453
      %vm455 = vcmp.lt.s32.totalorder %v405, 32
      %v456 = vsel %vm455, %v452, %v454
      %v457 = vsel %vm455, %v450, %v452
      %v458 = vsel %vm455, %v448, %v450
      %v459 = vsel %vm455, %v446, %v448
      %v460 = vsel %vm455, %v444, %v446
      %v461 = vsel %vm455, %v442, %v444
      %v462 = vsel %vm455, %v440, %v442
      %v463 = vsel %vm455, %v454, %v440
      %v464 = vperm.slane %v372, 1
      %v465 = vperm.slane %v373, 1
      %v466 = vperm.slane %v374, 1
      %v467 = vperm.slane %v375, 1
      %v468 = vperm.slane %v376, 1
      %v469 = vperm.slane %v377, 1
      %v470 = vperm.slane %v378, 1
      %v471 = vperm.slane %v379, 1
      %v472 = vmul.f32 %v463, %v464
      %v473 = vmul.f32 %v462, %v465
      %v474 = vmul.f32 %v461, %v466
      %v475 = vmul.f32 %v460, %v467
      %v476 = vmul.f32 %v459, %v468
      %v477 = vmul.f32 %v458, %v469
      %v478 = vmul.f32 %v457, %v470
      %v479 = vmul.f32 %v456, %v471
      %480 = vst [vmem:[#allocation2 + $0x40] sm:$0xff] %v472
      %481 = vst [vmem:[#allocation2 + $0x48] sm:$0xff] %v473
      %482 = vst [vmem:[#allocation2 + $0x50] sm:$0xff] %v474
      %483 = vst [vmem:[#allocation2 + $0x58] sm:$0xff] %v475
      %484 = vst [vmem:[#allocation2 + $0x60] sm:$0xff] %v476
      %485 = vst [vmem:[#allocation2 + $0x68] sm:$0xff] %v477
      %486 = vst [vmem:[#allocation2 + $0x70] sm:$0xff] %v478
      %487 = vst [vmem:[#allocation2 + $0x78] sm:$0xff] %v479
      %488 = vrot.lane.b32.xlu0 %v364, 31
      %v489 = vpop.permute.xlu0 %488
      %490 = vrot.lane.b32.xlu0 %v365, 31
      %v491 = vpop.permute.xlu0 %490
      %492 = vrot.lane.b32.xlu0 %v366, 31
      %v493 = vpop.permute.xlu0 %492
      %494 = vrot.lane.b32.xlu0 %v367, 31
      %v495 = vpop.permute.xlu0 %494
      %496 = vrot.lane.b32.xlu0 %v368, 31
      %v497 = vpop.permute.xlu0 %496
      %498 = vrot.lane.b32.xlu0 %v369, 31
      %v499 = vpop.permute.xlu0 %498
      %500 = vrot.lane.b32.xlu0 %v370, 31
      %v501 = vpop.permute.xlu0 %500
      %502 = vrot.lane.b32.xlu0 %v371, 31
      %v503 = vpop.permute.xlu0 %502
      %vm504 = vcmp.lt.s32.totalorder %v405, 31
      %v505 = vsel %vm504, %v501, %v503
      %v506 = vsel %vm504, %v499, %v501
      %v507 = vsel %vm504, %v497, %v499
      %v508 = vsel %vm504, %v495, %v497
      %v509 = vsel %vm504, %v493, %v495
      %v510 = vsel %vm504, %v491, %v493
      %v511 = vsel %vm504, %v489, %v491
      %v512 = vsel %vm504, %v503, %v489
      %v513 = vperm.slane %v372, 2
      %v514 = vperm.slane %v373, 2
      %v515 = vperm.slane %v374, 2
      %v516 = vperm.slane %v375, 2
      %v517 = vperm.slane %v376, 2
      %v518 = vperm.slane %v377, 2
      %v519 = vperm.slane %v378, 2
      %v520 = vperm.slane %v379, 2
      %v521 = vmul.f32 %v512, %v513
      %v522 = vmul.f32 %v511, %v514
      %v523 = vmul.f32 %v510, %v515
      %v524 = vmul.f32 %v509, %v516
      %v525 = vmul.f32 %v508, %v517
      %v526 = vmul.f32 %v507, %v518
      %v527 = vmul.f32 %v506, %v519
      %v528 = vmul.f32 %v505, %v520
      %529 = vst [vmem:[#allocation2 + $0x80] sm:$0xff] %v521
      %530 = vst [vmem:[#allocation2 + $0x88] sm:$0xff] %v522
      %531 = vst [vmem:[#allocation2 + $0x90] sm:$0xff] %v523
      %532 = vst [vmem:[#allocation2 + $0x98] sm:$0xff] %v524
      %533 = vst [vmem:[#allocation2 + $0xa0] sm:$0xff] %v525
      %534 = vst [vmem:[#allocation2 + $0xa8] sm:$0xff] %v526
      %535 = vst [vmem:[#allocation2 + $0xb0] sm:$0xff] %v527
      %536 = vst [vmem:[#allocation2 + $0xb8] sm:$0xff] %v528
      %537 = vrot.lane.b32.xlu0 %v364, 1
      %v538 = vpop.permute.xlu0 %537
      %539 = vrot.lane.b32.xlu0 %v365, 1
      %v540 = vpop.permute.xlu0 %539
      %541 = vrot.lane.b32.xlu0 %v366, 1
      %v542 = vpop.permute.xlu0 %541
      %543 = vrot.lane.b32.xlu0 %v367, 1
      %v544 = vpop.permute.xlu0 %543
      %545 = vrot.lane.b32.xlu0 %v368, 1
      %v546 = vpop.permute.xlu0 %545
      %547 = vrot.lane.b32.xlu0 %v369, 1
      %v548 = vpop.permute.xlu0 %547
      %549 = vrot.lane.b32.xlu0 %v370, 1
      %v550 = vpop.permute.xlu0 %549
      %551 = vrot.lane.b32.xlu0 %v371, 1
      %v552 = vpop.permute.xlu0 %551
      %vm553 = vcmp.lt.s32.totalorder %v405, 1
      %v554 = vsel %vm553, %v550, %v552
      %v555 = vsel %vm553, %v548, %v550
      %v556 = vsel %vm553, %v546, %v548
      %v557 = vsel %vm553, %v544, %v546
      %v558 = vsel %vm553, %v542, %v544
      %v559 = vsel %vm553, %v540, %v542
      %v560 = vsel %vm553, %v538, %v540
      %v561 = vsel %vm553, %v552, %v538
      %v562 = vperm.slane %v372, 3
      %v563 = vperm.slane %v373, 3
      %v564 = vperm.slane %v374, 3
      %v565 = vperm.slane %v375, 3
      %v566 = vperm.slane %v376, 3
      %v567 = vperm.slane %v377, 3
      %v568 = vperm.slane %v378, 3
      %v569 = vperm.slane %v379, 3
      %v570 = vmul.f32 %v561, %v562
      %v571 = vmul.f32 %v560, %v563
      %v572 = vmul.f32 %v559, %v564
      %v573 = vmul.f32 %v558, %v565
      %v574 = vmul.f32 %v557, %v566
      %v575 = vmul.f32 %v556, %v567
      %v576 = vmul.f32 %v555, %v568
      %v577 = vmul.f32 %v554, %v569
      %578 = vst [vmem:[#allocation2 + $0xc0] sm:$0xff] %v570
      %579 = vst [vmem:[#allocation2 + $0xc8] sm:$0xff] %v571
      %580 = vst [vmem:[#allocation2 + $0xd0] sm:$0xff] %v572
      %581 = vst [vmem:[#allocation2 + $0xd8] sm:$0xff] %v573
      %582 = vst [vmem:[#allocation2 + $0xe0] sm:$0xff] %v574
      %583 = vst [vmem:[#allocation2 + $0xe8] sm:$0xff] %v575
      %584 = vst [vmem:[#allocation2 + $0xf0] sm:$0xff] %v576
      %585 = vst [vmem:[#allocation2 + $0xf8] sm:$0xff] %v577
      %v586 = vperm.slane %v372, 4
      %v587 = vperm.slane %v373, 4
      %v588 = vperm.slane %v374, 4
      %v589 = vperm.slane %v375, 4
      %v590 = vperm.slane %v376, 4
      %v591 = vperm.slane %v377, 4
      %v592 = vperm.slane %v378, 4
      %v593 = vperm.slane %v379, 4
      %v594 = vmul.f32 %v364, %v586
      %v595 = vmul.f32 %v365, %v587
      %v596 = vmul.f32 %v366, %v588
      %v597 = vmul.f32 %v367, %v589
      %v598 = vmul.f32 %v368, %v590
      %v599 = vmul.f32 %v369, %v591
      %v600 = vmul.f32 %v370, %v592
      %v601 = vmul.f32 %v371, %v593
      %602 = vst [vmem:[#allocation2 + $0x100] sm:$0xff] %v594
      %603 = vst [vmem:[#allocation2 + $0x108] sm:$0xff] %v595
      %604 = vst [vmem:[#allocation2 + $0x110] sm:$0xff] %v596
      %605 = vst [vmem:[#allocation2 + $0x118] sm:$0xff] %v597
      %606 = vst [vmem:[#allocation2 + $0x120] sm:$0xff] %v598
      %607 = vst [vmem:[#allocation2 + $0x128] sm:$0xff] %v599
      %608 = vst [vmem:[#allocation2 + $0x130] sm:$0xff] %v600
      %609 = vst [vmem:[#allocation2 + $0x138] sm:$0xff] %v601
      %610 = vrot.lane.b32.xlu0 %v364, 127
      %v611 = vpop.permute.xlu0 %610
      %612 = vrot.lane.b32.xlu0 %v365, 127
      %v613 = vpop.permute.xlu0 %612
      %614 = vrot.lane.b32.xlu0 %v366, 127
      %v615 = vpop.permute.xlu0 %614
      %616 = vrot.lane.b32.xlu0 %v367, 127
      %v617 = vpop.permute.xlu0 %616
      %618 = vrot.lane.b32.xlu0 %v368, 127
      %v619 = vpop.permute.xlu0 %618
      %620 = vrot.lane.b32.xlu0 %v369, 127
      %v621 = vpop.permute.xlu0 %620
      %622 = vrot.lane.b32.xlu0 %v370, 127
      %v623 = vpop.permute.xlu0 %622
      %624 = vrot.lane.b32.xlu0 %v371, 127
      %v625 = vpop.permute.xlu0 %624
      %vm626 = vcmp.lt.s32.totalorder %v405, 127
      %v627 = vsel %vm626, %v623, %v625
      %v628 = vsel %vm626, %v621, %v623
      %v629 = vsel %vm626, %v619, %v621
      %v630 = vsel %vm626, %v617, %v619
      %v631 = vsel %vm626, %v615, %v617
      %v632 = vsel %vm626, %v613, %v615
      %v633 = vsel %vm626, %v611, %v613
      %v634 = vsel %vm626, %v625, %v611
      %v635 = vperm.slane %v372, 5
      %v636 = vperm.slane %v373, 5
      %v637 = vperm.slane %v374, 5
      %v638 = vperm.slane %v375, 5
      %v639 = vperm.slane %v376, 5
      %v640 = vperm.slane %v377, 5
      %v641 = vperm.slane %v378, 5
      %v642 = vperm.slane %v379, 5
      %v643 = vmul.f32 %v633, %v635
      %v644 = vmul.f32 %v632, %v636
      %v645 = vmul.f32 %v631, %v637
      %v646 = vmul.f32 %v630, %v638
      %v647 = vmul.f32 %v629, %v639
      %v648 = vmul.f32 %v628, %v640
      %v649 = vmul.f32 %v627, %v641
      %v650 = vmul.f32 %v634, %v642
      %651 = vst [vmem:[#allocation2 + $0x140] sm:$0xff] %v643
      %652 = vst [vmem:[#allocation2 + $0x148] sm:$0xff] %v644
      %653 = vst [vmem:[#allocation2 + $0x150] sm:$0xff] %v645
      %654 = vst [vmem:[#allocation2 + $0x158] sm:$0xff] %v646
      %655 = vst [vmem:[#allocation2 + $0x160] sm:$0xff] %v647
      %656 = vst [vmem:[#allocation2 + $0x168] sm:$0xff] %v648
      %657 = vst [vmem:[#allocation2 + $0x170] sm:$0xff] %v649
      %658 = vst [vmem:[#allocation2 + $0x178] sm:$0xff] %v650
      %659 = vrot.lane.b32.xlu0 %v364, 97
      %v660 = vpop.permute.xlu0 %659
      %661 = vrot.lane.b32.xlu0 %v365, 97
      %v662 = vpop.permute.xlu0 %661
      %663 = vrot.lane.b32.xlu0 %v366, 97
      %v664 = vpop.permute.xlu0 %663
      %665 = vrot.lane.b32.xlu0 %v367, 97
      %v666 = vpop.permute.xlu0 %665
      %667 = vrot.lane.b32.xlu0 %v368, 97
      %v668 = vpop.permute.xlu0 %667
      %669 = vrot.lane.b32.xlu0 %v369, 97
      %v670 = vpop.permute.xlu0 %669
      %671 = vrot.lane.b32.xlu0 %v370, 97
      %v672 = vpop.permute.xlu0 %671
      %673 = vrot.lane.b32.xlu0 %v371, 97
      %v674 = vpop.permute.xlu0 %673
      %vm675 = vcmp.lt.s32.totalorder %v405, 97
      %v676 = vsel %vm675, %v672, %v674
      %v677 = vsel %vm675, %v670, %v672
      %v678 = vsel %vm675, %v668, %v670
      %v679 = vsel %vm675, %v666, %v668
      %v680 = vsel %vm675, %v664, %v666
      %v681 = vsel %vm675, %v662, %v664
      %v682 = vsel %vm675, %v660, %v662
      %v683 = vsel %vm675, %v674, %v660
      %v684 = vperm.slane %v372, 6
      %v685 = vperm.slane %v373, 6
      %v686 = vperm.slane %v374, 6
      %v687 = vperm.slane %v375, 6
      %v688 = vperm.slane %v376, 6
      %v689 = vperm.slane %v377, 6
      %v690 = vperm.slane %v378, 6
      %v691 = vperm.slane %v379, 6
      %v692 = vmul.f32 %v682, %v684
      %v693 = vmul.f32 %v681, %v685
      %v694 = vmul.f32 %v680, %v686
      %v695 = vmul.f32 %v679, %v687
      %v696 = vmul.f32 %v678, %v688
      %v697 = vmul.f32 %v677, %v689
      %v698 = vmul.f32 %v676, %v690
      %v699 = vmul.f32 %v683, %v691
      %700 = vst [vmem:[#allocation2 + $0x180] sm:$0xff] %v692
      %701 = vst [vmem:[#allocation2 + $0x188] sm:$0xff] %v693
      %702 = vst [vmem:[#allocation2 + $0x190] sm:$0xff] %v694
      %703 = vst [vmem:[#allocation2 + $0x198] sm:$0xff] %v695
      %704 = vst [vmem:[#allocation2 + $0x1a0] sm:$0xff] %v696
      %705 = vst [vmem:[#allocation2 + $0x1a8] sm:$0xff] %v697
      %706 = vst [vmem:[#allocation2 + $0x1b0] sm:$0xff] %v698
      %707 = vst [vmem:[#allocation2 + $0x1b8] sm:$0xff] %v699
      %708 = vrot.lane.b32.xlu0 %v364, 96
      %v709 = vpop.permute.xlu0 %708
      %710 = vrot.lane.b32.xlu0 %v365, 96
      %v711 = vpop.permute.xlu0 %710
      %712 = vrot.lane.b32.xlu0 %v366, 96
      %v713 = vpop.permute.xlu0 %712
      %714 = vrot.lane.b32.xlu0 %v367, 96
      %v715 = vpop.permute.xlu0 %714
      %716 = vrot.lane.b32.xlu0 %v368, 96
      %v717 = vpop.permute.xlu0 %716
      %718 = vrot.lane.b32.xlu0 %v369, 96
      %v719 = vpop.permute.xlu0 %718
      %720 = vrot.lane.b32.xlu0 %v370, 96
      %v721 = vpop.permute.xlu0 %720
      %722 = vrot.lane.b32.xlu0 %v371, 96
      %v723 = vpop.permute.xlu0 %722
      %vm724 = vcmp.lt.s32.totalorder %v405, 96
      %v725 = vsel %vm724, %v721, %v723
      %v726 = vsel %vm724, %v719, %v721
      %v727 = vsel %vm724, %v717, %v719
      %v728 = vsel %vm724, %v715, %v717
      %v729 = vsel %vm724, %v713, %v715
      %v730 = vsel %vm724, %v711, %v713
      %v731 = vsel %vm724, %v709, %v711
      %v732 = vsel %vm724, %v723, %v709
      %v733 = vperm.slane %v372, 7
      %v734 = vperm.slane %v373, 7
      %v735 = vperm.slane %v374, 7
      %v736 = vperm.slane %v375, 7
      %v737 = vperm.slane %v376, 7
      %v738 = vperm.slane %v377, 7
      %v739 = vperm.slane %v378, 7
      %v740 = vperm.slane %v379, 7
      %v741 = vmul.f32 %v731, %v733
      %v742 = vmul.f32 %v730, %v734
      %v743 = vmul.f32 %v729, %v735
      %v744 = vmul.f32 %v728, %v736
      %v745 = vmul.f32 %v727, %v737
      %v746 = vmul.f32 %v726, %v738
      %v747 = vmul.f32 %v725, %v739
      %v748 = vmul.f32 %v732, %v740
      %749 = vst [vmem:[#allocation2 + $0x1c0] sm:$0xff] %v741
      %750 = vst [vmem:[#allocation2 + $0x1c8] sm:$0xff] %v742
      %751 = vst [vmem:[#allocation2 + $0x1d0] sm:$0xff] %v743
      %752 = vst [vmem:[#allocation2 + $0x1d8] sm:$0xff] %v744
      %753 = vst [vmem:[#allocation2 + $0x1e0] sm:$0xff] %v745
      %754 = vst [vmem:[#allocation2 + $0x1e8] sm:$0xff] %v746
      %755 = vst [vmem:[#allocation2 + $0x1f0] sm:$0xff] %v747
      %756 = vst [vmem:[#allocation2 + $0x1f8] sm:$0xff] %v748
      %757 = vrot.lane.b32.xlu0 %v364, 95
      %v758 = vpop.permute.xlu0 %757
      %759 = vrot.lane.b32.xlu0 %v365, 95
      %v760 = vpop.permute.xlu0 %759
      %761 = vrot.lane.b32.xlu0 %v366, 95
      %v762 = vpop.permute.xlu0 %761
      %763 = vrot.lane.b32.xlu0 %v367, 95
      %v764 = vpop.permute.xlu0 %763
      %765 = vrot.lane.b32.xlu0 %v368, 95
      %v766 = vpop.permute.xlu0 %765
      %767 = vrot.lane.b32.xlu0 %v369, 95
      %v768 = vpop.permute.xlu0 %767
      %769 = vrot.lane.b32.xlu0 %v370, 95
      %v770 = vpop.permute.xlu0 %769
      %771 = vrot.lane.b32.xlu0 %v371, 95
      %v772 = vpop.permute.xlu0 %771
      %vm773 = vcmp.lt.s32.totalorder %v405, 95
      %v774 = vsel %vm773, %v770, %v772
      %v775 = vsel %vm773, %v768, %v770
      %v776 = vsel %vm773, %v766, %v768
      %v777 = vsel %vm773, %v764, %v766
      %v778 = vsel %vm773, %v762, %v764
      %v779 = vsel %vm773, %v760, %v762
      %v780 = vsel %vm773, %v758, %v760
      %v781 = vsel %vm773, %v772, %v758
      %v782 = vperm.slane %v380, 0
      %v783 = vperm.slane %v381, 0
      %v784 = vperm.slane %v382, 0
      %v785 = vperm.slane %v383, 0
      %v786 = vperm.slane %v384, 0
      %v787 = vperm.slane %v385, 0
      %v788 = vperm.slane %v386, 0
      %v789 = vperm.slane %v387, 0
      %v790 = vmul.f32 %v780, %v782
      %v791 = vmul.f32 %v779, %v783
      %v792 = vmul.f32 %v778, %v784
      %v793 = vmul.f32 %v777, %v785
      %v794 = vmul.f32 %v776, %v786
      %v795 = vmul.f32 %v775, %v787
      %v796 = vmul.f32 %v774, %v788
      %v797 = vmul.f32 %v781, %v789
      %798 = vst [vmem:[#allocation2 + $0x200] sm:$0xff] %v790
      %799 = vst [vmem:[#allocation2 + $0x208] sm:$0xff] %v791
      %800 = vst [vmem:[#allocation2 + $0x210] sm:$0xff] %v792
      %801 = vst [vmem:[#allocation2 + $0x218] sm:$0xff] %v793
      %802 = vst [vmem:[#allocation2 + $0x220] sm:$0xff] %v794
      %803 = vst [vmem:[#allocation2 + $0x228] sm:$0xff] %v795
      %804 = vst [vmem:[#allocation2 + $0x230] sm:$0xff] %v796
      %805 = vst [vmem:[#allocation2 + $0x238] sm:$0xff] %v797
      %v806 = vld [vmem:[%s4] sm:$0xf]
      %v807 = vld [vmem:[#allocation2] sm:$0xff]
      %v808 = vld [vmem:[#allocation2 + $0x8] sm:$0xff]
      %v809 = vld [vmem:[#allocation2 + $0x10] sm:$0xff]
      %v810 = vld [vmem:[#allocation2 + $0x18] sm:$0xff]
      %v811 = vld [vmem:[#allocation2 + $0x20] sm:$0xff]
      %v812 = vld [vmem:[#allocation2 + $0x28] sm:$0xff]
      %v813 = vld [vmem:[#allocation2 + $0x30] sm:$0xff]
      %v814 = vld [vmem:[#allocation2 + $0x38] sm:$0xff]
      %v815 = vld [vmem:[#allocation2 + $0x40] sm:$0xff]
      %v816 = vld [vmem:[#allocation2 + $0x48] sm:$0xff]
      %v817 = vld [vmem:[#allocation2 + $0x50] sm:$0xff]
      %v818 = vld [vmem:[#allocation2 + $0x58] sm:$0xff]
      %v819 = vld [vmem:[#allocation2 + $0x60] sm:$0xff]
      %v820 = vld [vmem:[#allocation2 + $0x68] sm:$0xff]
      %v821 = vld [vmem:[#allocation2 + $0x70] sm:$0xff]
      %v822 = vld [vmem:[#allocation2 + $0x78] sm:$0xff]
      %v823 = vld [vmem:[#allocation2 + $0x80] sm:$0xff]
      %v824 = vld [vmem:[#allocation2 + $0x88] sm:$0xff]
      %v825 = vld [vmem:[#allocation2 + $0x90] sm:$0xff]
      %v826 = vld [vmem:[#allocation2 + $0x98] sm:$0xff]
      %v827 = vld [vmem:[#allocation2 + $0xa0] sm:$0xff]
      %v828 = vld [vmem:[#allocation2 + $0xa8] sm:$0xff]
      %v829 = vld [vmem:[#allocation2 + $0xb0] sm:$0xff]
      %v830 = vld [vmem:[#allocation2 + $0xb8] sm:$0xff]
      %v831 = vld [vmem:[#allocation2 + $0xc0] sm:$0xff]
      %v832 = vld [vmem:[#allocation2 + $0xc8] sm:$0xff]
      %v833 = vld [vmem:[#allocation2 + $0xd0] sm:$0xff]
      %v834 = vld [vmem:[#allocation2 + $0xd8] sm:$0xff]
      %v835 = vld [vmem:[#allocation2 + $0xe0] sm:$0xff]
      %v836 = vld [vmem:[#allocation2 + $0xe8] sm:$0xff]
      %v837 = vld [vmem:[#allocation2 + $0xf0] sm:$0xff]
      %v838 = vld [vmem:[#allocation2 + $0xf8] sm:$0xff]
      %v839 = vld [vmem:[#allocation2 + $0x100] sm:$0xff]
      %v840 = vld [vmem:[#allocation2 + $0x108] sm:$0xff]
      %v841 = vld [vmem:[#allocation2 + $0x110] sm:$0xff]
      %v842 = vld [vmem:[#allocation2 + $0x118] sm:$0xff]
      %v843 = vld [vmem:[#allocation2 + $0x120] sm:$0xff]
      %v844 = vld [vmem:[#allocation2 + $0x128] sm:$0xff]
      %v845 = vld [vmem:[#allocation2 + $0x130] sm:$0xff]
      %v846 = vld [vmem:[#allocation2 + $0x138] sm:$0xff]
      %v847 = vld [vmem:[#allocation2 + $0x140] sm:$0xff]
      %v848 = vld [vmem:[#allocation2 + $0x148] sm:$0xff]
      %v849 = vld [vmem:[#allocation2 + $0x150] sm:$0xff]
      %v850 = vld [vmem:[#allocation2 + $0x158] sm:$0xff]
      %v851 = vld [vmem:[#allocation2 + $0x160] sm:$0xff]
      %v852 = vld [vmem:[#allocation2 + $0x168] sm:$0xff]
      %v853 = vld [vmem:[#allocation2 + $0x170] sm:$0xff]
      %v854 = vld [vmem:[#allocation2 + $0x178] sm:$0xff]
      %v855 = vld [vmem:[#allocation2 + $0x180] sm:$0xff]
      %v856 = vld [vmem:[#allocation2 + $0x188] sm:$0xff]
      %v857 = vld [vmem:[#allocation2 + $0x190] sm:$0xff]
      %v858 = vld [vmem:[#allocation2 + $0x198] sm:$0xff]
      %v859 = vld [vmem:[#allocation2 + $0x1a0] sm:$0xff]
      %v860 = vld [vmem:[#allocation2 + $0x1a8] sm:$0xff]
      %v861 = vld [vmem:[#allocation2 + $0x1b0] sm:$0xff]
      %v862 = vld [vmem:[#allocation2 + $0x1b8] sm:$0xff]
      %v863 = vld [vmem:[#allocation2 + $0x1c0] sm:$0xff]
      %v864 = vld [vmem:[#allocation2 + $0x1c8] sm:$0xff]
      %v865 = vld [vmem:[#allocation2 + $0x1d0] sm:$0xff]
      %v866 = vld [vmem:[#allocation2 + $0x1d8] sm:$0xff]
      %v867 = vld [vmem:[#allocation2 + $0x1e0] sm:$0xff]
      %v868 = vld [vmem:[#allocation2 + $0x1e8] sm:$0xff]
      %v869 = vld [vmem:[#allocation2 + $0x1f0] sm:$0xff]
      %v870 = vld [vmem:[#allocation2 + $0x1f8] sm:$0xff]
      %v871 = vld [vmem:[#allocation2 + $0x200] sm:$0xff]
      %v872 = vld [vmem:[#allocation2 + $0x208] sm:$0xff]
      %v873 = vld [vmem:[#allocation2 + $0x210] sm:$0xff]
      %v874 = vld [vmem:[#allocation2 + $0x218] sm:$0xff]
      %v875 = vld [vmem:[#allocation2 + $0x220] sm:$0xff]
      %v876 = vld [vmem:[#allocation2 + $0x228] sm:$0xff]
      %v877 = vld [vmem:[#allocation2 + $0x230] sm:$0xff]
      %v878 = vld [vmem:[#allocation2 + $0x238] sm:$0xff]
      %vm879 = vcmask 588800
      %v881 = vsel %vm879, %v806, 0
      %883 = vmatpush.msra.mxu0 0.0
      %884 = vmatpush.msra.mxu0 0.0
      %885 = vmatpush.msra.mxu0 0.0
      %886 = vmatpush.msra.mxu0 0.0
      %887 = vmatpush.msra.mxu0 0.0
      %888 = vmatpush.msra.mxu0 0.0
      %889 = vmatpush.msra.mxu0 0.0
      %890 = vmatpush.msra.mxu0 %v871
      %891 = vmatpush.msra.mxu0 %v863
      %892 = vmatpush.msra.mxu0 %v855
      %893 = vmatpush.msra.mxu0 %v847
      %894 = vmatpush.msra.mxu0 %v839
      %895 = vmatpush.msra.mxu0 %v831
      %896 = vmatpush.msra.mxu0 %v823
      %897 = vmatpush.msra.mxu0 %v815
      %898 = vmatpush.msra.mxu0 %v807
      %899 = vmatmul.f32.gmra.mxu0 %v881
      %v900 = vpop.f32.mrf.mxu0
      %v901 = vadd.f32 0.0, %v900
      %902 = vdwg.mxu0
      %903 = vmatpush.msra.mxu0 0.0
      %904 = vmatpush.msra.mxu0 0.0
      %905 = vmatpush.msra.mxu0 0.0
      %906 = vmatpush.msra.mxu0 0.0
      %907 = vmatpush.msra.mxu0 0.0
      %908 = vmatpush.msra.mxu0 0.0
      %909 = vmatpush.msra.mxu0 0.0
      %910 = vmatpush.msra.mxu0 %v872
      %911 = vmatpush.msra.mxu0 %v864
      %912 = vmatpush.msra.mxu0 %v856
      %913 = vmatpush.msra.mxu0 %v848
      %914 = vmatpush.msra.mxu0 %v840
      %915 = vmatpush.msra.mxu0 %v832
      %916 = vmatpush.msra.mxu0 %v824
      %917 = vmatpush.msra.mxu0 %v816
      %918 = vmatpush.msra.mxu0 %v808
      %919 = vmatmul.f32.gmra.mxu0 %v881
      %v920 = vpop.f32.mrf.mxu0
      %v921 = vadd.f32 0.0, %v920
      %922 = vdwg.mxu0
      %923 = vmatpush.msra.mxu0 0.0
      %924 = vmatpush.msra.mxu0 0.0
      %925 = vmatpush.msra.mxu0 0.0
      %926 = vmatpush.msra.mxu0 0.0
      %927 = vmatpush.msra.mxu0 0.0
      %928 = vmatpush.msra.mxu0 0.0
      %929 = vmatpush.msra.mxu0 0.0
      %930 = vmatpush.msra.mxu0 %v873
      %931 = vmatpush.msra.mxu0 %v865
      %932 = vmatpush.msra.mxu0 %v857
      %933 = vmatpush.msra.mxu0 %v849
      %934 = vmatpush.msra.mxu0 %v841
      %935 = vmatpush.msra.mxu0 %v833
      %936 = vmatpush.msra.mxu0 %v825
      %937 = vmatpush.msra.mxu0 %v817
      %938 = vmatpush.msra.mxu0 %v809
      %939 = vmatmul.f32.gmra.mxu0 %v881
      %v940 = vpop.f32.mrf.mxu0
      %v941 = vadd.f32 0.0, %v940
      %942 = vdwg.mxu0
      %943 = vmatpush.msra.mxu0 0.0
      %944 = vmatpush.msra.mxu0 0.0
      %945 = vmatpush.msra.mxu0 0.0
      %946 = vmatpush.msra.mxu0 0.0
      %947 = vmatpush.msra.mxu0 0.0
      %948 = vmatpush.msra.mxu0 0.0
      %949 = vmatpush.msra.mxu0 0.0
      %950 = vmatpush.msra.mxu0 %v874
      %951 = vmatpush.msra.mxu0 %v866
      %952 = vmatpush.msra.mxu0 %v858
      %953 = vmatpush.msra.mxu0 %v850
      %954 = vmatpush.msra.mxu0 %v842
      %955 = vmatpush.msra.mxu0 %v834
      %956 = vmatpush.msra.mxu0 %v826
      %957 = vmatpush.msra.mxu0 %v818
      %958 = vmatpush.msra.mxu0 %v810
      %959 = vmatmul.f32.gmra.mxu0 %v881
      %v960 = vpop.f32.mrf.mxu0
      %v961 = vadd.f32 0.0, %v960
      %962 = vdwg.mxu0
      %963 = vmatpush.msra.mxu0 0.0
      %964 = vmatpush.msra.mxu0 0.0
      %965 = vmatpush.msra.mxu0 0.0
      %966 = vmatpush.msra.mxu0 0.0
      %967 = vmatpush.msra.mxu0 0.0
      %968 = vmatpush.msra.mxu0 0.0
      %969 = vmatpush.msra.mxu0 0.0
      %970 = vmatpush.msra.mxu0 %v875
      %971 = vmatpush.msra.mxu0 %v867
      %972 = vmatpush.msra.mxu0 %v859
      %973 = vmatpush.msra.mxu0 %v851
      %974 = vmatpush.msra.mxu0 %v843
      %975 = vmatpush.msra.mxu0 %v835
      %976 = vmatpush.msra.mxu0 %v827
      %977 = vmatpush.msra.mxu0 %v819
      %978 = vmatpush.msra.mxu0 %v811
      %979 = vmatmul.f32.gmra.mxu0 %v881
      %v980 = vpop.f32.mrf.mxu0
      %v981 = vadd.f32 0.0, %v980
      %982 = vdwg.mxu0
      %983 = vmatpush.msra.mxu0 0.0
      %984 = vmatpush.msra.mxu0 0.0
      %985 = vmatpush.msra.mxu0 0.0
      %986 = vmatpush.msra.mxu0 0.0
      %987 = vmatpush.msra.mxu0 0.0
      %988 = vmatpush.msra.mxu0 0.0
      %989 = vmatpush.msra.mxu0 0.0
      %990 = vmatpush.msra.mxu0 %v876
      %991 = vmatpush.msra.mxu0 %v868
      %992 = vmatpush.msra.mxu0 %v860
      %993 = vmatpush.msra.mxu0 %v852
      %994 = vmatpush.msra.mxu0 %v844
      %995 = vmatpush.msra.mxu0 %v836
      %996 = vmatpush.msra.mxu0 %v828
      %997 = vmatpush.msra.mxu0 %v820
      %998 = vmatpush.msra.mxu0 %v812
      %999 = vmatmul.f32.gmra.mxu0 %v881
      %v1000 = vpop.f32.mrf.mxu0
      %v1001 = vadd.f32 0.0, %v1000
      %1002 = vdwg.mxu0
      %1003 = vmatpush.msra.mxu0 0.0
      %1004 = vmatpush.msra.mxu0 0.0
      %1005 = vmatpush.msra.mxu0 0.0
      %1006 = vmatpush.msra.mxu0 0.0
      %1007 = vmatpush.msra.mxu0 0.0
      %1008 = vmatpush.msra.mxu0 0.0
      %1009 = vmatpush.msra.mxu0 0.0
      %1010 = vmatpush.msra.mxu0 %v877
      %1011 = vmatpush.msra.mxu0 %v869
      %1012 = vmatpush.msra.mxu0 %v861
      %1013 = vmatpush.msra.mxu0 %v853
      %1014 = vmatpush.msra.mxu0 %v845
      %1015 = vmatpush.msra.mxu0 %v837
      %1016 = vmatpush.msra.mxu0 %v829
      %1017 = vmatpush.msra.mxu0 %v821
      %1018 = vmatpush.msra.mxu0 %v813
      %1019 = vmatmul.f32.gmra.mxu0 %v881
      %v1020 = vpop.f32.mrf.mxu0
      %v1021 = vadd.f32 0.0, %v1020
      %1022 = vdwg.mxu0
      %1023 = vmatpush.msra.mxu0 0.0
      %1024 = vmatpush.msra.mxu0 0.0
      %1025 = vmatpush.msra.mxu0 0.0
      %1026 = vmatpush.msra.mxu0 0.0
      %1027 = vmatpush.msra.mxu0 0.0
      %1028 = vmatpush.msra.mxu0 0.0
      %1029 = vmatpush.msra.mxu0 0.0
      %1030 = vmatpush.msra.mxu0 %v878
      %1031 = vmatpush.msra.mxu0 %v870
      %1032 = vmatpush.msra.mxu0 %v862
      %1033 = vmatpush.msra.mxu0 %v854
      %1034 = vmatpush.msra.mxu0 %v846
      %1035 = vmatpush.msra.mxu0 %v838
      %1036 = vmatpush.msra.mxu0 %v830
      %1037 = vmatpush.msra.mxu0 %v822
      %1038 = vmatpush.msra.mxu0 %v814
      %1039 = vmatmul.f32.gmra.mxu0 %v881
      %v1040 = vpop.f32.mrf.mxu0
      %v1041 = vadd.f32 0.0, %v1040
      %1042 = vdwg.mxu0
      %v1051 = vrot.slane %v921, 4
      %v1052 = vrot.slane %v961, 4
      %v1053 = vrot.slane %v1001, 4
      %v1054 = vrot.slane %v1041, 4
      %v1055 = vsel %vm363, %v901, %v1051
      %v1056 = vsel %vm363, %v941, %v1052
      %v1057 = vsel %vm363, %v981, %v1053
      %v1058 = vsel %vm363, %v1021, %v1054
      %1063 = vst [vmem:[%s291] sm:$0xff] %v1055
      %1064 = vst [vmem:[%s291 + $0x8] sm:$0xff] %v1056
      %1065 = vst [vmem:[%s291 + $0x10] sm:$0xff] %v1057
      %1066 = vst [vmem:[%s291 + $0x18] sm:$0xff] %v1058
      %v1067 = vsel %vm363, %v901, 0.0
      %v1068 = vsel %vm363, %v921, 0.0
      %v1069 = vadd.f32 %v1067, %v1068
      %v1070 = vsel %vm363, %v941, 0.0
      %v1071 = vadd.f32 %v1069, %v1070
      %v1072 = vsel %vm363, %v961, 0.0
      %v1073 = vadd.f32 %v1071, %v1072
      %v1074 = vsel %vm363, %v981, 0.0
      %v1075 = vadd.f32 %v1073, %v1074
      %v1076 = vsel %vm363, %v1001, 0.0
      %v1077 = vadd.f32 %v1075, %v1076
      %v1078 = vsel %vm363, %v1021, 0.0
      %v1079 = vadd.f32 %v1077, %v1078
      %v1080 = vsel %vm363, %v1041, 0.0
      %v1081 = vadd.f32 %v1079, %v1080
      %1082 = vadd.xlane.f32.xlu0 %v1081
      %v1083 = vpop.xlane.xlu0 %1082
      %vm1084 = vcmask 3072
      %1085 = vst.msk [vmem:[%s295] sm:$0xf] %vm1084, %v1083
      %v1086 = vmul.f32 %v901, %v901
      %v1087 = vmul.f32 %v921, %v921
      %v1088 = vmul.f32 %v941, %v941
      %v1089 = vmul.f32 %v961, %v961
      %v1090 = vmul.f32 %v981, %v981
      %v1091 = vmul.f32 %v1001, %v1001
      %v1092 = vmul.f32 %v1021, %v1021
      %v1093 = vmul.f32 %v1041, %v1041
      %v1094 = vsel %vm363, %v1086, 0.0
      %v1095 = vsel %vm363, %v1087, 0.0
      %v1096 = vadd.f32 %v1094, %v1095
      %v1097 = vsel %vm363, %v1088, 0.0
      %v1098 = vadd.f32 %v1096, %v1097
      %v1099 = vsel %vm363, %v1089, 0.0
      %v1100 = vadd.f32 %v1098, %v1099
      %v1101 = vsel %vm363, %v1090, 0.0
      %v1102 = vadd.f32 %v1100, %v1101
      %v1103 = vsel %vm363, %v1091, 0.0
      %v1104 = vadd.f32 %v1102, %v1103
      %v1105 = vsel %vm363, %v1092, 0.0
      %v1106 = vadd.f32 %v1104, %v1105
      %v1107 = vsel %vm363, %v1093, 0.0
      %v1108 = vadd.f32 %v1106, %v1107
      %1109 = vadd.xlane.f32.xlu0 %v1108
      %v1110 = vpop.xlane.xlu0 %1109
      %1111 = vst.msk [vmem:[%s299] sm:$0xf] %vm1084, %v1110
      %p1112 = scmp.lt.s32.totalorder %s19, 1
      %s1113 = scalar_select %p1112, %s19, 1
      %s1114 = smul.addr %s1113, 8
      %s1115 = smul.addr %s1114, 4
      %s1116 = scalar_lea.vmem %s5, %s1115
      %p1117 = scmp.lt.s32.totalorder %s19, 1
      %s1118 = scalar_select %p1117, %s19, 1
      %s1119 = smul.addr %s1118, 4
      %s1120 = scalar_lea.vmem %s6, %s1119
      %p1121 = scmp.lt.s32.totalorder %s19, 1
      %s1122 = scalar_select %p1121, %s19, 1
      %s1123 = smul.addr %s1122, 4
      %s1124 = scalar_lea.vmem %s7, %s1123
      // Predicated region
      $region41: #{up_forward.3} parent=39 // pred_check
        %p1125 = pneg %p147
      $region42: #{up_forward.3} parent=39 // pred_check_branch
        %1127 = sbr.rel (%p1125) target = $region44
      $region43: #{up_forward.3} parent=39 // pred_region
        _
      $region44: #{up_forward.3} parent=39 // pred_fallthru
        _
      // Predicated region
      $region45: #{up_forward.3} parent=39 // pred_check
        %p1128 = pneg %p173
      $region46: #{up_forward.3} parent=39 // pred_check_branch
        %1130 = sbr.rel (%p1128) target = $region48
      $region47: #{up_forward.3} parent=39 // pred_region
        _
      $region48: #{up_forward.3} parent=39 // pred_fallthru
        _
      // Predicated region
      $region49: #{up_forward.3} parent=39 // pred_check
        %p1131 = pneg %p199
      $region50: #{up_forward.3} parent=39 // pred_check_branch
        %1133 = sbr.rel (%p1131) target = $region52
      $region51: #{up_forward.3} parent=39 // pred_region
        _
      $region52: #{up_forward.3} parent=39 // pred_fallthru
        _
    $region40: #{up_forward.3} parent=5 // pred_fallthru
      _
    %p1134 = scmp.le.s32.totalorder 2, %s14
    // Predicated region
    $region53: #{up_forward.3} parent=5 // pred_check
      %p1135 = pneg %p1134
    $region54: #{up_forward.3} parent=5 // pred_check_branch
      %1137 = sbr.rel (%p1135) target = $region56
    $region55: #{up_forward.3} parent=5 // pred_region
      %s1138 = ssub.s32 %s14, 2
      // Predicated region
      $region57: #{up_forward.3} parent=55 // pred_check
        %p1139 = pneg %p153
      $region58: #{up_forward.3} parent=55 // pred_check_branch
        %1141 = sbr.rel (%p1139) target = $region60
      $region59: #{up_forward.3} parent=55 // pred_region
        %p1142 = scmp.lt.s32.totalorder %s20, 1
        %s1143 = scalar_select %p1142, %s20, 1
        %s1144 = smul.addr %s1143, 8
        %s1145 = smul.addr %s1144, 4
        %s1146 = scalar_lea.vmem %s5, %s1145
      $region60: #{up_forward.3} parent=55 // pred_fallthru
        _
      // Predicated region
      $region61: #{up_forward.3} parent=55 // pred_check
        %p1147 = pneg %p179
      $region62: #{up_forward.3} parent=55 // pred_check_branch
        %1149 = sbr.rel (%p1147) target = $region64
      $region63: #{up_forward.3} parent=55 // pred_region
        %p1150 = scmp.lt.s32.totalorder %s20, 1
        %s1151 = scalar_select %p1150, %s20, 1
        %s1152 = smul.addr %s1151, 4
        %s1153 = scalar_lea.vmem %s6, %s1152
      $region64: #{up_forward.3} parent=55 // pred_fallthru
        _
      // Predicated region
      $region65: #{up_forward.3} parent=55 // pred_check
        %p1154 = pneg %p205
      $region66: #{up_forward.3} parent=55 // pred_check_branch
        %1156 = sbr.rel (%p1154) target = $region68
      $region67: #{up_forward.3} parent=55 // pred_region
        %p1157 = scmp.lt.s32.totalorder %s20, 1
        %s1158 = scalar_select %p1157, %s20, 1
        %s1159 = smul.addr %s1158, 4
        %s1160 = scalar_lea.vmem %s7, %s1159
      $region68: #{up_forward.3} parent=55 // pred_fallthru
        _
    $region56: #{up_forward.3} parent=5 // pred_fallthru
      _
  $region6: #{up_forward.3} parent=0 // loop_footer
    %s18 = sadd.s32 1, %s14
  $region7: #{up_forward.3} parent=0 // loop_footer_branch
    %13 = sbr.rel target = $region3
  $region8: #{up_forward.3} parent=0 // loop_exit
    _

// kernel: up_forward.2
$region0: #{up_forward.2}
  #allocation0 [shape = 'u32[]', space=smem, size = 0x4, offset = 0x4, fixed_abs, tag = 'smem constant byte address 0x4 - core index']
  #allocation1 [shape = 'u32[72,128]{1,0:T(1,128)}', space=vmem, size = 0x9000, scoped, tag = 'internal scratch']
  #allocation2 [shape = 'f32[72,1024]{1,0:T(8,128)}', space=vmem, size = 0x48000, scoped, tag = 'scratch operand']
  %s0 = inlined_call_operand.vmem [shape: f32[2,8,256], index: 0, kind: input, shape index: {}]
  %s1 = inlined_call_operand.vmem [shape: f32[2,4,1024], index: 1, kind: input, shape index: {}]
  %s2 = inlined_call_operand.hbm [shape: f32[256,1024], index: 2, kind: input, shape index: {}]
  %s3 = inlined_call_operand.vmem [shape: f32[4,1024], index: 3, kind: input, shape index: {}]
  %s4 = inlined_call_operand.vmem [shape: f32[9,1024], index: 4, kind: input, shape index: {}]
  %s5 = inlined_call_operand.vmem [shape: f32[4,4,8], index: 5, kind: input, shape index: {}]
  %s6 = inlined_call_operand.vmem [shape: f32[4,1], index: 6, kind: input, shape index: {}]
  %s7 = inlined_call_operand.vmem [shape: f32[4,72], index: 7, kind: input, shape index: {}]
  %s8 = inlined_call_operand.vmem [shape: f32[2,4,1024], index: 8, kind: output, shape index: {0}]
  %s9 = inlined_call_operand.vmem [shape: f32[2,4,1], index: 9, kind: output, shape index: {1}]
  %s10 = inlined_call_operand.vmem [shape: f32[2,4,1], index: 10, kind: output, shape index: {2}]
  %11 = xla_tuple %s8, %s9, %s10
  %s12 = sld [smem:[#allocation0]]
  $region85: #{up_forward.2} parent=0
    _
  %s14 = ssub.s32 1, %s12
  %s15 = scalar_select 0, %s14, %s12
  $region1: #{up_forward.2} parent=0
    #allocation3 [shape = 'u8[1048576]{0}', space=vmem, size = 0x100000, scoped, tag = 'input window, operand 2, single buffered']
    #allocation4 [shape = 's32[2]{0}', space=sflag, size = 0x8, scoped, tag = 'scoped memory for up_forward.2']
    %16 = vsyncpa [#allocation4], 0
    loop: start=0, step=1, limit=4
    $region2: #{up_forward.2} parent=1 // loop_pre_header
      _
    $region3: #{up_forward.2} parent=1 // loop_header
      %s18 = sphi 0, %s22
      %p19 = scmp.ge.s32.totalorder %s18, 4
      %s28 = sphi 0, %s30
      %s31 = sphi 0, %s28
      %s32 = sphi 0, %s31
      %s48 = sphi 0, %s32
      %s54 = sphi 0, %s56
      %s57 = sphi 0, %s54
      %s58 = sphi 0, %s57
      %s74 = sphi 0, %s58
      %s78 = sphi 0, %s78
      %s80 = sphi 0, %s78
      %s81 = sphi 0, %s80
      %s95 = sphi 0, %s81
      %s99 = sphi 0, %s99
      %s101 = sphi 0, %s99
      %s102 = sphi 0, %s101
      %s116 = sphi 0, %s102
      %s120 = sphi 0, %s120
      %s122 = sphi 0, %s120
      %s123 = sphi 0, %s122
      %s137 = sphi 0, %s123
      %s141 = sphi 0, %s141
      %s143 = sphi 0, %s141
      %s144 = sphi 0, %s143
      %s158 = sphi 0, %s144
      %s162 = sphi 0, %s162
      %s164 = sphi 0, %s162
      %s165 = sphi 0, %s164
      %s179 = sphi 0, %s165
      %s183 = sphi 0, %s183
      %s185 = sphi 0, %s183
      %s186 = sphi 0, %s185
      %s200 = sphi 0, %s186
      %s206 = sphi 0, %s208
      %s209 = sphi 0, %s206
      %s210 = sphi 0, %s209
      %s226 = sphi 0, %s210
      %s232 = sphi 0, %s234
      %s235 = sphi 0, %s232
      %s236 = sphi 0, %s235
      %s252 = sphi 0, %s236
      %s258 = sphi 0, %s260
      %s261 = sphi 0, %s258
      %s262 = sphi 0, %s261
      %s278 = sphi 0, %s262
    $region4: #{up_forward.2} parent=1 // loop_header_branch
      %21 = sbr.rel (%p19) target = $region8
    $region5: #{up_forward.2} parent=1 // loop_body
      %s23 = ssub.s32 %s18, 1
      %s24 = ssub.s32 %s18, 2
      %s25 = sadd.s32 %s18, 1
      %s26 = ssub.s32 %s18, %s25
      %p27 = scmp.eq.s32.totalorder %s26, 0
      %s29 = sadd.s32 %s28, 1
      %s30 = scalar_select %p27, %s28, %s29
      %p33 = pneg %p27
      %p34 = scmp.eq.s32.totalorder %s18, 1
      %p35 = por %p33, %p34
      %p36 = scmp.ne.s32.totalorder %s28, %s31
      %p37 = scmp.eq.s32.totalorder %s18, 0
      %p38 = por %p36, %p37
      %p39 = scmp.ne.s32.totalorder %s28, %s31
      %p40 = scmp.eq.s32.totalorder %s23, 1
      %p41 = por %p39, %p40
      %p42 = scmp.ne.s32.totalorder %s31, %s32
      %p43 = scmp.eq.s32.totalorder %s23, 0
      %p44 = por %p42, %p43
      %p45 = scmp.ne.s32.totalorder %s31, %s32
      %p46 = scmp.eq.s32.totalorder %s24, 1
      %p47 = por %p45, %p46
      %p49 = scmp.ne.s32.totalorder %s32, %s48
      %p50 = scmp.eq.s32.totalorder %s24, 0
      %p51 = por %p49, %p50
      %s52 = ssub.s32 %s18, %s25
      %p53 = scmp.eq.s32.totalorder %s52, 0
      %s55 = sadd.s32 %s54, 1
      %s56 = scalar_select %p53, %s54, %s55
      %p59 = pneg %p53
      %p60 = scmp.eq.s32.totalorder %s18, 1
      %p61 = por %p59, %p60
      %p62 = scmp.ne.s32.totalorder %s54, %s57
      %p63 = scmp.eq.s32.totalorder %s18, 0
      %p64 = por %p62, %p63
      %p65 = scmp.ne.s32.totalorder %s54, %s57
      %p66 = scmp.eq.s32.totalorder %s23, 1
      %p67 = por %p65, %p66
      %p68 = scmp.ne.s32.totalorder %s57, %s58
      %p69 = scmp.eq.s32.totalorder %s23, 0
      %p70 = por %p68, %p69
      %p71 = scmp.ne.s32.totalorder %s57, %s58
      %p72 = scmp.eq.s32.totalorder %s24, 1
      %p73 = por %p71, %p72
      %p75 = scmp.ne.s32.totalorder %s58, %s74
      %p76 = scmp.eq.s32.totalorder %s24, 0
      %p77 = por %p75, %p76
      %s79 = sadd.s32 %s78, 1
      %p82 = scmp.eq.s32.totalorder %s18, 1
      %p83 = scmp.ne.s32.totalorder %s78, %s80
      %p84 = scmp.eq.s32.totalorder %s18, 0
      %p85 = por %p83, %p84
      %p86 = scmp.ne.s32.totalorder %s78, %s80
      %p87 = scmp.eq.s32.totalorder %s23, 1
      %p88 = por %p86, %p87
      %p89 = scmp.ne.s32.totalorder %s80, %s81
      %p90 = scmp.eq.s32.totalorder %s23, 0
      %p91 = por %p89, %p90
      %p92 = scmp.ne.s32.totalorder %s80, %s81
      %p93 = scmp.eq.s32.totalorder %s24, 1
      %p94 = por %p92, %p93
      %p96 = scmp.ne.s32.totalorder %s81, %s95
      %p97 = scmp.eq.s32.totalorder %s24, 0
      %p98 = por %p96, %p97
      %s100 = sadd.s32 %s99, 1
      %p103 = scmp.eq.s32.totalorder %s18, 1
      %p104 = scmp.ne.s32.totalorder %s99, %s101
      %p105 = scmp.eq.s32.totalorder %s18, 0
      %p106 = por %p104, %p105
      %p107 = scmp.ne.s32.totalorder %s99, %s101
      %p108 = scmp.eq.s32.totalorder %s23, 1
      %p109 = por %p107, %p108
      %p110 = scmp.ne.s32.totalorder %s101, %s102
      %p111 = scmp.eq.s32.totalorder %s23, 0
      %p112 = por %p110, %p111
      %p113 = scmp.ne.s32.totalorder %s101, %s102
      %p114 = scmp.eq.s32.totalorder %s24, 1
      %p115 = por %p113, %p114
      %p117 = scmp.ne.s32.totalorder %s102, %s116
      %p118 = scmp.eq.s32.totalorder %s24, 0
      %p119 = por %p117, %p118
      %s121 = sadd.s32 %s120, 1
      %p124 = scmp.eq.s32.totalorder %s18, 1
      %p125 = scmp.ne.s32.totalorder %s120, %s122
      %p126 = scmp.eq.s32.totalorder %s18, 0
      %p127 = por %p125, %p126
      %p128 = scmp.ne.s32.totalorder %s120, %s122
      %p129 = scmp.eq.s32.totalorder %s23, 1
      %p130 = por %p128, %p129
      %p131 = scmp.ne.s32.totalorder %s122, %s123
      %p132 = scmp.eq.s32.totalorder %s23, 0
      %p133 = por %p131, %p132
      %p134 = scmp.ne.s32.totalorder %s122, %s123
      %p135 = scmp.eq.s32.totalorder %s24, 1
      %p136 = por %p134, %p135
      %p138 = scmp.ne.s32.totalorder %s123, %s137
      %p139 = scmp.eq.s32.totalorder %s24, 0
      %p140 = por %p138, %p139
      %s142 = sadd.s32 %s141, 1
      %p145 = scmp.eq.s32.totalorder %s18, 1
      %p146 = scmp.ne.s32.totalorder %s141, %s143
      %p147 = scmp.eq.s32.totalorder %s18, 0
      %p148 = por %p146, %p147
      %p149 = scmp.ne.s32.totalorder %s141, %s143
      %p150 = scmp.eq.s32.totalorder %s23, 1
      %p151 = por %p149, %p150
      %p152 = scmp.ne.s32.totalorder %s143, %s144
      %p153 = scmp.eq.s32.totalorder %s23, 0
      %p154 = por %p152, %p153
      %p155 = scmp.ne.s32.totalorder %s143, %s144
      %p156 = scmp.eq.s32.totalorder %s24, 1
      %p157 = por %p155, %p156
      %p159 = scmp.ne.s32.totalorder %s144, %s158
      %p160 = scmp.eq.s32.totalorder %s24, 0
      %p161 = por %p159, %p160
      %s163 = sadd.s32 %s162, 1
      %p166 = scmp.eq.s32.totalorder %s18, 1
      %p167 = scmp.ne.s32.totalorder %s162, %s164
      %p168 = scmp.eq.s32.totalorder %s18, 0
      %p169 = por %p167, %p168
      %p170 = scmp.ne.s32.totalorder %s162, %s164
      %p171 = scmp.eq.s32.totalorder %s23, 1
      %p172 = por %p170, %p171
      %p173 = scmp.ne.s32.totalorder %s164, %s165
      %p174 = scmp.eq.s32.totalorder %s23, 0
      %p175 = por %p173, %p174
      %p176 = scmp.ne.s32.totalorder %s164, %s165
      %p177 = scmp.eq.s32.totalorder %s24, 1
      %p178 = por %p176, %p177
      %p180 = scmp.ne.s32.totalorder %s165, %s179
      %p181 = scmp.eq.s32.totalorder %s24, 0
      %p182 = por %p180, %p181
      %s184 = sadd.s32 %s183, 1
      %p187 = scmp.eq.s32.totalorder %s18, 1
      %p188 = scmp.ne.s32.totalorder %s183, %s185
      %p189 = scmp.eq.s32.totalorder %s18, 0
      %p190 = por %p188, %p189
      %p191 = scmp.ne.s32.totalorder %s183, %s185
      %p192 = scmp.eq.s32.totalorder %s23, 1
      %p193 = por %p191, %p192
      %p194 = scmp.ne.s32.totalorder %s185, %s186
      %p195 = scmp.eq.s32.totalorder %s23, 0
      %p196 = por %p194, %p195
      %p197 = scmp.ne.s32.totalorder %s185, %s186
      %p198 = scmp.eq.s32.totalorder %s24, 1
      %p199 = por %p197, %p198
      %p201 = scmp.ne.s32.totalorder %s186, %s200
      %p202 = scmp.eq.s32.totalorder %s24, 0
      %p203 = por %p201, %p202
      %s204 = ssub.s32 %s18, %s25
      %p205 = scmp.eq.s32.totalorder %s204, 0
      %s207 = sadd.s32 %s206, 1
      %s208 = scalar_select %p205, %s206, %s207
      %p211 = pneg %p205
      %p212 = scmp.eq.s32.totalorder %s18, 1
      %p213 = por %p211, %p212
      %p214 = scmp.ne.s32.totalorder %s206, %s209
      %p215 = scmp.eq.s32.totalorder %s18, 0
      %p216 = por %p214, %p215
      %p217 = scmp.ne.s32.totalorder %s206, %s209
      %p218 = scmp.eq.s32.totalorder %s23, 1
      %p219 = por %p217, %p218
      %p220 = scmp.ne.s32.totalorder %s209, %s210
      %p221 = scmp.eq.s32.totalorder %s23, 0
      %p222 = por %p220, %p221
      %p223 = scmp.ne.s32.totalorder %s209, %s210
      %p224 = scmp.eq.s32.totalorder %s24, 1
      %p225 = por %p223, %p224
      %p227 = scmp.ne.s32.totalorder %s210, %s226
      %p228 = scmp.eq.s32.totalorder %s24, 0
      %p229 = por %p227, %p228
      %s230 = ssub.s32 %s18, %s25
      %p231 = scmp.eq.s32.totalorder %s230, 0
      %s233 = sadd.s32 %s232, 1
      %s234 = scalar_select %p231, %s232, %s233
      %p237 = pneg %p231
      %p238 = scmp.eq.s32.totalorder %s18, 1
      %p239 = por %p237, %p238
      %p240 = scmp.ne.s32.totalorder %s232, %s235
      %p241 = scmp.eq.s32.totalorder %s18, 0
      %p242 = por %p240, %p241
      %p243 = scmp.ne.s32.totalorder %s232, %s235
      %p244 = scmp.eq.s32.totalorder %s23, 1
      %p245 = por %p243, %p244
      %p246 = scmp.ne.s32.totalorder %s235, %s236
      %p247 = scmp.eq.s32.totalorder %s23, 0
      %p248 = por %p246, %p247
      %p249 = scmp.ne.s32.totalorder %s235, %s236
      %p250 = scmp.eq.s32.totalorder %s24, 1
      %p251 = por %p249, %p250
      %p253 = scmp.ne.s32.totalorder %s236, %s252
      %p254 = scmp.eq.s32.totalorder %s24, 0
      %p255 = por %p253, %p254
      %s256 = ssub.s32 %s18, %s25
      %p257 = scmp.eq.s32.totalorder %s256, 0
      %s259 = sadd.s32 %s258, 1
      %s260 = scalar_select %p257, %s258, %s259
      %p263 = pneg %p257
      %p264 = scmp.eq.s32.totalorder %s18, 1
      %p265 = por %p263, %p264
      %p266 = scmp.ne.s32.totalorder %s258, %s261
      %p267 = scmp.eq.s32.totalorder %s18, 0
      %p268 = por %p266, %p267
      %p269 = scmp.ne.s32.totalorder %s258, %s261
      %p270 = scmp.eq.s32.totalorder %s23, 1
      %p271 = por %p269, %p270
      %p272 = scmp.ne.s32.totalorder %s261, %s262
      %p273 = scmp.eq.s32.totalorder %s23, 0
      %p274 = por %p272, %p273
      %p275 = scmp.ne.s32.totalorder %s261, %s262
      %p276 = scmp.eq.s32.totalorder %s24, 1
      %p277 = por %p275, %p276
      %p279 = scmp.ne.s32.totalorder %s262, %s278
      %p280 = scmp.eq.s32.totalorder %s24, 0
      %p281 = por %p279, %p280
      %p282 = scmp.le.s32.totalorder 1, %s18
      %p283 = scmp.lt.s32.totalorder %s18, 3
      %p284 = pnand %p282, %p283
      %p285 = pneg %p284
      // Predicated region
      $region9: #{up_forward.2} parent=5 // pred_check
        _
      $region10: #{up_forward.2} parent=5 // pred_check_branch
        %287 = sbr.rel (%p284) target = $region12
      $region11: #{up_forward.2} parent=5 // pred_region
        %s288 = ssub.s32 %s18, 1
        // Predicated region
        $region13: #{up_forward.2} parent=11 // pred_check
          %p289 = pneg %p91
        $region14: #{up_forward.2} parent=11 // pred_check_branch
          %291 = sbr.rel (%p289) target = $region16
        $region15: #{up_forward.2} parent=11 // pred_region
          %293 = vsyncadd [#allocation4], 0
          %s294 = sshll.u32 %s2, 4
          %s295 = int_to_ptr.hbm [resolvable:$true] %s294
          %s296 = sshll.u32 [#allocation3], 4
          %s297 = int_to_ptr.vmem [resolvable:$true] %s296
          %302 = dma.hbm_to_vmem [thread:$0]  %s295, 32768, %s297, [#allocation4], 1024, 1024, 64
        $region16: #{up_forward.2} parent=11 // pred_fallthru
          _
        // Predicated region
        $region17: #{up_forward.2} parent=11 // pred_check
          %p303 = pneg %p112
        $region18: #{up_forward.2} parent=11 // pred_check_branch
          %305 = sbr.rel (%p303) target = $region20
        $region19: #{up_forward.2} parent=11 // pred_region
          _
        $region20: #{up_forward.2} parent=11 // pred_fallthru
          _
        // Predicated region
        $region21: #{up_forward.2} parent=11 // pred_check
          %p306 = pneg %p133
        $region22: #{up_forward.2} parent=11 // pred_check_branch
          %308 = sbr.rel (%p306) target = $region24
        $region23: #{up_forward.2} parent=11 // pred_region
          _
        $region24: #{up_forward.2} parent=11 // pred_fallthru
          _
        // Predicated region
        $region25: #{up_forward.2} parent=11 // pred_check
          %p309 = pneg %p154
        $region26: #{up_forward.2} parent=11 // pred_check_branch
          %311 = sbr.rel (%p309) target = $region28
        $region27: #{up_forward.2} parent=11 // pred_region
          _
        $region28: #{up_forward.2} parent=11 // pred_fallthru
          _
        // Predicated region
        $region29: #{up_forward.2} parent=11 // pred_check
          %p312 = pneg %p175
        $region30: #{up_forward.2} parent=11 // pred_check_branch
          %314 = sbr.rel (%p312) target = $region32
        $region31: #{up_forward.2} parent=11 // pred_region
          _
        $region32: #{up_forward.2} parent=11 // pred_fallthru
          _
        // Predicated region
        $region33: #{up_forward.2} parent=11 // pred_check
          %p315 = pneg %p196
        $region34: #{up_forward.2} parent=11 // pred_check_branch
          %317 = sbr.rel (%p315) target = $region36
        $region35: #{up_forward.2} parent=11 // pred_region
          _
        $region36: #{up_forward.2} parent=11 // pred_fallthru
          _
      $region12: #{up_forward.2} parent=5 // pred_fallthru
        _
      %p318 = scmp.lt.s32.totalorder %s18, 2
      // Predicated region
      $region37: #{up_forward.2} parent=5 // pred_check
        %p319 = pneg %p318
      $region38: #{up_forward.2} parent=5 // pred_check_branch
        %321 = sbr.rel (%p319) target = $region40
      $region39: #{up_forward.2} parent=5 // pred_region
        // Predicated region
        $region41: #{up_forward.2} parent=39 // pred_check
          %p322 = pneg %p38
        $region42: #{up_forward.2} parent=39 // pred_check_branch
          %324 = sbr.rel (%p322) target = $region44
        $region43: #{up_forward.2} parent=39 // pred_region
          %p325 = scmp.lt.s32.totalorder %s18, 1
          %s326 = scalar_select %p325, %s18, 1
          %s327 = smul.addr %s326, 2
          %s328 = smul.addr %s327, 8
          %s329 = scalar_lea.vmem %s0, %s328
        $region44: #{up_forward.2} parent=39 // pred_fallthru
          _
        // Predicated region
        $region45: #{up_forward.2} parent=39 // pred_check
          %p330 = pneg %p64
        $region46: #{up_forward.2} parent=39 // pred_check_branch
          %332 = sbr.rel (%p330) target = $region48
        $region47: #{up_forward.2} parent=39 // pred_region
          %p333 = scmp.lt.s32.totalorder %s18, 1
          %s334 = scalar_select %p333, %s18, 1
          %s335 = smul.addr %s334, 8
          %s336 = smul.addr %s335, 4
          %s337 = scalar_lea.vmem %s1, %s336
        $region48: #{up_forward.2} parent=39 // pred_fallthru
          _
      $region40: #{up_forward.2} parent=5 // pred_fallthru
        _
      %p338 = scmp.le.s32.totalorder 1, %s18
      %p339 = scmp.lt.s32.totalorder %s18, 3
      %p340 = pnand %p338, %p339
      %p341 = pneg %p340
      // Predicated region
      $region49: #{up_forward.2} parent=5 // pred_check
        _
      $region50: #{up_forward.2} parent=5 // pred_check_branch
        %343 = sbr.rel (%p340) target = $region52
      $region51: #{up_forward.2} parent=5 // pred_region
        %s344 = ssub.s32 %s18, 1
        // Predicated region
        $region53: #{up_forward.2} parent=51 // pred_check
          %p345 = pneg %p91
        $region54: #{up_forward.2} parent=51 // pred_check_branch
          %347 = sbr.rel (%p345) target = $region56
        $region55: #{up_forward.2} parent=51 // pred_region
          %349 = dma.done [#allocation4], 32768
        $region56: #{up_forward.2} parent=51 // pred_fallthru
          _
        %p350 = scmp.lt.s32.totalorder %s23, 1
        %s351 = scalar_select %p350, %s23, 1
        %s352 = smul.addr %s351, 2
        %s353 = smul.addr %s352, 8
        %s354 = scalar_lea.vmem %s0, %s353
        %p355 = pneg %p44
        %p356 = pneg %p41
        %p357 = scmp.lt.s32.totalorder %s23, 1
        %s358 = scalar_select %p357, %s23, 1
        %s359 = smul.addr %s358, 8
        %s360 = smul.addr %s359, 4
        %s361 = scalar_lea.vmem %s1, %s360
        %p362 = pneg %p70
        %p363 = pneg %p67
        %p364 = pneg %p91
        %p365 = pneg %p88
        %p366 = pneg %p112
        %p367 = pneg %p109
        %p368 = pneg %p133
        %p369 = pneg %p130
        %p370 = pneg %p154
        %p371 = pneg %p151
        %p372 = pneg %p175
        %p373 = pneg %p172
        %p374 = pneg %p196
        %p375 = pneg %p193
        %p376 = pneg %p222
        %p377 = pneg %p219
        %p378 = scmp.lt.s32.totalorder %s23, 1
        %s379 = scalar_select %p378, %s23, 1
        %s380 = smul.addr %s379, 8
        %s381 = smul.addr %s380, 4
        %s382 = scalar_lea.vmem %s8, %s381
        %p383 = pneg %p248
        %p384 = pneg %p245
        %p385 = scmp.lt.s32.totalorder %s23, 1
        %s386 = scalar_select %p385, %s23, 1
        %s387 = smul.addr %s386, 4
        %s388 = scalar_lea.vmem %s9, %s387
        %p389 = pneg %p274
        %p390 = pneg %p271
        %p391 = scmp.lt.s32.totalorder %s23, 1
        %s392 = scalar_select %p391, %s23, 1
        %s393 = smul.addr %s392, 4
        %s394 = scalar_lea.vmem %s10, %s393
        %p395 = scmp.lt.s32.totalorder %s23, 1
        %s396 = scalar_select %p395, %s23, 1
        %s397 = smul.addr %s396, 2
        %s398 = smul.addr %s397, 8
        %s399 = scalar_lea.vmem %s0, %s398
        %p400 = scmp.lt.s32.totalorder %s23, 1
        %s401 = scalar_select %p400, %s23, 1
        %s402 = smul.addr %s401, 8
        %s403 = smul.addr %s402, 4
        %s404 = scalar_lea.vmem %s1, %s403
        %p405 = scmp.lt.s32.totalorder %s23, 1
        %s406 = scalar_select %p405, %s23, 1
        %s407 = smul.addr %s406, 8
        %s408 = smul.addr %s407, 4
        %s409 = scalar_lea.vmem %s8, %s408
        %p410 = scmp.lt.s32.totalorder %s23, 1
        %s411 = scalar_select %p410, %s23, 1
        %s412 = smul.addr %s411, 4
        %s413 = scalar_lea.vmem %s9, %s412
        %p414 = scmp.lt.s32.totalorder %s23, 1
        %s415 = scalar_select %p414, %s23, 1
        %s416 = smul.addr %s415, 4
        %s417 = scalar_lea.vmem %s10, %s416
        %v418 = vld [vmem:[%s399] sm:$0xff]
        %v419 = vld [vmem:[%s399 + $0x8] sm:$0xff]
        %v420 = vld [vmem:[#allocation3] sm:$0xff]
        %v421 = vld [vmem:[#allocation3 + $0x8] sm:$0xff]
        %v422 = vld [vmem:[#allocation3 + $0x10] sm:$0xff]
        %v423 = vld [vmem:[#allocation3 + $0x18] sm:$0xff]
        %v424 = vld [vmem:[#allocation3 + $0x20] sm:$0xff]
        %v425 = vld [vmem:[#allocation3 + $0x28] sm:$0xff]
        %v426 = vld [vmem:[#allocation3 + $0x30] sm:$0xff]
        %v427 = vld [vmem:[#allocation3 + $0x38] sm:$0xff]
        %v428 = vld [vmem:[#allocation3 + $0x40] sm:$0xff]
        %v429 = vld [vmem:[#allocation3 + $0x48] sm:$0xff]
        %v430 = vld [vmem:[#allocation3 + $0x50] sm:$0xff]
        %v431 = vld [vmem:[#allocation3 + $0x58] sm:$0xff]
        %v432 = vld [vmem:[#allocation3 + $0x60] sm:$0xff]
        %v433 = vld [vmem:[#allocation3 + $0x68] sm:$0xff]
        %v434 = vld [vmem:[#allocation3 + $0x70] sm:$0xff]
        %v435 = vld [vmem:[#allocation3 + $0x78] sm:$0xff]
        %v436 = vld [vmem:[#allocation3 + $0x80] sm:$0xff]
        %v437 = vld [vmem:[#allocation3 + $0x88] sm:$0xff]
        %v438 = vld [vmem:[#allocation3 + $0x90] sm:$0xff]
        %v439 = vld [vmem:[#allocation3 + $0x98] sm:$0xff]
        %v440 = vld [vmem:[#allocation3 + $0xa0] sm:$0xff]
        %v441 = vld [vmem:[#allocation3 + $0xa8] sm:$0xff]
        %v442 = vld [vmem:[#allocation3 + $0xb0] sm:$0xff]
        %v443 = vld [vmem:[#allocation3 + $0xb8] sm:$0xff]
        %v444 = vld [vmem:[#allocation3 + $0xc0] sm:$0xff]
        %v445 = vld [vmem:[#allocation3 + $0xc8] sm:$0xff]
        %v446 = vld [vmem:[#allocation3 + $0xd0] sm:$0xff]
        %v447 = vld [vmem:[#allocation3 + $0xd8] sm:$0xff]
        %v448 = vld [vmem:[#allocation3 + $0xe0] sm:$0xff]
        %v449 = vld [vmem:[#allocation3 + $0xe8] sm:$0xff]
        %v450 = vld [vmem:[#allocation3 + $0xf0] sm:$0xff]
        %v451 = vld [vmem:[#allocation3 + $0xf8] sm:$0xff]
        %v452 = vld [vmem:[#allocation3 + $0x100] sm:$0xff]
        %v453 = vld [vmem:[#allocation3 + $0x108] sm:$0xff]
        %v454 = vld [vmem:[#allocation3 + $0x110] sm:$0xff]
        %v455 = vld [vmem:[#allocation3 + $0x118] sm:$0xff]
        %v456 = vld [vmem:[#allocation3 + $0x120] sm:$0xff]
        %v457 = vld [vmem:[#allocation3 + $0x128] sm:$0xff]
        %v458 = vld [vmem:[#allocation3 + $0x130] sm:$0xff]
        %v459 = vld [vmem:[#allocation3 + $0x138] sm:$0xff]
        %v460 = vld [vmem:[#allocation3 + $0x140] sm:$0xff]
        %v461 = vld [vmem:[#allocation3 + $0x148] sm:$0xff]
        %v462 = vld [vmem:[#allocation3 + $0x150] sm:$0xff]
        %v463 = vld [vmem:[#allocation3 + $0x158] sm:$0xff]
        %v464 = vld [vmem:[#allocation3 + $0x160] sm:$0xff]
        %v465 = vld [vmem:[#allocation3 + $0x168] sm:$0xff]
        %v466 = vld [vmem:[#allocation3 + $0x170] sm:$0xff]
        %v467 = vld [vmem:[#allocation3 + $0x178] sm:$0xff]
        %v468 = vld [vmem:[#allocation3 + $0x180] sm:$0xff]
        %v469 = vld [vmem:[#allocation3 + $0x188] sm:$0xff]
        %v470 = vld [vmem:[#allocation3 + $0x190] sm:$0xff]
        %v471 = vld [vmem:[#allocation3 + $0x198] sm:$0xff]
        %v472 = vld [vmem:[#allocation3 + $0x1a0] sm:$0xff]
        %v473 = vld [vmem:[#allocation3 + $0x1a8] sm:$0xff]
        %v474 = vld [vmem:[#allocation3 + $0x1b0] sm:$0xff]
        %v475 = vld [vmem:[#allocation3 + $0x1b8] sm:$0xff]
        %v476 = vld [vmem:[#allocation3 + $0x1c0] sm:$0xff]
        %v477 = vld [vmem:[#allocation3 + $0x1c8] sm:$0xff]
        %v478 = vld [vmem:[#allocation3 + $0x1d0] sm:$0xff]
        %v479 = vld [vmem:[#allocation3 + $0x1d8] sm:$0xff]
        %v480 = vld [vmem:[#allocation3 + $0x1e0] sm:$0xff]
        %v481 = vld [vmem:[#allocation3 + $0x1e8] sm:$0xff]
        %v482 = vld [vmem:[#allocation3 + $0x1f0] sm:$0xff]
        %v483 = vld [vmem:[#allocation3 + $0x1f8] sm:$0xff]
        %v484 = vld [vmem:[#allocation3 + $0x200] sm:$0xff]
        %v485 = vld [vmem:[#allocation3 + $0x208] sm:$0xff]
        %v486 = vld [vmem:[#allocation3 + $0x210] sm:$0xff]
        %v487 = vld [vmem:[#allocation3 + $0x218] sm:$0xff]
        %v488 = vld [vmem:[#allocation3 + $0x220] sm:$0xff]
        %v489 = vld [vmem:[#allocation3 + $0x228] sm:$0xff]
        %v490 = vld [vmem:[#allocation3 + $0x230] sm:$0xff]
        %v491 = vld [vmem:[#allocation3 + $0x238] sm:$0xff]
        %v492 = vld [vmem:[#allocation3 + $0x240] sm:$0xff]
        %v493 = vld [vmem:[#allocation3 + $0x248] sm:$0xff]
        %v494 = vld [vmem:[#allocation3 + $0x250] sm:$0xff]
        %v495 = vld [vmem:[#allocation3 + $0x258] sm:$0xff]
        %v496 = vld [vmem:[#allocation3 + $0x260] sm:$0xff]
        %v497 = vld [vmem:[#allocation3 + $0x268] sm:$0xff]
        %v498 = vld [vmem:[#allocation3 + $0x270] sm:$0xff]
        %v499 = vld [vmem:[#allocation3 + $0x278] sm:$0xff]
        %v500 = vld [vmem:[#allocation3 + $0x280] sm:$0xff]
        %v501 = vld [vmem:[#allocation3 + $0x288] sm:$0xff]
        %v502 = vld [vmem:[#allocation3 + $0x290] sm:$0xff]
        %v503 = vld [vmem:[#allocation3 + $0x298] sm:$0xff]
        %v504 = vld [vmem:[#allocation3 + $0x2a0] sm:$0xff]
        %v505 = vld [vmem:[#allocation3 + $0x2a8] sm:$0xff]
        %v506 = vld [vmem:[#allocation3 + $0x2b0] sm:$0xff]
        %v507 = vld [vmem:[#allocation3 + $0x2b8] sm:$0xff]
        %v508 = vld [vmem:[#allocation3 + $0x2c0] sm:$0xff]
        %v509 = vld [vmem:[#allocation3 + $0x2c8] sm:$0xff]
        %v510 = vld [vmem:[#allocation3 + $0x2d0] sm:$0xff]
        %v511 = vld [vmem:[#allocation3 + $0x2d8] sm:$0xff]
        %v512 = vld [vmem:[#allocation3 + $0x2e0] sm:$0xff]
        %v513 = vld [vmem:[#allocation3 + $0x2e8] sm:$0xff]
        %v514 = vld [vmem:[#allocation3 + $0x2f0] sm:$0xff]
        %v515 = vld [vmem:[#allocation3 + $0x2f8] sm:$0xff]
        %v516 = vld [vmem:[#allocation3 + $0x300] sm:$0xff]
        %v517 = vld [vmem:[#allocation3 + $0x308] sm:$0xff]
        %v518 = vld [vmem:[#allocation3 + $0x310] sm:$0xff]
        %v519 = vld [vmem:[#allocation3 + $0x318] sm:$0xff]
        %v520 = vld [vmem:[#allocation3 + $0x320] sm:$0xff]
        %v521 = vld [vmem:[#allocation3 + $0x328] sm:$0xff]
        %v522 = vld [vmem:[#allocation3 + $0x330] sm:$0xff]
        %v523 = vld [vmem:[#allocation3 + $0x338] sm:$0xff]
        %v524 = vld [vmem:[#allocation3 + $0x340] sm:$0xff]
        %v525 = vld [vmem:[#allocation3 + $0x348] sm:$0xff]
        %v526 = vld [vmem:[#allocation3 + $0x350] sm:$0xff]
        %v527 = vld [vmem:[#allocation3 + $0x358] sm:$0xff]
        %v528 = vld [vmem:[#allocation3 + $0x360] sm:$0xff]
        %v529 = vld [vmem:[#allocation3 + $0x368] sm:$0xff]
        %v530 = vld [vmem:[#allocation3 + $0x370] sm:$0xff]
        %v531 = vld [vmem:[#allocation3 + $0x378] sm:$0xff]
        %v532 = vld [vmem:[#allocation3 + $0x380] sm:$0xff]
        %v533 = vld [vmem:[#allocation3 + $0x388] sm:$0xff]
        %v534 = vld [vmem:[#allocation3 + $0x390] sm:$0xff]
        %v535 = vld [vmem:[#allocation3 + $0x398] sm:$0xff]
        %v536 = vld [vmem:[#allocation3 + $0x3a0] sm:$0xff]
        %v537 = vld [vmem:[#allocation3 + $0x3a8] sm:$0xff]
        %v538 = vld [vmem:[#allocation3 + $0x3b0] sm:$0xff]
        %v539 = vld [vmem:[#allocation3 + $0x3b8] sm:$0xff]
        %v540 = vld [vmem:[#allocation3 + $0x3c0] sm:$0xff]
        %v541 = vld [vmem:[#allocation3 + $0x3c8] sm:$0xff]
        %v542 = vld [vmem:[#allocation3 + $0x3d0] sm:$0xff]
        %v543 = vld [vmem:[#allocation3 + $0x3d8] sm:$0xff]
        %v544 = vld [vmem:[#allocation3 + $0x3e0] sm:$0xff]
        %v545 = vld [vmem:[#allocation3 + $0x3e8] sm:$0xff]
        %v546 = vld [vmem:[#allocation3 + $0x3f0] sm:$0xff]
        %v547 = vld [vmem:[#allocation3 + $0x3f8] sm:$0xff]
        %v548 = vld [vmem:[#allocation3 + $0x400] sm:$0xff]
        %v549 = vld [vmem:[#allocation3 + $0x408] sm:$0xff]
        %v550 = vld [vmem:[#allocation3 + $0x410] sm:$0xff]
        %v551 = vld [vmem:[#allocation3 + $0x418] sm:$0xff]
        %v552 = vld [vmem:[#allocation3 + $0x420] sm:$0xff]
        %v553 = vld [vmem:[#allocation3 + $0x428] sm:$0xff]
        %v554 = vld [vmem:[#allocation3 + $0x430] sm:$0xff]
        %v555 = vld [vmem:[#allocation3 + $0x438] sm:$0xff]
        %v556 = vld [vmem:[#allocation3 + $0x440] sm:$0xff]
        %v557 = vld [vmem:[#allocation3 + $0x448] sm:$0xff]
        %v558 = vld [vmem:[#allocation3 + $0x450] sm:$0xff]
        %v559 = vld [vmem:[#allocation3 + $0x458] sm:$0xff]
        %v560 = vld [vmem:[#allocation3 + $0x460] sm:$0xff]
        %v561 = vld [vmem:[#allocation3 + $0x468] sm:$0xff]
        %v562 = vld [vmem:[#allocation3 + $0x470] sm:$0xff]
        %v563 = vld [vmem:[#allocation3 + $0x478] sm:$0xff]
        %v564 = vld [vmem:[#allocation3 + $0x480] sm:$0xff]
        %v565 = vld [vmem:[#allocation3 + $0x488] sm:$0xff]
        %v566 = vld [vmem:[#allocation3 + $0x490] sm:$0xff]
        %v567 = vld [vmem:[#allocation3 + $0x498] sm:$0xff]
        %v568 = vld [vmem:[#allocation3 + $0x4a0] sm:$0xff]
        %v569 = vld [vmem:[#allocation3 + $0x4a8] sm:$0xff]
        %v570 = vld [vmem:[#allocation3 + $0x4b0] sm:$0xff]
        %v571 = vld [vmem:[#allocation3 + $0x4b8] sm:$0xff]
        %v572 = vld [vmem:[#allocation3 + $0x4c0] sm:$0xff]
        %v573 = vld [vmem:[#allocation3 + $0x4c8] sm:$0xff]
        %v574 = vld [vmem:[#allocation3 + $0x4d0] sm:$0xff]
        %v575 = vld [vmem:[#allocation3 + $0x4d8] sm:$0xff]
        %v576 = vld [vmem:[#allocation3 + $0x4e0] sm:$0xff]
        %v577 = vld [vmem:[#allocation3 + $0x4e8] sm:$0xff]
        %v578 = vld [vmem:[#allocation3 + $0x4f0] sm:$0xff]
        %v579 = vld [vmem:[#allocation3 + $0x4f8] sm:$0xff]
        %v580 = vld [vmem:[#allocation3 + $0x500] sm:$0xff]
        %v581 = vld [vmem:[#allocation3 + $0x508] sm:$0xff]
        %v582 = vld [vmem:[#allocation3 + $0x510] sm:$0xff]
        %v583 = vld [vmem:[#allocation3 + $0x518] sm:$0xff]
        %v584 = vld [vmem:[#allocation3 + $0x520] sm:$0xff]
        %v585 = vld [vmem:[#allocation3 + $0x528] sm:$0xff]
        %v586 = vld [vmem:[#allocation3 + $0x530] sm:$0xff]
        %v587 = vld [vmem:[#allocation3 + $0x538] sm:$0xff]
        %v588 = vld [vmem:[#allocation3 + $0x540] sm:$0xff]
        %v589 = vld [vmem:[#allocation3 + $0x548] sm:$0xff]
        %v590 = vld [vmem:[#allocation3 + $0x550] sm:$0xff]
        %v591 = vld [vmem:[#allocation3 + $0x558] sm:$0xff]
        %v592 = vld [vmem:[#allocation3 + $0x560] sm:$0xff]
        %v593 = vld [vmem:[#allocation3 + $0x568] sm:$0xff]
        %v594 = vld [vmem:[#allocation3 + $0x570] sm:$0xff]
        %v595 = vld [vmem:[#allocation3 + $0x578] sm:$0xff]
        %v596 = vld [vmem:[#allocation3 + $0x580] sm:$0xff]
        %v597 = vld [vmem:[#allocation3 + $0x588] sm:$0xff]
        %v598 = vld [vmem:[#allocation3 + $0x590] sm:$0xff]
        %v599 = vld [vmem:[#allocation3 + $0x598] sm:$0xff]
        %v600 = vld [vmem:[#allocation3 + $0x5a0] sm:$0xff]
        %v601 = vld [vmem:[#allocation3 + $0x5a8] sm:$0xff]
        %v602 = vld [vmem:[#allocation3 + $0x5b0] sm:$0xff]
        %v603 = vld [vmem:[#allocation3 + $0x5b8] sm:$0xff]
        %v604 = vld [vmem:[#allocation3 + $0x5c0] sm:$0xff]
        %v605 = vld [vmem:[#allocation3 + $0x5c8] sm:$0xff]
        %v606 = vld [vmem:[#allocation3 + $0x5d0] sm:$0xff]
        %v607 = vld [vmem:[#allocation3 + $0x5d8] sm:$0xff]
        %v608 = vld [vmem:[#allocation3 + $0x5e0] sm:$0xff]
        %v609 = vld [vmem:[#allocation3 + $0x5e8] sm:$0xff]
        %v610 = vld [vmem:[#allocation3 + $0x5f0] sm:$0xff]
        %v611 = vld [vmem:[#allocation3 + $0x5f8] sm:$0xff]
        %v612 = vld [vmem:[#allocation3 + $0x600] sm:$0xff]
        %v613 = vld [vmem:[#allocation3 + $0x608] sm:$0xff]
        %v614 = vld [vmem:[#allocation3 + $0x610] sm:$0xff]
        %v615 = vld [vmem:[#allocation3 + $0x618] sm:$0xff]
        %v616 = vld [vmem:[#allocation3 + $0x620] sm:$0xff]
        %v617 = vld [vmem:[#allocation3 + $0x628] sm:$0xff]
        %v618 = vld [vmem:[#allocation3 + $0x630] sm:$0xff]
        %v619 = vld [vmem:[#allocation3 + $0x638] sm:$0xff]
        %v620 = vld [vmem:[#allocation3 + $0x640] sm:$0xff]
        %v621 = vld [vmem:[#allocation3 + $0x648] sm:$0xff]
        %v622 = vld [vmem:[#allocation3 + $0x650] sm:$0xff]
        %v623 = vld [vmem:[#allocation3 + $0x658] sm:$0xff]
        %v624 = vld [vmem:[#allocation3 + $0x660] sm:$0xff]
        %v625 = vld [vmem:[#allocation3 + $0x668] sm:$0xff]
        %v626 = vld [vmem:[#allocation3 + $0x670] sm:$0xff]
        %v627 = vld [vmem:[#allocation3 + $0x678] sm:$0xff]
        %v628 = vld [vmem:[#allocation3 + $0x680] sm:$0xff]
        %v629 = vld [vmem:[#allocation3 + $0x688] sm:$0xff]
        %v630 = vld [vmem:[#allocation3 + $0x690] sm:$0xff]
        %v631 = vld [vmem:[#allocation3 + $0x698] sm:$0xff]
        %v632 = vld [vmem:[#allocation3 + $0x6a0] sm:$0xff]
        %v633 = vld [vmem:[#allocation3 + $0x6a8] sm:$0xff]
        %v634 = vld [vmem:[#allocation3 + $0x6b0] sm:$0xff]
        %v635 = vld [vmem:[#allocation3 + $0x6b8] sm:$0xff]
        %v636 = vld [vmem:[#allocation3 + $0x6c0] sm:$0xff]
        %v637 = vld [vmem:[#allocation3 + $0x6c8] sm:$0xff]
        %v638 = vld [vmem:[#allocation3 + $0x6d0] sm:$0xff]
        %v639 = vld [vmem:[#allocation3 + $0x6d8] sm:$0xff]
        %v640 = vld [vmem:[#allocation3 + $0x6e0] sm:$0xff]
        %v641 = vld [vmem:[#allocation3 + $0x6e8] sm:$0xff]
        %v642 = vld [vmem:[#allocation3 + $0x6f0] sm:$0xff]
        %v643 = vld [vmem:[#allocation3 + $0x6f8] sm:$0xff]
        %v644 = vld [vmem:[#allocation3 + $0x700] sm:$0xff]
        %v645 = vld [vmem:[#allocation3 + $0x708] sm:$0xff]
        %v646 = vld [vmem:[#allocation3 + $0x710] sm:$0xff]
        %v647 = vld [vmem:[#allocation3 + $0x718] sm:$0xff]
        %v648 = vld [vmem:[#allocation3 + $0x720] sm:$0xff]
        %v649 = vld [vmem:[#allocation3 + $0x728] sm:$0xff]
        %v650 = vld [vmem:[#allocation3 + $0x730] sm:$0xff]
        %v651 = vld [vmem:[#allocation3 + $0x738] sm:$0xff]
        %v652 = vld [vmem:[#allocation3 + $0x740] sm:$0xff]
        %v653 = vld [vmem:[#allocation3 + $0x748] sm:$0xff]
        %v654 = vld [vmem:[#allocation3 + $0x750] sm:$0xff]
        %v655 = vld [vmem:[#allocation3 + $0x758] sm:$0xff]
        %v656 = vld [vmem:[#allocation3 + $0x760] sm:$0xff]
        %v657 = vld [vmem:[#allocation3 + $0x768] sm:$0xff]
        %v658 = vld [vmem:[#allocation3 + $0x770] sm:$0xff]
        %v659 = vld [vmem:[#allocation3 + $0x778] sm:$0xff]
        %v660 = vld [vmem:[#allocation3 + $0x780] sm:$0xff]
        %v661 = vld [vmem:[#allocation3 + $0x788] sm:$0xff]
        %v662 = vld [vmem:[#allocation3 + $0x790] sm:$0xff]
        %v663 = vld [vmem:[#allocation3 + $0x798] sm:$0xff]
        %v664 = vld [vmem:[#allocation3 + $0x7a0] sm:$0xff]
        %v665 = vld [vmem:[#allocation3 + $0x7a8] sm:$0xff]
        %v666 = vld [vmem:[#allocation3 + $0x7b0] sm:$0xff]
        %v667 = vld [vmem:[#allocation3 + $0x7b8] sm:$0xff]
        %v668 = vld [vmem:[#allocation3 + $0x7c0] sm:$0xff]
        %v669 = vld [vmem:[#allocation3 + $0x7c8] sm:$0xff]
        %v670 = vld [vmem:[#allocation3 + $0x7d0] sm:$0xff]
        %v671 = vld [vmem:[#allocation3 + $0x7d8] sm:$0xff]
        %v672 = vld [vmem:[#allocation3 + $0x7e0] sm:$0xff]
        %v673 = vld [vmem:[#allocation3 + $0x7e8] sm:$0xff]
        %v674 = vld [vmem:[#allocation3 + $0x7f0] sm:$0xff]
        %v675 = vld [vmem:[#allocation3 + $0x7f8] sm:$0xff]
        %676 = vmatpush.msra.mxu0 %v540
        %677 = vmatpush.msra.mxu0 %v532
        %678 = vmatpush.msra.mxu0 %v524
        %679 = vmatpush.msra.mxu0 %v516
        %680 = vmatpush.msra.mxu0 %v508
        %681 = vmatpush.msra.mxu0 %v500
        %682 = vmatpush.msra.mxu0 %v492
        %683 = vmatpush.msra.mxu0 %v484
        %684 = vmatpush.msra.mxu0 %v476
        %685 = vmatpush.msra.mxu0 %v468
        %686 = vmatpush.msra.mxu0 %v460
        %687 = vmatpush.msra.mxu0 %v452
        %688 = vmatpush.msra.mxu0 %v444
        %689 = vmatpush.msra.mxu0 %v436
        %690 = vmatpush.msra.mxu0 %v428
        %691 = vmatpush.msra.mxu0 %v420
        %692 = vmatmul.f32.gmra.mxu0 %v418
        %v693 = vpop.f32.mrf.mxu0
        %v694 = vadd.f32 0.0, %v693
        %695 = vdwg.mxu0
        %696 = vmatpush.msra.mxu0 %v668
        %697 = vmatpush.msra.mxu0 %v660
        %698 = vmatpush.msra.mxu0 %v652
        %699 = vmatpush.msra.mxu0 %v644
        %700 = vmatpush.msra.mxu0 %v636
        %701 = vmatpush.msra.mxu0 %v628
        %702 = vmatpush.msra.mxu0 %v620
        %703 = vmatpush.msra.mxu0 %v612
        %704 = vmatpush.msra.mxu0 %v604
        %705 = vmatpush.msra.mxu0 %v596
        %706 = vmatpush.msra.mxu0 %v588
        %707 = vmatpush.msra.mxu0 %v580
        %708 = vmatpush.msra.mxu0 %v572
        %709 = vmatpush.msra.mxu0 %v564
        %710 = vmatpush.msra.mxu0 %v556
        %711 = vmatpush.msra.mxu0 %v548
        %712 = vmatmul.f32.gmra.mxu0 %v419
        %v713 = vpop.f32.mrf.mxu0
        %v714 = vadd.f32 %v694, %v713
        %715 = vdwg.mxu0
        %716 = vmatpush.msra.mxu0 %v541
        %717 = vmatpush.msra.mxu0 %v533
        %718 = vmatpush.msra.mxu0 %v525
        %719 = vmatpush.msra.mxu0 %v517
        %720 = vmatpush.msra.mxu0 %v509
        %721 = vmatpush.msra.mxu0 %v501
        %722 = vmatpush.msra.mxu0 %v493
        %723 = vmatpush.msra.mxu0 %v485
        %724 = vmatpush.msra.mxu0 %v477
        %725 = vmatpush.msra.mxu0 %v469
        %726 = vmatpush.msra.mxu0 %v461
        %727 = vmatpush.msra.mxu0 %v453
        %728 = vmatpush.msra.mxu0 %v445
        %729 = vmatpush.msra.mxu0 %v437
        %730 = vmatpush.msra.mxu0 %v429
        %731 = vmatpush.msra.mxu0 %v421
        %732 = vmatmul.f32.gmra.mxu0 %v418
        %v733 = vpop.f32.mrf.mxu0
        %v734 = vadd.f32 0.0, %v733
        %735 = vdwg.mxu0
        %736 = vmatpush.msra.mxu0 %v669
        %737 = vmatpush.msra.mxu0 %v661
        %738 = vmatpush.msra.mxu0 %v653
        %739 = vmatpush.msra.mxu0 %v645
        %740 = vmatpush.msra.mxu0 %v637
        %741 = vmatpush.msra.mxu0 %v629
        %742 = vmatpush.msra.mxu0 %v621
        %743 = vmatpush.msra.mxu0 %v613
        %744 = vmatpush.msra.mxu0 %v605
        %745 = vmatpush.msra.mxu0 %v597
        %746 = vmatpush.msra.mxu0 %v589
        %747 = vmatpush.msra.mxu0 %v581
        %748 = vmatpush.msra.mxu0 %v573
        %749 = vmatpush.msra.mxu0 %v565
        %750 = vmatpush.msra.mxu0 %v557
        %751 = vmatpush.msra.mxu0 %v549
        %752 = vmatmul.f32.gmra.mxu0 %v419
        %v753 = vpop.f32.mrf.mxu0
        %v754 = vadd.f32 %v734, %v753
        %755 = vdwg.mxu0
        %756 = vmatpush.msra.mxu0 %v542
        %757 = vmatpush.msra.mxu0 %v534
        %758 = vmatpush.msra.mxu0 %v526
        %759 = vmatpush.msra.mxu0 %v518
        %760 = vmatpush.msra.mxu0 %v510
        %761 = vmatpush.msra.mxu0 %v502
        %762 = vmatpush.msra.mxu0 %v494
        %763 = vmatpush.msra.mxu0 %v486
        %764 = vmatpush.msra.mxu0 %v478
        %765 = vmatpush.msra.mxu0 %v470
        %766 = vmatpush.msra.mxu0 %v462
        %767 = vmatpush.msra.mxu0 %v454
        %768 = vmatpush.msra.mxu0 %v446
        %769 = vmatpush.msra.mxu0 %v438
        %770 = vmatpush.msra.mxu0 %v430
        %771 = vmatpush.msra.mxu0 %v422
        %772 = vmatmul.f32.gmra.mxu0 %v418
        %v773 = vpop.f32.mrf.mxu0
        %v774 = vadd.f32 0.0, %v773
        %775 = vdwg.mxu0
        %776 = vmatpush.msra.mxu0 %v670
        %777 = vmatpush.msra.mxu0 %v662
        %778 = vmatpush.msra.mxu0 %v654
        %779 = vmatpush.msra.mxu0 %v646
        %780 = vmatpush.msra.mxu0 %v638
        %781 = vmatpush.msra.mxu0 %v630
        %782 = vmatpush.msra.mxu0 %v622
        %783 = vmatpush.msra.mxu0 %v614
        %784 = vmatpush.msra.mxu0 %v606
        %785 = vmatpush.msra.mxu0 %v598
        %786 = vmatpush.msra.mxu0 %v590
        %787 = vmatpush.msra.mxu0 %v582
        %788 = vmatpush.msra.mxu0 %v574
        %789 = vmatpush.msra.mxu0 %v566
        %790 = vmatpush.msra.mxu0 %v558
        %791 = vmatpush.msra.mxu0 %v550
        %792 = vmatmul.f32.gmra.mxu0 %v419
        %v793 = vpop.f32.mrf.mxu0
        %v794 = vadd.f32 %v774, %v793
        %795 = vdwg.mxu0
        %796 = vmatpush.msra.mxu0 %v543
        %797 = vmatpush.msra.mxu0 %v535
        %798 = vmatpush.msra.mxu0 %v527
        %799 = vmatpush.msra.mxu0 %v519
        %800 = vmatpush.msra.mxu0 %v511
        %801 = vmatpush.msra.mxu0 %v503
        %802 = vmatpush.msra.mxu0 %v495
        %803 = vmatpush.msra.mxu0 %v487
        %804 = vmatpush.msra.mxu0 %v479
        %805 = vmatpush.msra.mxu0 %v471
        %806 = vmatpush.msra.mxu0 %v463
        %807 = vmatpush.msra.mxu0 %v455
        %808 = vmatpush.msra.mxu0 %v447
        %809 = vmatpush.msra.mxu0 %v439
        %810 = vmatpush.msra.mxu0 %v431
        %811 = vmatpush.msra.mxu0 %v423
        %812 = vmatmul.f32.gmra.mxu0 %v418
        %v813 = vpop.f32.mrf.mxu0
        %v814 = vadd.f32 0.0, %v813
        %815 = vdwg.mxu0
        %816 = vmatpush.msra.mxu0 %v671
        %817 = vmatpush.msra.mxu0 %v663
        %818 = vmatpush.msra.mxu0 %v655
        %819 = vmatpush.msra.mxu0 %v647
        %820 = vmatpush.msra.mxu0 %v639
        %821 = vmatpush.msra.mxu0 %v631
        %822 = vmatpush.msra.mxu0 %v623
        %823 = vmatpush.msra.mxu0 %v615
        %824 = vmatpush.msra.mxu0 %v607
        %825 = vmatpush.msra.mxu0 %v599
        %826 = vmatpush.msra.mxu0 %v591
        %827 = vmatpush.msra.mxu0 %v583
        %828 = vmatpush.msra.mxu0 %v575
        %829 = vmatpush.msra.mxu0 %v567
        %830 = vmatpush.msra.mxu0 %v559
        %831 = vmatpush.msra.mxu0 %v551
        %832 = vmatmul.f32.gmra.mxu0 %v419
        %v833 = vpop.f32.mrf.mxu0
        %v834 = vadd.f32 %v814, %v833
        %835 = vdwg.mxu0
        %836 = vmatpush.msra.mxu0 %v544
        %837 = vmatpush.msra.mxu0 %v536
        %838 = vmatpush.msra.mxu0 %v528
        %839 = vmatpush.msra.mxu0 %v520
        %840 = vmatpush.msra.mxu0 %v512
        %841 = vmatpush.msra.mxu0 %v504
        %842 = vmatpush.msra.mxu0 %v496
        %843 = vmatpush.msra.mxu0 %v488
        %844 = vmatpush.msra.mxu0 %v480
        %845 = vmatpush.msra.mxu0 %v472
        %846 = vmatpush.msra.mxu0 %v464
        %847 = vmatpush.msra.mxu0 %v456
        %848 = vmatpush.msra.mxu0 %v448
        %849 = vmatpush.msra.mxu0 %v440
        %850 = vmatpush.msra.mxu0 %v432
        %851 = vmatpush.msra.mxu0 %v424
        %852 = vmatmul.f32.gmra.mxu0 %v418
        %v853 = vpop.f32.mrf.mxu0
        %v854 = vadd.f32 0.0, %v853
        %855 = vdwg.mxu0
        %856 = vmatpush.msra.mxu0 %v672
        %857 = vmatpush.msra.mxu0 %v664
        %858 = vmatpush.msra.mxu0 %v656
        %859 = vmatpush.msra.mxu0 %v648
        %860 = vmatpush.msra.mxu0 %v640
        %861 = vmatpush.msra.mxu0 %v632
        %862 = vmatpush.msra.mxu0 %v624
        %863 = vmatpush.msra.mxu0 %v616
        %864 = vmatpush.msra.mxu0 %v608
        %865 = vmatpush.msra.mxu0 %v600
        %866 = vmatpush.msra.mxu0 %v592
        %867 = vmatpush.msra.mxu0 %v584
        %868 = vmatpush.msra.mxu0 %v576
        %869 = vmatpush.msra.mxu0 %v568
        %870 = vmatpush.msra.mxu0 %v560
        %871 = vmatpush.msra.mxu0 %v552
        %872 = vmatmul.f32.gmra.mxu0 %v419
        %v873 = vpop.f32.mrf.mxu0
        %v874 = vadd.f32 %v854, %v873
        %875 = vdwg.mxu0
        %876 = vmatpush.msra.mxu0 %v545
        %877 = vmatpush.msra.mxu0 %v537
        %878 = vmatpush.msra.mxu0 %v529
        %879 = vmatpush.msra.mxu0 %v521
        %880 = vmatpush.msra.mxu0 %v513
        %881 = vmatpush.msra.mxu0 %v505
        %882 = vmatpush.msra.mxu0 %v497
        %883 = vmatpush.msra.mxu0 %v489
        %884 = vmatpush.msra.mxu0 %v481
        %885 = vmatpush.msra.mxu0 %v473
        %886 = vmatpush.msra.mxu0 %v465
        %887 = vmatpush.msra.mxu0 %v457
        %888 = vmatpush.msra.mxu0 %v449
        %889 = vmatpush.msra.mxu0 %v441
        %890 = vmatpush.msra.mxu0 %v433
        %891 = vmatpush.msra.mxu0 %v425
        %892 = vmatmul.f32.gmra.mxu0 %v418
        %v893 = vpop.f32.mrf.mxu0
        %v894 = vadd.f32 0.0, %v893
        %895 = vdwg.mxu0
        %896 = vmatpush.msra.mxu0 %v673
        %897 = vmatpush.msra.mxu0 %v665
        %898 = vmatpush.msra.mxu0 %v657
        %899 = vmatpush.msra.mxu0 %v649
        %900 = vmatpush.msra.mxu0 %v641
        %901 = vmatpush.msra.mxu0 %v633
        %902 = vmatpush.msra.mxu0 %v625
        %903 = vmatpush.msra.mxu0 %v617
        %904 = vmatpush.msra.mxu0 %v609
        %905 = vmatpush.msra.mxu0 %v601
        %906 = vmatpush.msra.mxu0 %v593
        %907 = vmatpush.msra.mxu0 %v585
        %908 = vmatpush.msra.mxu0 %v577
        %909 = vmatpush.msra.mxu0 %v569
        %910 = vmatpush.msra.mxu0 %v561
        %911 = vmatpush.msra.mxu0 %v553
        %912 = vmatmul.f32.gmra.mxu0 %v419
        %v913 = vpop.f32.mrf.mxu0
        %v914 = vadd.f32 %v894, %v913
        %915 = vdwg.mxu0
        %916 = vmatpush.msra.mxu0 %v546
        %917 = vmatpush.msra.mxu0 %v538
        %918 = vmatpush.msra.mxu0 %v530
        %919 = vmatpush.msra.mxu0 %v522
        %920 = vmatpush.msra.mxu0 %v514
        %921 = vmatpush.msra.mxu0 %v506
        %922 = vmatpush.msra.mxu0 %v498
        %923 = vmatpush.msra.mxu0 %v490
        %924 = vmatpush.msra.mxu0 %v482
        %925 = vmatpush.msra.mxu0 %v474
        %926 = vmatpush.msra.mxu0 %v466
        %927 = vmatpush.msra.mxu0 %v458
        %928 = vmatpush.msra.mxu0 %v450
        %929 = vmatpush.msra.mxu0 %v442
        %930 = vmatpush.msra.mxu0 %v434
        %931 = vmatpush.msra.mxu0 %v426
        %932 = vmatmul.f32.gmra.mxu0 %v418
        %v933 = vpop.f32.mrf.mxu0
        %v934 = vadd.f32 0.0, %v933
        %935 = vdwg.mxu0
        %936 = vmatpush.msra.mxu0 %v674
        %937 = vmatpush.msra.mxu0 %v666
        %938 = vmatpush.msra.mxu0 %v658
        %939 = vmatpush.msra.mxu0 %v650
        %940 = vmatpush.msra.mxu0 %v642
        %941 = vmatpush.msra.mxu0 %v634
        %942 = vmatpush.msra.mxu0 %v626
        %943 = vmatpush.msra.mxu0 %v618
        %944 = vmatpush.msra.mxu0 %v610
        %945 = vmatpush.msra.mxu0 %v602
        %946 = vmatpush.msra.mxu0 %v594
        %947 = vmatpush.msra.mxu0 %v586
        %948 = vmatpush.msra.mxu0 %v578
        %949 = vmatpush.msra.mxu0 %v570
        %950 = vmatpush.msra.mxu0 %v562
        %951 = vmatpush.msra.mxu0 %v554
        %952 = vmatmul.f32.gmra.mxu0 %v419
        %v953 = vpop.f32.mrf.mxu0
        %v954 = vadd.f32 %v934, %v953
        %955 = vdwg.mxu0
        %956 = vmatpush.msra.mxu0 %v547
        %957 = vmatpush.msra.mxu0 %v539
        %958 = vmatpush.msra.mxu0 %v531
        %959 = vmatpush.msra.mxu0 %v523
        %960 = vmatpush.msra.mxu0 %v515
        %961 = vmatpush.msra.mxu0 %v507
        %962 = vmatpush.msra.mxu0 %v499
        %963 = vmatpush.msra.mxu0 %v491
        %964 = vmatpush.msra.mxu0 %v483
        %965 = vmatpush.msra.mxu0 %v475
        %966 = vmatpush.msra.mxu0 %v467
        %967 = vmatpush.msra.mxu0 %v459
        %968 = vmatpush.msra.mxu0 %v451
        %969 = vmatpush.msra.mxu0 %v443
        %970 = vmatpush.msra.mxu0 %v435
        %971 = vmatpush.msra.mxu0 %v427
        %972 = vmatmul.f32.gmra.mxu0 %v418
        %v973 = vpop.f32.mrf.mxu0
        %v974 = vadd.f32 0.0, %v973
        %975 = vdwg.mxu0
        %976 = vmatpush.msra.mxu0 %v675
        %977 = vmatpush.msra.mxu0 %v667
        %978 = vmatpush.msra.mxu0 %v659
        %979 = vmatpush.msra.mxu0 %v651
        %980 = vmatpush.msra.mxu0 %v643
        %981 = vmatpush.msra.mxu0 %v635
        %982 = vmatpush.msra.mxu0 %v627
        %983 = vmatpush.msra.mxu0 %v619
        %984 = vmatpush.msra.mxu0 %v611
        %985 = vmatpush.msra.mxu0 %v603
        %986 = vmatpush.msra.mxu0 %v595
        %987 = vmatpush.msra.mxu0 %v587
        %988 = vmatpush.msra.mxu0 %v579
        %989 = vmatpush.msra.mxu0 %v571
        %990 = vmatpush.msra.mxu0 %v563
        %991 = vmatpush.msra.mxu0 %v555
        %992 = vmatmul.f32.gmra.mxu0 %v419
        %v993 = vpop.f32.mrf.mxu0
        %v994 = vadd.f32 %v974, %v993
        %995 = vdwg.mxu0
        %v996 = vld [vmem:[%s3] sm:$0xff]
        %v997 = vld [vmem:[%s3 + $0x8] sm:$0xff]
        %v998 = vld [vmem:[%s3 + $0x10] sm:$0xff]
        %v999 = vld [vmem:[%s3 + $0x18] sm:$0xff]
        %v1000 = vld [vmem:[%s6] sm:$0xf]
        %v1001 = vld [vmem:[%s5] sm:$0xf]
        %1003 = vset.pattern.permute.xlu0 0
        %1004 = vperm.xlu0 %1003, %v1000
        %v1005 = vpop.permute.xlu0 %1004
        %vm1007 = vcmask 64512
        %v1009 = vsel %vm1007, %v1001, 0
        %1011 = vmatpush.msra.mxu0 0.0
        %1012 = vmatpush.msra.mxu0 0.0
        %1013 = vmatpush.msra.mxu0 0.0
        %1014 = vmatpush.msra.mxu0 0.0
        %1015 = vmatpush.msra.mxu0 0.0
        %1016 = vmatpush.msra.mxu0 0.0
        %1017 = vmatpush.msra.mxu0 0.0
        %1018 = vmatpush.msra.mxu0 0.0
        %1019 = vmatpush.msra.mxu0 0.0
        %1020 = vmatpush.msra.mxu0 0.0
        %1021 = vmatpush.msra.mxu0 0.0
        %1022 = vmatpush.msra.mxu0 0.0
        %1023 = vmatpush.msra.mxu0 0.0
        %1024 = vmatpush.msra.mxu0 0.0
        %1025 = vmatpush.msra.mxu0 0.0
        %1026 = vmatpush.msra.mxu0 %v714
        %1027 = vmatmul.f32.gmra.mxu0 %v1009
        %v1028 = vpop.f32.mrf.mxu0
        %v1029 = vadd.f32 %v1005, %v1028
        %1030 = vdwg.mxu0
        %1031 = vmatpush.msra.mxu0 0.0
        %1032 = vmatpush.msra.mxu0 0.0
        %1033 = vmatpush.msra.mxu0 0.0
        %1034 = vmatpush.msra.mxu0 0.0
        %1035 = vmatpush.msra.mxu0 0.0
        %1036 = vmatpush.msra.mxu0 0.0
        %1037 = vmatpush.msra.mxu0 0.0
        %1038 = vmatpush.msra.mxu0 0.0
        %1039 = vmatpush.msra.mxu0 0.0
        %1040 = vmatpush.msra.mxu0 0.0
        %1041 = vmatpush.msra.mxu0 0.0
        %1042 = vmatpush.msra.mxu0 0.0
        %1043 = vmatpush.msra.mxu0 0.0
        %1044 = vmatpush.msra.mxu0 0.0
        %1045 = vmatpush.msra.mxu0 0.0
        %1046 = vmatpush.msra.mxu0 %v754
        %1047 = vmatmul.f32.gmra.mxu0 %v1009
        %v1048 = vpop.f32.mrf.mxu0
        %v1049 = vadd.f32 %v1005, %v1048
        %1050 = vdwg.mxu0
        %1051 = vmatpush.msra.mxu0 0.0
        %1052 = vmatpush.msra.mxu0 0.0
        %1053 = vmatpush.msra.mxu0 0.0
        %1054 = vmatpush.msra.mxu0 0.0
        %1055 = vmatpush.msra.mxu0 0.0
        %1056 = vmatpush.msra.mxu0 0.0
        %1057 = vmatpush.msra.mxu0 0.0
        %1058 = vmatpush.msra.mxu0 0.0
        %1059 = vmatpush.msra.mxu0 0.0
        %1060 = vmatpush.msra.mxu0 0.0
        %1061 = vmatpush.msra.mxu0 0.0
        %1062 = vmatpush.msra.mxu0 0.0
        %1063 = vmatpush.msra.mxu0 0.0
        %1064 = vmatpush.msra.mxu0 0.0
        %1065 = vmatpush.msra.mxu0 0.0
        %1066 = vmatpush.msra.mxu0 %v794
        %1067 = vmatmul.f32.gmra.mxu0 %v1009
        %v1068 = vpop.f32.mrf.mxu0
        %v1069 = vadd.f32 %v1005, %v1068
        %1070 = vdwg.mxu0
        %1071 = vmatpush.msra.mxu0 0.0
        %1072 = vmatpush.msra.mxu0 0.0
        %1073 = vmatpush.msra.mxu0 0.0
        %1074 = vmatpush.msra.mxu0 0.0
        %1075 = vmatpush.msra.mxu0 0.0
        %1076 = vmatpush.msra.mxu0 0.0
        %1077 = vmatpush.msra.mxu0 0.0
        %1078 = vmatpush.msra.mxu0 0.0
        %1079 = vmatpush.msra.mxu0 0.0
        %1080 = vmatpush.msra.mxu0 0.0
        %1081 = vmatpush.msra.mxu0 0.0
        %1082 = vmatpush.msra.mxu0 0.0
        %1083 = vmatpush.msra.mxu0 0.0
        %1084 = vmatpush.msra.mxu0 0.0
        %1085 = vmatpush.msra.mxu0 0.0
        %1086 = vmatpush.msra.mxu0 %v834
        %1087 = vmatmul.f32.gmra.mxu0 %v1009
        %v1088 = vpop.f32.mrf.mxu0
        %v1089 = vadd.f32 %v1005, %v1088
        %1090 = vdwg.mxu0
        %1091 = vmatpush.msra.mxu0 0.0
        %1092 = vmatpush.msra.mxu0 0.0
        %1093 = vmatpush.msra.mxu0 0.0
        %1094 = vmatpush.msra.mxu0 0.0
        %1095 = vmatpush.msra.mxu0 0.0
        %1096 = vmatpush.msra.mxu0 0.0
        %1097 = vmatpush.msra.mxu0 0.0
        %1098 = vmatpush.msra.mxu0 0.0
        %1099 = vmatpush.msra.mxu0 0.0
        %1100 = vmatpush.msra.mxu0 0.0
        %1101 = vmatpush.msra.mxu0 0.0
        %1102 = vmatpush.msra.mxu0 0.0
        %1103 = vmatpush.msra.mxu0 0.0
        %1104 = vmatpush.msra.mxu0 0.0
        %1105 = vmatpush.msra.mxu0 0.0
        %1106 = vmatpush.msra.mxu0 %v874
        %1107 = vmatmul.f32.gmra.mxu0 %v1009
        %v1108 = vpop.f32.mrf.mxu0
        %v1109 = vadd.f32 %v1005, %v1108
        %1110 = vdwg.mxu0
        %1111 = vmatpush.msra.mxu0 0.0
        %1112 = vmatpush.msra.mxu0 0.0
        %1113 = vmatpush.msra.mxu0 0.0
        %1114 = vmatpush.msra.mxu0 0.0
        %1115 = vmatpush.msra.mxu0 0.0
        %1116 = vmatpush.msra.mxu0 0.0
        %1117 = vmatpush.msra.mxu0 0.0
        %1118 = vmatpush.msra.mxu0 0.0
        %1119 = vmatpush.msra.mxu0 0.0
        %1120 = vmatpush.msra.mxu0 0.0
        %1121 = vmatpush.msra.mxu0 0.0
        %1122 = vmatpush.msra.mxu0 0.0
        %1123 = vmatpush.msra.mxu0 0.0
        %1124 = vmatpush.msra.mxu0 0.0
        %1125 = vmatpush.msra.mxu0 0.0
        %1126 = vmatpush.msra.mxu0 %v914
        %1127 = vmatmul.f32.gmra.mxu0 %v1009
        %v1128 = vpop.f32.mrf.mxu0
        %v1129 = vadd.f32 %v1005, %v1128
        %1130 = vdwg.mxu0
        %1131 = vmatpush.msra.mxu0 0.0
        %1132 = vmatpush.msra.mxu0 0.0
        %1133 = vmatpush.msra.mxu0 0.0
        %1134 = vmatpush.msra.mxu0 0.0
        %1135 = vmatpush.msra.mxu0 0.0
        %1136 = vmatpush.msra.mxu0 0.0
        %1137 = vmatpush.msra.mxu0 0.0
        %1138 = vmatpush.msra.mxu0 0.0
        %1139 = vmatpush.msra.mxu0 0.0
        %1140 = vmatpush.msra.mxu0 0.0
        %1141 = vmatpush.msra.mxu0 0.0
        %1142 = vmatpush.msra.mxu0 0.0
        %1143 = vmatpush.msra.mxu0 0.0
        %1144 = vmatpush.msra.mxu0 0.0
        %1145 = vmatpush.msra.mxu0 0.0
        %1146 = vmatpush.msra.mxu0 %v954
        %1147 = vmatmul.f32.gmra.mxu0 %v1009
        %v1148 = vpop.f32.mrf.mxu0
        %v1149 = vadd.f32 %v1005, %v1148
        %1150 = vdwg.mxu0
        %1151 = vmatpush.msra.mxu0 0.0
        %1152 = vmatpush.msra.mxu0 0.0
        %1153 = vmatpush.msra.mxu0 0.0
        %1154 = vmatpush.msra.mxu0 0.0
        %1155 = vmatpush.msra.mxu0 0.0
        %1156 = vmatpush.msra.mxu0 0.0
        %1157 = vmatpush.msra.mxu0 0.0
        %1158 = vmatpush.msra.mxu0 0.0
        %1159 = vmatpush.msra.mxu0 0.0
        %1160 = vmatpush.msra.mxu0 0.0
        %1161 = vmatpush.msra.mxu0 0.0
        %1162 = vmatpush.msra.mxu0 0.0
        %1163 = vmatpush.msra.mxu0 0.0
        %1164 = vmatpush.msra.mxu0 0.0
        %1165 = vmatpush.msra.mxu0 0.0
        %1166 = vmatpush.msra.mxu0 %v994
        %1167 = vmatmul.f32.gmra.mxu0 %v1009
        %v1168 = vpop.f32.mrf.mxu0
        %v1169 = vadd.f32 %v1005, %v1168
        %1170 = vdwg.mxu0
        %v1175 = vperm.slane %v996, 0
        %v1176 = vperm.slane %v996, 4
        %v1177 = vperm.slane %v997, 0
        %v1178 = vperm.slane %v997, 4
        %v1179 = vperm.slane %v998, 0
        %v1180 = vperm.slane %v998, 4
        %v1181 = vperm.slane %v999, 0
        %v1182 = vperm.slane %v999, 4
        %v1191 = vperm.slane %v1175, 0
        %v1192 = vperm.slane %v1176, 0
        %v1193 = vperm.slane %v1177, 0
        %v1194 = vperm.slane %v1178, 0
        %v1195 = vperm.slane %v1179, 0
        %v1196 = vperm.slane %v1180, 0
        %v1197 = vperm.slane %v1181, 0
        %v1198 = vperm.slane %v1182, 0
        %v1199 = vmul.f32 %v1191, %v1029
        %v1200 = vmul.f32 %v1192, %v1049
        %v1201 = vmul.f32 %v1193, %v1069
        %v1202 = vmul.f32 %v1194, %v1089
        %v1203 = vmul.f32 %v1195, %v1109
        %v1204 = vmul.f32 %v1196, %v1129
        %v1205 = vmul.f32 %v1197, %v1149
        %v1206 = vmul.f32 %v1198, %v1169
        %v1207 = vadd.f32 %v1199, 0.0
        %v1208 = vadd.f32 %v1200, 0.0
        %v1209 = vadd.f32 %v1201, 0.0
        %v1210 = vadd.f32 %v1202, 0.0
        %v1211 = vadd.f32 %v1203, 0.0
        %v1212 = vadd.f32 %v1204, 0.0
        %v1213 = vadd.f32 %v1205, 0.0
        %v1214 = vadd.f32 %v1206, 0.0
        %s1215 = scalar_lea.vmem %s5, 4
        %v1216 = vld [vmem:[%s1215] sm:$0xf]
        %v1218 = vsel %vm1007, %v1216, 0
        %1220 = vmatpush.msra.mxu0 0.0
        %1221 = vmatpush.msra.mxu0 0.0
        %1222 = vmatpush.msra.mxu0 0.0
        %1223 = vmatpush.msra.mxu0 0.0
        %1224 = vmatpush.msra.mxu0 0.0
        %1225 = vmatpush.msra.mxu0 0.0
        %1226 = vmatpush.msra.mxu0 0.0
        %1227 = vmatpush.msra.mxu0 0.0
        %1228 = vmatpush.msra.mxu0 0.0
        %1229 = vmatpush.msra.mxu0 0.0
        %1230 = vmatpush.msra.mxu0 0.0
        %1231 = vmatpush.msra.mxu0 0.0
        %1232 = vmatpush.msra.mxu0 0.0
        %1233 = vmatpush.msra.mxu0 0.0
        %1234 = vmatpush.msra.mxu0 0.0
        %1235 = vmatpush.msra.mxu0 %v714
        %1236 = vmatmul.f32.gmra.mxu0 %v1218
        %v1237 = vpop.f32.mrf.mxu0
        %v1238 = vadd.f32 %v1005, %v1237
        %1239 = vdwg.mxu0
        %1240 = vmatpush.msra.mxu0 0.0
        %1241 = vmatpush.msra.mxu0 0.0
        %1242 = vmatpush.msra.mxu0 0.0
        %1243 = vmatpush.msra.mxu0 0.0
        %1244 = vmatpush.msra.mxu0 0.0
        %1245 = vmatpush.msra.mxu0 0.0
        %1246 = vmatpush.msra.mxu0 0.0
        %1247 = vmatpush.msra.mxu0 0.0
        %1248 = vmatpush.msra.mxu0 0.0
        %1249 = vmatpush.msra.mxu0 0.0
        %1250 = vmatpush.msra.mxu0 0.0
        %1251 = vmatpush.msra.mxu0 0.0
        %1252 = vmatpush.msra.mxu0 0.0
        %1253 = vmatpush.msra.mxu0 0.0
        %1254 = vmatpush.msra.mxu0 0.0
        %1255 = vmatpush.msra.mxu0 %v754
        %1256 = vmatmul.f32.gmra.mxu0 %v1218
        %v1257 = vpop.f32.mrf.mxu0
        %v1258 = vadd.f32 %v1005, %v1257
        %1259 = vdwg.mxu0
        %1260 = vmatpush.msra.mxu0 0.0
        %1261 = vmatpush.msra.mxu0 0.0
        %1262 = vmatpush.msra.mxu0 0.0
        %1263 = vmatpush.msra.mxu0 0.0
        %1264 = vmatpush.msra.mxu0 0.0
        %1265 = vmatpush.msra.mxu0 0.0
        %1266 = vmatpush.msra.mxu0 0.0
        %1267 = vmatpush.msra.mxu0 0.0
        %1268 = vmatpush.msra.mxu0 0.0
        %1269 = vmatpush.msra.mxu0 0.0
        %1270 = vmatpush.msra.mxu0 0.0
        %1271 = vmatpush.msra.mxu0 0.0
        %1272 = vmatpush.msra.mxu0 0.0
        %1273 = vmatpush.msra.mxu0 0.0
        %1274 = vmatpush.msra.mxu0 0.0
        %1275 = vmatpush.msra.mxu0 %v794
        %1276 = vmatmul.f32.gmra.mxu0 %v1218
        %v1277 = vpop.f32.mrf.mxu0
        %v1278 = vadd.f32 %v1005, %v1277
        %1279 = vdwg.mxu0
        %1280 = vmatpush.msra.mxu0 0.0
        %1281 = vmatpush.msra.mxu0 0.0
        %1282 = vmatpush.msra.mxu0 0.0
        %1283 = vmatpush.msra.mxu0 0.0
        %1284 = vmatpush.msra.mxu0 0.0
        %1285 = vmatpush.msra.mxu0 0.0
        %1286 = vmatpush.msra.mxu0 0.0
        %1287 = vmatpush.msra.mxu0 0.0
        %1288 = vmatpush.msra.mxu0 0.0
        %1289 = vmatpush.msra.mxu0 0.0
        %1290 = vmatpush.msra.mxu0 0.0
        %1291 = vmatpush.msra.mxu0 0.0
        %1292 = vmatpush.msra.mxu0 0.0
        %1293 = vmatpush.msra.mxu0 0.0
        %1294 = vmatpush.msra.mxu0 0.0
        %1295 = vmatpush.msra.mxu0 %v834
        %1296 = vmatmul.f32.gmra.mxu0 %v1218
        %v1297 = vpop.f32.mrf.mxu0
        %v1298 = vadd.f32 %v1005, %v1297
        %1299 = vdwg.mxu0
        %1300 = vmatpush.msra.mxu0 0.0
        %1301 = vmatpush.msra.mxu0 0.0
        %1302 = vmatpush.msra.mxu0 0.0
        %1303 = vmatpush.msra.mxu0 0.0
        %1304 = vmatpush.msra.mxu0 0.0
        %1305 = vmatpush.msra.mxu0 0.0
        %1306 = vmatpush.msra.mxu0 0.0
        %1307 = vmatpush.msra.mxu0 0.0
        %1308 = vmatpush.msra.mxu0 0.0
        %1309 = vmatpush.msra.mxu0 0.0
        %1310 = vmatpush.msra.mxu0 0.0
        %1311 = vmatpush.msra.mxu0 0.0
        %1312 = vmatpush.msra.mxu0 0.0
        %1313 = vmatpush.msra.mxu0 0.0
        %1314 = vmatpush.msra.mxu0 0.0
        %1315 = vmatpush.msra.mxu0 %v874
        %1316 = vmatmul.f32.gmra.mxu0 %v1218
        %v1317 = vpop.f32.mrf.mxu0
        %v1318 = vadd.f32 %v1005, %v1317
        %1319 = vdwg.mxu0
        %1320 = vmatpush.msra.mxu0 0.0
        %1321 = vmatpush.msra.mxu0 0.0
        %1322 = vmatpush.msra.mxu0 0.0
        %1323 = vmatpush.msra.mxu0 0.0
        %1324 = vmatpush.msra.mxu0 0.0
        %1325 = vmatpush.msra.mxu0 0.0
        %1326 = vmatpush.msra.mxu0 0.0
        %1327 = vmatpush.msra.mxu0 0.0
        %1328 = vmatpush.msra.mxu0 0.0
        %1329 = vmatpush.msra.mxu0 0.0
        %1330 = vmatpush.msra.mxu0 0.0
        %1331 = vmatpush.msra.mxu0 0.0
        %1332 = vmatpush.msra.mxu0 0.0
        %1333 = vmatpush.msra.mxu0 0.0
        %1334 = vmatpush.msra.mxu0 0.0
        %1335 = vmatpush.msra.mxu0 %v914
        %1336 = vmatmul.f32.gmra.mxu0 %v1218
        %v1337 = vpop.f32.mrf.mxu0
        %v1338 = vadd.f32 %v1005, %v1337
        %1339 = vdwg.mxu0
        %1340 = vmatpush.msra.mxu0 0.0
        %1341 = vmatpush.msra.mxu0 0.0
        %1342 = vmatpush.msra.mxu0 0.0
        %1343 = vmatpush.msra.mxu0 0.0
        %1344 = vmatpush.msra.mxu0 0.0
        %1345 = vmatpush.msra.mxu0 0.0
        %1346 = vmatpush.msra.mxu0 0.0
        %1347 = vmatpush.msra.mxu0 0.0
        %1348 = vmatpush.msra.mxu0 0.0
        %1349 = vmatpush.msra.mxu0 0.0
        %1350 = vmatpush.msra.mxu0 0.0
        %1351 = vmatpush.msra.mxu0 0.0
        %1352 = vmatpush.msra.mxu0 0.0
        %1353 = vmatpush.msra.mxu0 0.0
        %1354 = vmatpush.msra.mxu0 0.0
        %1355 = vmatpush.msra.mxu0 %v954
        %1356 = vmatmul.f32.gmra.mxu0 %v1218
        %v1357 = vpop.f32.mrf.mxu0
        %v1358 = vadd.f32 %v1005, %v1357
        %1359 = vdwg.mxu0
        %1360 = vmatpush.msra.mxu0 0.0
        %1361 = vmatpush.msra.mxu0 0.0
        %1362 = vmatpush.msra.mxu0 0.0
        %1363 = vmatpush.msra.mxu0 0.0
        %1364 = vmatpush.msra.mxu0 0.0
        %1365 = vmatpush.msra.mxu0 0.0
        %1366 = vmatpush.msra.mxu0 0.0
        %1367 = vmatpush.msra.mxu0 0.0
        %1368 = vmatpush.msra.mxu0 0.0
        %1369 = vmatpush.msra.mxu0 0.0
        %1370 = vmatpush.msra.mxu0 0.0
        %1371 = vmatpush.msra.mxu0 0.0
        %1372 = vmatpush.msra.mxu0 0.0
        %1373 = vmatpush.msra.mxu0 0.0
        %1374 = vmatpush.msra.mxu0 0.0
        %1375 = vmatpush.msra.mxu0 %v994
        %1376 = vmatmul.f32.gmra.mxu0 %v1218
        %v1377 = vpop.f32.mrf.mxu0
        %v1378 = vadd.f32 %v1005, %v1377
        %1379 = vdwg.mxu0
        %v1380 = vperm.slane %v996, 1
        %v1381 = vperm.slane %v996, 5
        %v1382 = vperm.slane %v997, 1
        %v1383 = vperm.slane %v997, 5
        %v1384 = vperm.slane %v998, 1
        %v1385 = vperm.slane %v998, 5
        %v1386 = vperm.slane %v999, 1
        %v1387 = vperm.slane %v999, 5
        %v1396 = vperm.slane %v1380, 1
        %v1397 = vperm.slane %v1381, 1
        %v1398 = vperm.slane %v1382, 1
        %v1399 = vperm.slane %v1383, 1
        %v1400 = vperm.slane %v1384, 1
        %v1401 = vperm.slane %v1385, 1
        %v1402 = vperm.slane %v1386, 1
        %v1403 = vperm.slane %v1387, 1
        %v1404 = vmul.f32 %v1396, %v1238
        %v1405 = vmul.f32 %v1397, %v1258
        %v1406 = vmul.f32 %v1398, %v1278
        %v1407 = vmul.f32 %v1399, %v1298
        %v1408 = vmul.f32 %v1400, %v1318
        %v1409 = vmul.f32 %v1401, %v1338
        %v1410 = vmul.f32 %v1402, %v1358
        %v1411 = vmul.f32 %v1403, %v1378
        %v1412 = vadd.f32 %v1207, %v1404
        %v1413 = vadd.f32 %v1208, %v1405
        %v1414 = vadd.f32 %v1209, %v1406
        %v1415 = vadd.f32 %v1210, %v1407
        %v1416 = vadd.f32 %v1211, %v1408
        %v1417 = vadd.f32 %v1212, %v1409
        %v1418 = vadd.f32 %v1213, %v1410
        %v1419 = vadd.f32 %v1214, %v1411
        %s1420 = scalar_lea.vmem %s5, 8
        %v1421 = vld [vmem:[%s1420] sm:$0xf]
        %v1423 = vsel %vm1007, %v1421, 0
        %1425 = vmatpush.msra.mxu0 0.0
        %1426 = vmatpush.msra.mxu0 0.0
        %1427 = vmatpush.msra.mxu0 0.0
        %1428 = vmatpush.msra.mxu0 0.0
        %1429 = vmatpush.msra.mxu0 0.0
        %1430 = vmatpush.msra.mxu0 0.0
        %1431 = vmatpush.msra.mxu0 0.0
        %1432 = vmatpush.msra.mxu0 0.0
        %1433 = vmatpush.msra.mxu0 0.0
        %1434 = vmatpush.msra.mxu0 0.0
        %1435 = vmatpush.msra.mxu0 0.0
        %1436 = vmatpush.msra.mxu0 0.0
        %1437 = vmatpush.msra.mxu0 0.0
        %1438 = vmatpush.msra.mxu0 0.0
        %1439 = vmatpush.msra.mxu0 0.0
        %1440 = vmatpush.msra.mxu0 %v714
        %1441 = vmatmul.f32.gmra.mxu0 %v1423
        %v1442 = vpop.f32.mrf.mxu0
        %v1443 = vadd.f32 %v1005, %v1442
        %1444 = vdwg.mxu0
        %1445 = vmatpush.msra.mxu0 0.0
        %1446 = vmatpush.msra.mxu0 0.0
        %1447 = vmatpush.msra.mxu0 0.0
        %1448 = vmatpush.msra.mxu0 0.0
        %1449 = vmatpush.msra.mxu0 0.0
        %1450 = vmatpush.msra.mxu0 0.0
        %1451 = vmatpush.msra.mxu0 0.0
        %1452 = vmatpush.msra.mxu0 0.0
        %1453 = vmatpush.msra.mxu0 0.0
        %1454 = vmatpush.msra.mxu0 0.0
        %1455 = vmatpush.msra.mxu0 0.0
        %1456 = vmatpush.msra.mxu0 0.0
        %1457 = vmatpush.msra.mxu0 0.0
        %1458 = vmatpush.msra.mxu0 0.0
        %1459 = vmatpush.msra.mxu0 0.0
        %1460 = vmatpush.msra.mxu0 %v754
        %1461 = vmatmul.f32.gmra.mxu0 %v1423
        %v1462 = vpop.f32.mrf.mxu0
        %v1463 = vadd.f32 %v1005, %v1462
        %1464 = vdwg.mxu0
        %1465 = vmatpush.msra.mxu0 0.0
        %1466 = vmatpush.msra.mxu0 0.0
        %1467 = vmatpush.msra.mxu0 0.0
        %1468 = vmatpush.msra.mxu0 0.0
        %1469 = vmatpush.msra.mxu0 0.0
        %1470 = vmatpush.msra.mxu0 0.0
        %1471 = vmatpush.msra.mxu0 0.0
        %1472 = vmatpush.msra.mxu0 0.0
        %1473 = vmatpush.msra.mxu0 0.0
        %1474 = vmatpush.msra.mxu0 0.0
        %1475 = vmatpush.msra.mxu0 0.0
        %1476 = vmatpush.msra.mxu0 0.0
        %1477 = vmatpush.msra.mxu0 0.0
        %1478 = vmatpush.msra.mxu0 0.0
        %1479 = vmatpush.msra.mxu0 0.0
        %1480 = vmatpush.msra.mxu0 %v794
        %1481 = vmatmul.f32.gmra.mxu0 %v1423
        %v1482 = vpop.f32.mrf.mxu0
        %v1483 = vadd.f32 %v1005, %v1482
        %1484 = vdwg.mxu0
        %1485 = vmatpush.msra.mxu0 0.0
        %1486 = vmatpush.msra.mxu0 0.0
        %1487 = vmatpush.msra.mxu0 0.0
        %1488 = vmatpush.msra.mxu0 0.0
        %1489 = vmatpush.msra.mxu0 0.0
        %1490 = vmatpush.msra.mxu0 0.0
        %1491 = vmatpush.msra.mxu0 0.0
        %1492 = vmatpush.msra.mxu0 0.0
        %1493 = vmatpush.msra.mxu0 0.0
        %1494 = vmatpush.msra.mxu0 0.0
        %1495 = vmatpush.msra.mxu0 0.0
        %1496 = vmatpush.msra.mxu0 0.0
        %1497 = vmatpush.msra.mxu0 0.0
        %1498 = vmatpush.msra.mxu0 0.0
        %1499 = vmatpush.msra.mxu0 0.0
        %1500 = vmatpush.msra.mxu0 %v834
        %1501 = vmatmul.f32.gmra.mxu0 %v1423
        %v1502 = vpop.f32.mrf.mxu0
        %v1503 = vadd.f32 %v1005, %v1502
        %1504 = vdwg.mxu0
        %1505 = vmatpush.msra.mxu0 0.0
        %1506 = vmatpush.msra.mxu0 0.0
        %1507 = vmatpush.msra.mxu0 0.0
        %1508 = vmatpush.msra.mxu0 0.0
        %1509 = vmatpush.msra.mxu0 0.0
        %1510 = vmatpush.msra.mxu0 0.0
        %1511 = vmatpush.msra.mxu0 0.0
        %1512 = vmatpush.msra.mxu0 0.0
        %1513 = vmatpush.msra.mxu0 0.0
        %1514 = vmatpush.msra.mxu0 0.0
        %1515 = vmatpush.msra.mxu0 0.0
        %1516 = vmatpush.msra.mxu0 0.0
        %1517 = vmatpush.msra.mxu0 0.0
        %1518 = vmatpush.msra.mxu0 0.0
        %1519 = vmatpush.msra.mxu0 0.0
        %1520 = vmatpush.msra.mxu0 %v874
        %1521 = vmatmul.f32.gmra.mxu0 %v1423
        %v1522 = vpop.f32.mrf.mxu0
        %v1523 = vadd.f32 %v1005, %v1522
        %1524 = vdwg.mxu0
        %1525 = vmatpush.msra.mxu0 0.0
        %1526 = vmatpush.msra.mxu0 0.0
        %1527 = vmatpush.msra.mxu0 0.0
        %1528 = vmatpush.msra.mxu0 0.0
        %1529 = vmatpush.msra.mxu0 0.0
        %1530 = vmatpush.msra.mxu0 0.0
        %1531 = vmatpush.msra.mxu0 0.0
        %1532 = vmatpush.msra.mxu0 0.0
        %1533 = vmatpush.msra.mxu0 0.0
        %1534 = vmatpush.msra.mxu0 0.0
        %1535 = vmatpush.msra.mxu0 0.0
        %1536 = vmatpush.msra.mxu0 0.0
        %1537 = vmatpush.msra.mxu0 0.0
        %1538 = vmatpush.msra.mxu0 0.0
        %1539 = vmatpush.msra.mxu0 0.0
        %1540 = vmatpush.msra.mxu0 %v914
        %1541 = vmatmul.f32.gmra.mxu0 %v1423
        %v1542 = vpop.f32.mrf.mxu0
        %v1543 = vadd.f32 %v1005, %v1542
        %1544 = vdwg.mxu0
        %1545 = vmatpush.msra.mxu0 0.0
        %1546 = vmatpush.msra.mxu0 0.0
        %1547 = vmatpush.msra.mxu0 0.0
        %1548 = vmatpush.msra.mxu0 0.0
        %1549 = vmatpush.msra.mxu0 0.0
        %1550 = vmatpush.msra.mxu0 0.0
        %1551 = vmatpush.msra.mxu0 0.0
        %1552 = vmatpush.msra.mxu0 0.0
        %1553 = vmatpush.msra.mxu0 0.0
        %1554 = vmatpush.msra.mxu0 0.0
        %1555 = vmatpush.msra.mxu0 0.0
        %1556 = vmatpush.msra.mxu0 0.0
        %1557 = vmatpush.msra.mxu0 0.0
        %1558 = vmatpush.msra.mxu0 0.0
        %1559 = vmatpush.msra.mxu0 0.0
        %1560 = vmatpush.msra.mxu0 %v954
        %1561 = vmatmul.f32.gmra.mxu0 %v1423
        %v1562 = vpop.f32.mrf.mxu0
        %v1563 = vadd.f32 %v1005, %v1562
        %1564 = vdwg.mxu0
        %1565 = vmatpush.msra.mxu0 0.0
        %1566 = vmatpush.msra.mxu0 0.0
        %1567 = vmatpush.msra.mxu0 0.0
        %1568 = vmatpush.msra.mxu0 0.0
        %1569 = vmatpush.msra.mxu0 0.0
        %1570 = vmatpush.msra.mxu0 0.0
        %1571 = vmatpush.msra.mxu0 0.0
        %1572 = vmatpush.msra.mxu0 0.0
        %1573 = vmatpush.msra.mxu0 0.0
        %1574 = vmatpush.msra.mxu0 0.0
        %1575 = vmatpush.msra.mxu0 0.0
        %1576 = vmatpush.msra.mxu0 0.0
        %1577 = vmatpush.msra.mxu0 0.0
        %1578 = vmatpush.msra.mxu0 0.0
        %1579 = vmatpush.msra.mxu0 0.0
        %1580 = vmatpush.msra.mxu0 %v994
        %1581 = vmatmul.f32.gmra.mxu0 %v1423
        %v1582 = vpop.f32.mrf.mxu0
        %v1583 = vadd.f32 %v1005, %v1582
        %1584 = vdwg.mxu0
        %v1585 = vperm.slane %v996, 2
        %v1586 = vperm.slane %v996, 6
        %v1587 = vperm.slane %v997, 2
        %v1588 = vperm.slane %v997, 6
        %v1589 = vperm.slane %v998, 2
        %v1590 = vperm.slane %v998, 6
        %v1591 = vperm.slane %v999, 2
        %v1592 = vperm.slane %v999, 6
        %v1601 = vperm.slane %v1585, 2
        %v1602 = vperm.slane %v1586, 2
        %v1603 = vperm.slane %v1587, 2
        %v1604 = vperm.slane %v1588, 2
        %v1605 = vperm.slane %v1589, 2
        %v1606 = vperm.slane %v1590, 2
        %v1607 = vperm.slane %v1591, 2
        %v1608 = vperm.slane %v1592, 2
        %v1609 = vmul.f32 %v1601, %v1443
        %v1610 = vmul.f32 %v1602, %v1463
        %v1611 = vmul.f32 %v1603, %v1483
        %v1612 = vmul.f32 %v1604, %v1503
        %v1613 = vmul.f32 %v1605, %v1523
        %v1614 = vmul.f32 %v1606, %v1543
        %v1615 = vmul.f32 %v1607, %v1563
        %v1616 = vmul.f32 %v1608, %v1583
        %v1617 = vadd.f32 %v1412, %v1609
        %v1618 = vadd.f32 %v1413, %v1610
        %v1619 = vadd.f32 %v1414, %v1611
        %v1620 = vadd.f32 %v1415, %v1612
        %v1621 = vadd.f32 %v1416, %v1613
        %v1622 = vadd.f32 %v1417, %v1614
        %v1623 = vadd.f32 %v1418, %v1615
        %v1624 = vadd.f32 %v1419, %v1616
        %s1625 = scalar_lea.vmem %s5, 12
        %v1626 = vld [vmem:[%s1625] sm:$0xf]
        %v1628 = vsel %vm1007, %v1626, 0
        %1630 = vmatpush.msra.mxu0 0.0
        %1631 = vmatpush.msra.mxu0 0.0
        %1632 = vmatpush.msra.mxu0 0.0
        %1633 = vmatpush.msra.mxu0 0.0
        %1634 = vmatpush.msra.mxu0 0.0
        %1635 = vmatpush.msra.mxu0 0.0
        %1636 = vmatpush.msra.mxu0 0.0
        %1637 = vmatpush.msra.mxu0 0.0
        %1638 = vmatpush.msra.mxu0 0.0
        %1639 = vmatpush.msra.mxu0 0.0
        %1640 = vmatpush.msra.mxu0 0.0
        %1641 = vmatpush.msra.mxu0 0.0
        %1642 = vmatpush.msra.mxu0 0.0
        %1643 = vmatpush.msra.mxu0 0.0
        %1644 = vmatpush.msra.mxu0 0.0
        %1645 = vmatpush.msra.mxu0 %v714
        %1646 = vmatmul.f32.gmra.mxu0 %v1628
        %v1647 = vpop.f32.mrf.mxu0
        %v1648 = vadd.f32 %v1005, %v1647
        %1649 = vdwg.mxu0
        %1650 = vmatpush.msra.mxu0 0.0
        %1651 = vmatpush.msra.mxu0 0.0
        %1652 = vmatpush.msra.mxu0 0.0
        %1653 = vmatpush.msra.mxu0 0.0
        %1654 = vmatpush.msra.mxu0 0.0
        %1655 = vmatpush.msra.mxu0 0.0
        %1656 = vmatpush.msra.mxu0 0.0
        %1657 = vmatpush.msra.mxu0 0.0
        %1658 = vmatpush.msra.mxu0 0.0
        %1659 = vmatpush.msra.mxu0 0.0
        %1660 = vmatpush.msra.mxu0 0.0
        %1661 = vmatpush.msra.mxu0 0.0
        %1662 = vmatpush.msra.mxu0 0.0
        %1663 = vmatpush.msra.mxu0 0.0
        %1664 = vmatpush.msra.mxu0 0.0
        %1665 = vmatpush.msra.mxu0 %v754
        %1666 = vmatmul.f32.gmra.mxu0 %v1628
        %v1667 = vpop.f32.mrf.mxu0
        %v1668 = vadd.f32 %v1005, %v1667
        %1669 = vdwg.mxu0
        %1670 = vmatpush.msra.mxu0 0.0
        %1671 = vmatpush.msra.mxu0 0.0
        %1672 = vmatpush.msra.mxu0 0.0
        %1673 = vmatpush.msra.mxu0 0.0
        %1674 = vmatpush.msra.mxu0 0.0
        %1675 = vmatpush.msra.mxu0 0.0
        %1676 = vmatpush.msra.mxu0 0.0
        %1677 = vmatpush.msra.mxu0 0.0
        %1678 = vmatpush.msra.mxu0 0.0
        %1679 = vmatpush.msra.mxu0 0.0
        %1680 = vmatpush.msra.mxu0 0.0
        %1681 = vmatpush.msra.mxu0 0.0
        %1682 = vmatpush.msra.mxu0 0.0
        %1683 = vmatpush.msra.mxu0 0.0
        %1684 = vmatpush.msra.mxu0 0.0
        %1685 = vmatpush.msra.mxu0 %v794
        %1686 = vmatmul.f32.gmra.mxu0 %v1628
        %v1687 = vpop.f32.mrf.mxu0
        %v1688 = vadd.f32 %v1005, %v1687
        %1689 = vdwg.mxu0
        %1690 = vmatpush.msra.mxu0 0.0
        %1691 = vmatpush.msra.mxu0 0.0
        %1692 = vmatpush.msra.mxu0 0.0
        %1693 = vmatpush.msra.mxu0 0.0
        %1694 = vmatpush.msra.mxu0 0.0
        %1695 = vmatpush.msra.mxu0 0.0
        %1696 = vmatpush.msra.mxu0 0.0
        %1697 = vmatpush.msra.mxu0 0.0
        %1698 = vmatpush.msra.mxu0 0.0
        %1699 = vmatpush.msra.mxu0 0.0
        %1700 = vmatpush.msra.mxu0 0.0
        %1701 = vmatpush.msra.mxu0 0.0
        %1702 = vmatpush.msra.mxu0 0.0
        %1703 = vmatpush.msra.mxu0 0.0
        %1704 = vmatpush.msra.mxu0 0.0
        %1705 = vmatpush.msra.mxu0 %v834
        %1706 = vmatmul.f32.gmra.mxu0 %v1628
        %v1707 = vpop.f32.mrf.mxu0
        %v1708 = vadd.f32 %v1005, %v1707
        %1709 = vdwg.mxu0
        %1710 = vmatpush.msra.mxu0 0.0
        %1711 = vmatpush.msra.mxu0 0.0
        %1712 = vmatpush.msra.mxu0 0.0
        %1713 = vmatpush.msra.mxu0 0.0
        %1714 = vmatpush.msra.mxu0 0.0
        %1715 = vmatpush.msra.mxu0 0.0
        %1716 = vmatpush.msra.mxu0 0.0
        %1717 = vmatpush.msra.mxu0 0.0
        %1718 = vmatpush.msra.mxu0 0.0
        %1719 = vmatpush.msra.mxu0 0.0
        %1720 = vmatpush.msra.mxu0 0.0
        %1721 = vmatpush.msra.mxu0 0.0
        %1722 = vmatpush.msra.mxu0 0.0
        %1723 = vmatpush.msra.mxu0 0.0
        %1724 = vmatpush.msra.mxu0 0.0
        %1725 = vmatpush.msra.mxu0 %v874
        %1726 = vmatmul.f32.gmra.mxu0 %v1628
        %v1727 = vpop.f32.mrf.mxu0
        %v1728 = vadd.f32 %v1005, %v1727
        %1729 = vdwg.mxu0
        %1730 = vmatpush.msra.mxu0 0.0
        %1731 = vmatpush.msra.mxu0 0.0
        %1732 = vmatpush.msra.mxu0 0.0
        %1733 = vmatpush.msra.mxu0 0.0
        %1734 = vmatpush.msra.mxu0 0.0
        %1735 = vmatpush.msra.mxu0 0.0
        %1736 = vmatpush.msra.mxu0 0.0
        %1737 = vmatpush.msra.mxu0 0.0
        %1738 = vmatpush.msra.mxu0 0.0
        %1739 = vmatpush.msra.mxu0 0.0
        %1740 = vmatpush.msra.mxu0 0.0
        %1741 = vmatpush.msra.mxu0 0.0
        %1742 = vmatpush.msra.mxu0 0.0
        %1743 = vmatpush.msra.mxu0 0.0
        %1744 = vmatpush.msra.mxu0 0.0
        %1745 = vmatpush.msra.mxu0 %v914
        %1746 = vmatmul.f32.gmra.mxu0 %v1628
        %v1747 = vpop.f32.mrf.mxu0
        %v1748 = vadd.f32 %v1005, %v1747
        %1749 = vdwg.mxu0
        %1750 = vmatpush.msra.mxu0 0.0
        %1751 = vmatpush.msra.mxu0 0.0
        %1752 = vmatpush.msra.mxu0 0.0
        %1753 = vmatpush.msra.mxu0 0.0
        %1754 = vmatpush.msra.mxu0 0.0
        %1755 = vmatpush.msra.mxu0 0.0
        %1756 = vmatpush.msra.mxu0 0.0
        %1757 = vmatpush.msra.mxu0 0.0
        %1758 = vmatpush.msra.mxu0 0.0
        %1759 = vmatpush.msra.mxu0 0.0
        %1760 = vmatpush.msra.mxu0 0.0
        %1761 = vmatpush.msra.mxu0 0.0
        %1762 = vmatpush.msra.mxu0 0.0
        %1763 = vmatpush.msra.mxu0 0.0
        %1764 = vmatpush.msra.mxu0 0.0
        %1765 = vmatpush.msra.mxu0 %v954
        %1766 = vmatmul.f32.gmra.mxu0 %v1628
        %v1767 = vpop.f32.mrf.mxu0
        %v1768 = vadd.f32 %v1005, %v1767
        %1769 = vdwg.mxu0
        %1770 = vmatpush.msra.mxu0 0.0
        %1771 = vmatpush.msra.mxu0 0.0
        %1772 = vmatpush.msra.mxu0 0.0
        %1773 = vmatpush.msra.mxu0 0.0
        %1774 = vmatpush.msra.mxu0 0.0
        %1775 = vmatpush.msra.mxu0 0.0
        %1776 = vmatpush.msra.mxu0 0.0
        %1777 = vmatpush.msra.mxu0 0.0
        %1778 = vmatpush.msra.mxu0 0.0
        %1779 = vmatpush.msra.mxu0 0.0
        %1780 = vmatpush.msra.mxu0 0.0
        %1781 = vmatpush.msra.mxu0 0.0
        %1782 = vmatpush.msra.mxu0 0.0
        %1783 = vmatpush.msra.mxu0 0.0
        %1784 = vmatpush.msra.mxu0 0.0
        %1785 = vmatpush.msra.mxu0 %v994
        %1786 = vmatmul.f32.gmra.mxu0 %v1628
        %v1787 = vpop.f32.mrf.mxu0
        %v1788 = vadd.f32 %v1005, %v1787
        %1789 = vdwg.mxu0
        %v1790 = vperm.slane %v996, 3
        %v1791 = vperm.slane %v996, 7
        %v1792 = vperm.slane %v997, 3
        %v1793 = vperm.slane %v997, 7
        %v1794 = vperm.slane %v998, 3
        %v1795 = vperm.slane %v998, 7
        %v1796 = vperm.slane %v999, 3
        %v1797 = vperm.slane %v999, 7
        %v1806 = vperm.slane %v1790, 3
        %v1807 = vperm.slane %v1791, 3
        %v1808 = vperm.slane %v1792, 3
        %v1809 = vperm.slane %v1793, 3
        %v1810 = vperm.slane %v1794, 3
        %v1811 = vperm.slane %v1795, 3
        %v1812 = vperm.slane %v1796, 3
        %v1813 = vperm.slane %v1797, 3
        %v1814 = vmul.f32 %v1806, %v1648
        %v1815 = vmul.f32 %v1807, %v1668
        %v1816 = vmul.f32 %v1808, %v1688
        %v1817 = vmul.f32 %v1809, %v1708
        %v1818 = vmul.f32 %v1810, %v1728
        %v1819 = vmul.f32 %v1811, %v1748
        %v1820 = vmul.f32 %v1812, %v1768
        %v1821 = vmul.f32 %v1813, %v1788
        %v1822 = vadd.f32 %v1617, %v1814
        %v1823 = vadd.f32 %v1618, %v1815
        %v1824 = vadd.f32 %v1619, %v1816
        %v1825 = vadd.f32 %v1620, %v1817
        %v1826 = vadd.f32 %v1621, %v1818
        %v1827 = vadd.f32 %v1622, %v1819
        %v1828 = vadd.f32 %v1623, %v1820
        %v1829 = vadd.f32 %v1624, %v1821
        %v1830 = vld [vmem:[%s404] sm:$0xff]
        %v1831 = vld [vmem:[%s404 + $0x8] sm:$0xff]
        %v1832 = vld [vmem:[%s404 + $0x10] sm:$0xff]
        %v1833 = vld [vmem:[%s404 + $0x18] sm:$0xff]
        %1838 = vst [vmem:[#allocation1] ss:$2 sm:$0xff] %v1830
        %s1839 = scalar_lea.vmem [#allocation1], 16
        %1840 = vst [vmem:[%s1839] ss:$2 sm:$0xff] %v1831
        %s1841 = scalar_lea.vmem [#allocation1], 32
        %1842 = vst [vmem:[%s1841] ss:$2 sm:$0xff] %v1832
        %s1843 = scalar_lea.vmem [#allocation1], 48
        %1844 = vst [vmem:[%s1843] ss:$2 sm:$0xff] %v1833
        %v1845 = vld.sshfl [vmem:[#allocation1] sm:$0xff pattern:$0x75316420]
        %v1846 = vld.sshfl [vmem:[#allocation1 + $0x8] sm:$0xff pattern:$0x75316420]
        %v1847 = vld.sshfl [vmem:[#allocation1 + $0x10] sm:$0xff pattern:$0x75316420]
        %v1848 = vld.sshfl [vmem:[#allocation1 + $0x18] sm:$0xff pattern:$0x75316420]
        %v1849 = vld.sshfl [vmem:[#allocation1 + $0x20] sm:$0xff pattern:$0x75316420]
        %v1850 = vld.sshfl [vmem:[#allocation1 + $0x28] sm:$0xff pattern:$0x75316420]
        %v1851 = vld.sshfl [vmem:[#allocation1 + $0x30] sm:$0xff pattern:$0x75316420]
        %v1852 = vld.sshfl [vmem:[#allocation1 + $0x38] sm:$0xff pattern:$0x75316420]
        %v1869 = vrot.slane %v1822, 4
        %v1870 = vrot.slane %v1823, 4
        %v1871 = vrot.slane %v1824, 4
        %v1872 = vrot.slane %v1825, 4
        %v1873 = vrot.slane %v1826, 4
        %v1874 = vrot.slane %v1827, 4
        %v1875 = vrot.slane %v1828, 4
        %v1876 = vrot.slane %v1829, 4
        %vm1885 = vcmask 1043456
        %v1886 = vsel %vm1885, %v1845, %v1869
        %v1887 = vsel %vm1885, %v1846, %v1870
        %v1888 = vsel %vm1885, %v1847, %v1871
        %v1889 = vsel %vm1885, %v1848, %v1872
        %v1890 = vsel %vm1885, %v1849, %v1873
        %v1891 = vsel %vm1885, %v1850, %v1874
        %v1892 = vsel %vm1885, %v1851, %v1875
        %v1893 = vsel %vm1885, %v1852, %v1876
        %v1894 = vld [vmem:[%s4] sm:$0xff]
        %v1895 = vld [vmem:[%s4 + $0x8] sm:$0xff]
        %v1896 = vld [vmem:[%s4 + $0x10] sm:$0xff]
        %v1897 = vld [vmem:[%s4 + $0x18] sm:$0xff]
        %v1898 = vld [vmem:[%s4 + $0x20] sm:$0xff]
        %v1899 = vld [vmem:[%s4 + $0x28] sm:$0xff]
        %v1900 = vld [vmem:[%s4 + $0x30] sm:$0xff]
        %v1901 = vld [vmem:[%s4 + $0x38] sm:$0xff]
        %v1902 = vld [vmem:[%s4 + $0x40] sm:$0x1]
        %v1903 = vld [vmem:[%s4 + $0x48] sm:$0x1]
        %v1904 = vld [vmem:[%s4 + $0x50] sm:$0x1]
        %v1905 = vld [vmem:[%s4 + $0x58] sm:$0x1]
        %v1906 = vld [vmem:[%s4 + $0x60] sm:$0x1]
        %v1907 = vld [vmem:[%s4 + $0x68] sm:$0x1]
        %v1908 = vld [vmem:[%s4 + $0x70] sm:$0x1]
        %v1909 = vld [vmem:[%s4 + $0x78] sm:$0x1]
        %1910 = vrot.lane.b32.xlu0 %v1886, 33
        %v1911 = vpop.permute.xlu0 %1910
        %1912 = vrot.lane.b32.xlu0 %v1887, 33
        %v1913 = vpop.permute.xlu0 %1912
        %1914 = vrot.lane.b32.xlu0 %v1888, 33
        %v1915 = vpop.permute.xlu0 %1914
        %1916 = vrot.lane.b32.xlu0 %v1889, 33
        %v1917 = vpop.permute.xlu0 %1916
        %1918 = vrot.lane.b32.xlu0 %v1890, 33
        %v1919 = vpop.permute.xlu0 %1918
        %1920 = vrot.lane.b32.xlu0 %v1891, 33
        %v1921 = vpop.permute.xlu0 %1920
        %1922 = vrot.lane.b32.xlu0 %v1892, 33
        %v1923 = vpop.permute.xlu0 %1922
        %1924 = vrot.lane.b32.xlu0 %v1893, 33
        %v1925 = vpop.permute.xlu0 %1924
        %v1926 = vlaneseq
        %v1927 = vand.u32 %v1926, 127
        %vm1928 = vcmp.lt.s32.totalorder %v1927, 33
        %v1929 = vsel %vm1928, %v1923, %v1925
        %v1930 = vsel %vm1928, %v1921, %v1923
        %v1931 = vsel %vm1928, %v1919, %v1921
        %v1932 = vsel %vm1928, %v1917, %v1919
        %v1933 = vsel %vm1928, %v1915, %v1917
        %v1934 = vsel %vm1928, %v1913, %v1915
        %v1935 = vsel %vm1928, %v1911, %v1913
        %v1936 = vsel %vm1928, %v1925, %v1911
        %v1937 = vperm.slane %v1894, 0
        %v1938 = vperm.slane %v1895, 0
        %v1939 = vperm.slane %v1896, 0
        %v1940 = vperm.slane %v1897, 0
        %v1941 = vperm.slane %v1898, 0
        %v1942 = vperm.slane %v1899, 0
        %v1943 = vperm.slane %v1900, 0
        %v1944 = vperm.slane %v1901, 0
        %v1945 = vmul.f32 %v1936, %v1937
        %v1946 = vmul.f32 %v1935, %v1938
        %v1947 = vmul.f32 %v1934, %v1939
        %v1948 = vmul.f32 %v1933, %v1940
        %v1949 = vmul.f32 %v1932, %v1941
        %v1950 = vmul.f32 %v1931, %v1942
        %v1951 = vmul.f32 %v1930, %v1943
        %v1952 = vmul.f32 %v1929, %v1944
        %1953 = vst [vmem:[#allocation2] sm:$0xff] %v1945
        %1954 = vst [vmem:[#allocation2 + $0x8] sm:$0xff] %v1946
        %1955 = vst [vmem:[#allocation2 + $0x10] sm:$0xff] %v1947
        %1956 = vst [vmem:[#allocation2 + $0x18] sm:$0xff] %v1948
        %1957 = vst [vmem:[#allocation2 + $0x20] sm:$0xff] %v1949
        %1958 = vst [vmem:[#allocation2 + $0x28] sm:$0xff] %v1950
        %1959 = vst [vmem:[#allocation2 + $0x30] sm:$0xff] %v1951
        %1960 = vst [vmem:[#allocation2 + $0x38] sm:$0xff] %v1952
        %1961 = vrot.lane.b32.xlu0 %v1886, 32
        %v1962 = vpop.permute.xlu0 %1961
        %1963 = vrot.lane.b32.xlu0 %v1887, 32
        %v1964 = vpop.permute.xlu0 %1963
        %1965 = vrot.lane.b32.xlu0 %v1888, 32
        %v1966 = vpop.permute.xlu0 %1965
        %1967 = vrot.lane.b32.xlu0 %v1889, 32
        %v1968 = vpop.permute.xlu0 %1967
        %1969 = vrot.lane.b32.xlu0 %v1890, 32
        %v1970 = vpop.permute.xlu0 %1969
        %1971 = vrot.lane.b32.xlu0 %v1891, 32
        %v1972 = vpop.permute.xlu0 %1971
        %1973 = vrot.lane.b32.xlu0 %v1892, 32
        %v1974 = vpop.permute.xlu0 %1973
        %1975 = vrot.lane.b32.xlu0 %v1893, 32
        %v1976 = vpop.permute.xlu0 %1975
        %vm1977 = vcmp.lt.s32.totalorder %v1927, 32
        %v1978 = vsel %vm1977, %v1974, %v1976
        %v1979 = vsel %vm1977, %v1972, %v1974
        %v1980 = vsel %vm1977, %v1970, %v1972
        %v1981 = vsel %vm1977, %v1968, %v1970
        %v1982 = vsel %vm1977, %v1966, %v1968
        %v1983 = vsel %vm1977, %v1964, %v1966
        %v1984 = vsel %vm1977, %v1962, %v1964
        %v1985 = vsel %vm1977, %v1976, %v1962
        %v1986 = vperm.slane %v1894, 1
        %v1987 = vperm.slane %v1895, 1
        %v1988 = vperm.slane %v1896, 1
        %v1989 = vperm.slane %v1897, 1
        %v1990 = vperm.slane %v1898, 1
        %v1991 = vperm.slane %v1899, 1
        %v1992 = vperm.slane %v1900, 1
        %v1993 = vperm.slane %v1901, 1
        %v1994 = vmul.f32 %v1985, %v1986
        %v1995 = vmul.f32 %v1984, %v1987
        %v1996 = vmul.f32 %v1983, %v1988
        %v1997 = vmul.f32 %v1982, %v1989
        %v1998 = vmul.f32 %v1981, %v1990
        %v1999 = vmul.f32 %v1980, %v1991
        %v2000 = vmul.f32 %v1979, %v1992
        %v2001 = vmul.f32 %v1978, %v1993
        %2002 = vst [vmem:[#allocation2 + $0x40] sm:$0xff] %v1994
        %2003 = vst [vmem:[#allocation2 + $0x48] sm:$0xff] %v1995
        %2004 = vst [vmem:[#allocation2 + $0x50] sm:$0xff] %v1996
        %2005 = vst [vmem:[#allocation2 + $0x58] sm:$0xff] %v1997
        %2006 = vst [vmem:[#allocation2 + $0x60] sm:$0xff] %v1998
        %2007 = vst [vmem:[#allocation2 + $0x68] sm:$0xff] %v1999
        %2008 = vst [vmem:[#allocation2 + $0x70] sm:$0xff] %v2000
        %2009 = vst [vmem:[#allocation2 + $0x78] sm:$0xff] %v2001
        %2010 = vrot.lane.b32.xlu0 %v1886, 31
        %v2011 = vpop.permute.xlu0 %2010
        %2012 = vrot.lane.b32.xlu0 %v1887, 31
        %v2013 = vpop.permute.xlu0 %2012
        %2014 = vrot.lane.b32.xlu0 %v1888, 31
        %v2015 = vpop.permute.xlu0 %2014
        %2016 = vrot.lane.b32.xlu0 %v1889, 31
        %v2017 = vpop.permute.xlu0 %2016
        %2018 = vrot.lane.b32.xlu0 %v1890, 31
        %v2019 = vpop.permute.xlu0 %2018
        %2020 = vrot.lane.b32.xlu0 %v1891, 31
        %v2021 = vpop.permute.xlu0 %2020
        %2022 = vrot.lane.b32.xlu0 %v1892, 31
        %v2023 = vpop.permute.xlu0 %2022
        %2024 = vrot.lane.b32.xlu0 %v1893, 31
        %v2025 = vpop.permute.xlu0 %2024
        %vm2026 = vcmp.lt.s32.totalorder %v1927, 31
        %v2027 = vsel %vm2026, %v2023, %v2025
        %v2028 = vsel %vm2026, %v2021, %v2023
        %v2029 = vsel %vm2026, %v2019, %v2021
        %v2030 = vsel %vm2026, %v2017, %v2019
        %v2031 = vsel %vm2026, %v2015, %v2017
        %v2032 = vsel %vm2026, %v2013, %v2015
        %v2033 = vsel %vm2026, %v2011, %v2013
        %v2034 = vsel %vm2026, %v2025, %v2011
        %v2035 = vperm.slane %v1894, 2
        %v2036 = vperm.slane %v1895, 2
        %v2037 = vperm.slane %v1896, 2
        %v2038 = vperm.slane %v1897, 2
        %v2039 = vperm.slane %v1898, 2
        %v2040 = vperm.slane %v1899, 2
        %v2041 = vperm.slane %v1900, 2
        %v2042 = vperm.slane %v1901, 2
        %v2043 = vmul.f32 %v2034, %v2035
        %v2044 = vmul.f32 %v2033, %v2036
        %v2045 = vmul.f32 %v2032, %v2037
        %v2046 = vmul.f32 %v2031, %v2038
        %v2047 = vmul.f32 %v2030, %v2039
        %v2048 = vmul.f32 %v2029, %v2040
        %v2049 = vmul.f32 %v2028, %v2041
        %v2050 = vmul.f32 %v2027, %v2042
        %2051 = vst [vmem:[#allocation2 + $0x80] sm:$0xff] %v2043
        %2052 = vst [vmem:[#allocation2 + $0x88] sm:$0xff] %v2044
        %2053 = vst [vmem:[#allocation2 + $0x90] sm:$0xff] %v2045
        %2054 = vst [vmem:[#allocation2 + $0x98] sm:$0xff] %v2046
        %2055 = vst [vmem:[#allocation2 + $0xa0] sm:$0xff] %v2047
        %2056 = vst [vmem:[#allocation2 + $0xa8] sm:$0xff] %v2048
        %2057 = vst [vmem:[#allocation2 + $0xb0] sm:$0xff] %v2049
        %2058 = vst [vmem:[#allocation2 + $0xb8] sm:$0xff] %v2050
        %2059 = vrot.lane.b32.xlu0 %v1886, 1
        %v2060 = vpop.permute.xlu0 %2059
        %2061 = vrot.lane.b32.xlu0 %v1887, 1
        %v2062 = vpop.permute.xlu0 %2061
        %2063 = vrot.lane.b32.xlu0 %v1888, 1
        %v2064 = vpop.permute.xlu0 %2063
        %2065 = vrot.lane.b32.xlu0 %v1889, 1
        %v2066 = vpop.permute.xlu0 %2065
        %2067 = vrot.lane.b32.xlu0 %v1890, 1
        %v2068 = vpop.permute.xlu0 %2067
        %2069 = vrot.lane.b32.xlu0 %v1891, 1
        %v2070 = vpop.permute.xlu0 %2069
        %2071 = vrot.lane.b32.xlu0 %v1892, 1
        %v2072 = vpop.permute.xlu0 %2071
        %2073 = vrot.lane.b32.xlu0 %v1893, 1
        %v2074 = vpop.permute.xlu0 %2073
        %vm2075 = vcmp.lt.s32.totalorder %v1927, 1
        %v2076 = vsel %vm2075, %v2072, %v2074
        %v2077 = vsel %vm2075, %v2070, %v2072
        %v2078 = vsel %vm2075, %v2068, %v2070
        %v2079 = vsel %vm2075, %v2066, %v2068
        %v2080 = vsel %vm2075, %v2064, %v2066
        %v2081 = vsel %vm2075, %v2062, %v2064
        %v2082 = vsel %vm2075, %v2060, %v2062
        %v2083 = vsel %vm2075, %v2074, %v2060
        %v2084 = vperm.slane %v1894, 3
        %v2085 = vperm.slane %v1895, 3
        %v2086 = vperm.slane %v1896, 3
        %v2087 = vperm.slane %v1897, 3
        %v2088 = vperm.slane %v1898, 3
        %v2089 = vperm.slane %v1899, 3
        %v2090 = vperm.slane %v1900, 3
        %v2091 = vperm.slane %v1901, 3
        %v2092 = vmul.f32 %v2083, %v2084
        %v2093 = vmul.f32 %v2082, %v2085
        %v2094 = vmul.f32 %v2081, %v2086
        %v2095 = vmul.f32 %v2080, %v2087
        %v2096 = vmul.f32 %v2079, %v2088
        %v2097 = vmul.f32 %v2078, %v2089
        %v2098 = vmul.f32 %v2077, %v2090
        %v2099 = vmul.f32 %v2076, %v2091
        %2100 = vst [vmem:[#allocation2 + $0xc0] sm:$0xff] %v2092
        %2101 = vst [vmem:[#allocation2 + $0xc8] sm:$0xff] %v2093
        %2102 = vst [vmem:[#allocation2 + $0xd0] sm:$0xff] %v2094
        %2103 = vst [vmem:[#allocation2 + $0xd8] sm:$0xff] %v2095
        %2104 = vst [vmem:[#allocation2 + $0xe0] sm:$0xff] %v2096
        %2105 = vst [vmem:[#allocation2 + $0xe8] sm:$0xff] %v2097
        %2106 = vst [vmem:[#allocation2 + $0xf0] sm:$0xff] %v2098
        %2107 = vst [vmem:[#allocation2 + $0xf8] sm:$0xff] %v2099
        %v2108 = vperm.slane %v1894, 4
        %v2109 = vperm.slane %v1895, 4
        %v2110 = vperm.slane %v1896, 4
        %v2111 = vperm.slane %v1897, 4
        %v2112 = vperm.slane %v1898, 4
        %v2113 = vperm.slane %v1899, 4
        %v2114 = vperm.slane %v1900, 4
        %v2115 = vperm.slane %v1901, 4
        %v2116 = vmul.f32 %v1886, %v2108
        %v2117 = vmul.f32 %v1887, %v2109
        %v2118 = vmul.f32 %v1888, %v2110
        %v2119 = vmul.f32 %v1889, %v2111
        %v2120 = vmul.f32 %v1890, %v2112
        %v2121 = vmul.f32 %v1891, %v2113
        %v2122 = vmul.f32 %v1892, %v2114
        %v2123 = vmul.f32 %v1893, %v2115
        %2124 = vst [vmem:[#allocation2 + $0x100] sm:$0xff] %v2116
        %2125 = vst [vmem:[#allocation2 + $0x108] sm:$0xff] %v2117
        %2126 = vst [vmem:[#allocation2 + $0x110] sm:$0xff] %v2118
        %2127 = vst [vmem:[#allocation2 + $0x118] sm:$0xff] %v2119
        %2128 = vst [vmem:[#allocation2 + $0x120] sm:$0xff] %v2120
        %2129 = vst [vmem:[#allocation2 + $0x128] sm:$0xff] %v2121
        %2130 = vst [vmem:[#allocation2 + $0x130] sm:$0xff] %v2122
        %2131 = vst [vmem:[#allocation2 + $0x138] sm:$0xff] %v2123
        %2132 = vrot.lane.b32.xlu0 %v1886, 127
        %v2133 = vpop.permute.xlu0 %2132
        %2134 = vrot.lane.b32.xlu0 %v1887, 127
        %v2135 = vpop.permute.xlu0 %2134
        %2136 = vrot.lane.b32.xlu0 %v1888, 127
        %v2137 = vpop.permute.xlu0 %2136
        %2138 = vrot.lane.b32.xlu0 %v1889, 127
        %v2139 = vpop.permute.xlu0 %2138
        %2140 = vrot.lane.b32.xlu0 %v1890, 127
        %v2141 = vpop.permute.xlu0 %2140
        %2142 = vrot.lane.b32.xlu0 %v1891, 127
        %v2143 = vpop.permute.xlu0 %2142
        %2144 = vrot.lane.b32.xlu0 %v1892, 127
        %v2145 = vpop.permute.xlu0 %2144
        %2146 = vrot.lane.b32.xlu0 %v1893, 127
        %v2147 = vpop.permute.xlu0 %2146
        %vm2148 = vcmp.lt.s32.totalorder %v1927, 127
        %v2149 = vsel %vm2148, %v2145, %v2147
        %v2150 = vsel %vm2148, %v2143, %v2145
        %v2151 = vsel %vm2148, %v2141, %v2143
        %v2152 = vsel %vm2148, %v2139, %v2141
        %v2153 = vsel %vm2148, %v2137, %v2139
        %v2154 = vsel %vm2148, %v2135, %v2137
        %v2155 = vsel %vm2148, %v2133, %v2135
        %v2156 = vsel %vm2148, %v2147, %v2133
        %v2157 = vperm.slane %v1894, 5
        %v2158 = vperm.slane %v1895, 5
        %v2159 = vperm.slane %v1896, 5
        %v2160 = vperm.slane %v1897, 5
        %v2161 = vperm.slane %v1898, 5
        %v2162 = vperm.slane %v1899, 5
        %v2163 = vperm.slane %v1900, 5
        %v2164 = vperm.slane %v1901, 5
        %v2165 = vmul.f32 %v2155, %v2157
        %v2166 = vmul.f32 %v2154, %v2158
        %v2167 = vmul.f32 %v2153, %v2159
        %v2168 = vmul.f32 %v2152, %v2160
        %v2169 = vmul.f32 %v2151, %v2161
        %v2170 = vmul.f32 %v2150, %v2162
        %v2171 = vmul.f32 %v2149, %v2163
        %v2172 = vmul.f32 %v2156, %v2164
        %2173 = vst [vmem:[#allocation2 + $0x140] sm:$0xff] %v2165
        %2174 = vst [vmem:[#allocation2 + $0x148] sm:$0xff] %v2166
        %2175 = vst [vmem:[#allocation2 + $0x150] sm:$0xff] %v2167
        %2176 = vst [vmem:[#allocation2 + $0x158] sm:$0xff] %v2168
        %2177 = vst [vmem:[#allocation2 + $0x160] sm:$0xff] %v2169
        %2178 = vst [vmem:[#allocation2 + $0x168] sm:$0xff] %v2170
        %2179 = vst [vmem:[#allocation2 + $0x170] sm:$0xff] %v2171
        %2180 = vst [vmem:[#allocation2 + $0x178] sm:$0xff] %v2172
        %2181 = vrot.lane.b32.xlu0 %v1886, 97
        %v2182 = vpop.permute.xlu0 %2181
        %2183 = vrot.lane.b32.xlu0 %v1887, 97
        %v2184 = vpop.permute.xlu0 %2183
        %2185 = vrot.lane.b32.xlu0 %v1888, 97
        %v2186 = vpop.permute.xlu0 %2185
        %2187 = vrot.lane.b32.xlu0 %v1889, 97
        %v2188 = vpop.permute.xlu0 %2187
        %2189 = vrot.lane.b32.xlu0 %v1890, 97
        %v2190 = vpop.permute.xlu0 %2189
        %2191 = vrot.lane.b32.xlu0 %v1891, 97
        %v2192 = vpop.permute.xlu0 %2191
        %2193 = vrot.lane.b32.xlu0 %v1892, 97
        %v2194 = vpop.permute.xlu0 %2193
        %2195 = vrot.lane.b32.xlu0 %v1893, 97
        %v2196 = vpop.permute.xlu0 %2195
        %vm2197 = vcmp.lt.s32.totalorder %v1927, 97
        %v2198 = vsel %vm2197, %v2194, %v2196
        %v2199 = vsel %vm2197, %v2192, %v2194
        %v2200 = vsel %vm2197, %v2190, %v2192
        %v2201 = vsel %vm2197, %v2188, %v2190
        %v2202 = vsel %vm2197, %v2186, %v2188
        %v2203 = vsel %vm2197, %v2184, %v2186
        %v2204 = vsel %vm2197, %v2182, %v2184
        %v2205 = vsel %vm2197, %v2196, %v2182
        %v2206 = vperm.slane %v1894, 6
        %v2207 = vperm.slane %v1895, 6
        %v2208 = vperm.slane %v1896, 6
        %v2209 = vperm.slane %v1897, 6
        %v2210 = vperm.slane %v1898, 6
        %v2211 = vperm.slane %v1899, 6
        %v2212 = vperm.slane %v1900, 6
        %v2213 = vperm.slane %v1901, 6
        %v2214 = vmul.f32 %v2204, %v2206
        %v2215 = vmul.f32 %v2203, %v2207
        %v2216 = vmul.f32 %v2202, %v2208
        %v2217 = vmul.f32 %v2201, %v2209
        %v2218 = vmul.f32 %v2200, %v2210
        %v2219 = vmul.f32 %v2199, %v2211
        %v2220 = vmul.f32 %v2198, %v2212
        %v2221 = vmul.f32 %v2205, %v2213
        %2222 = vst [vmem:[#allocation2 + $0x180] sm:$0xff] %v2214
        %2223 = vst [vmem:[#allocation2 + $0x188] sm:$0xff] %v2215
        %2224 = vst [vmem:[#allocation2 + $0x190] sm:$0xff] %v2216
        %2225 = vst [vmem:[#allocation2 + $0x198] sm:$0xff] %v2217
        %2226 = vst [vmem:[#allocation2 + $0x1a0] sm:$0xff] %v2218
        %2227 = vst [vmem:[#allocation2 + $0x1a8] sm:$0xff] %v2219
        %2228 = vst [vmem:[#allocation2 + $0x1b0] sm:$0xff] %v2220
        %2229 = vst [vmem:[#allocation2 + $0x1b8] sm:$0xff] %v2221
        %2230 = vrot.lane.b32.xlu0 %v1886, 96
        %v2231 = vpop.permute.xlu0 %2230
        %2232 = vrot.lane.b32.xlu0 %v1887, 96
        %v2233 = vpop.permute.xlu0 %2232
        %2234 = vrot.lane.b32.xlu0 %v1888, 96
        %v2235 = vpop.permute.xlu0 %2234
        %2236 = vrot.lane.b32.xlu0 %v1889, 96
        %v2237 = vpop.permute.xlu0 %2236
        %2238 = vrot.lane.b32.xlu0 %v1890, 96
        %v2239 = vpop.permute.xlu0 %2238
        %2240 = vrot.lane.b32.xlu0 %v1891, 96
        %v2241 = vpop.permute.xlu0 %2240
        %2242 = vrot.lane.b32.xlu0 %v1892, 96
        %v2243 = vpop.permute.xlu0 %2242
        %2244 = vrot.lane.b32.xlu0 %v1893, 96
        %v2245 = vpop.permute.xlu0 %2244
        %vm2246 = vcmp.lt.s32.totalorder %v1927, 96
        %v2247 = vsel %vm2246, %v2243, %v2245
        %v2248 = vsel %vm2246, %v2241, %v2243
        %v2249 = vsel %vm2246, %v2239, %v2241
        %v2250 = vsel %vm2246, %v2237, %v2239
        %v2251 = vsel %vm2246, %v2235, %v2237
        %v2252 = vsel %vm2246, %v2233, %v2235
        %v2253 = vsel %vm2246, %v2231, %v2233
        %v2254 = vsel %vm2246, %v2245, %v2231
        %v2255 = vperm.slane %v1894, 7
        %v2256 = vperm.slane %v1895, 7
        %v2257 = vperm.slane %v1896, 7
        %v2258 = vperm.slane %v1897, 7
        %v2259 = vperm.slane %v1898, 7
        %v2260 = vperm.slane %v1899, 7
        %v2261 = vperm.slane %v1900, 7
        %v2262 = vperm.slane %v1901, 7
        %v2263 = vmul.f32 %v2253, %v2255
        %v2264 = vmul.f32 %v2252, %v2256
        %v2265 = vmul.f32 %v2251, %v2257
        %v2266 = vmul.f32 %v2250, %v2258
        %v2267 = vmul.f32 %v2249, %v2259
        %v2268 = vmul.f32 %v2248, %v2260
        %v2269 = vmul.f32 %v2247, %v2261
        %v2270 = vmul.f32 %v2254, %v2262
        %2271 = vst [vmem:[#allocation2 + $0x1c0] sm:$0xff] %v2263
        %2272 = vst [vmem:[#allocation2 + $0x1c8] sm:$0xff] %v2264
        %2273 = vst [vmem:[#allocation2 + $0x1d0] sm:$0xff] %v2265
        %2274 = vst [vmem:[#allocation2 + $0x1d8] sm:$0xff] %v2266
        %2275 = vst [vmem:[#allocation2 + $0x1e0] sm:$0xff] %v2267
        %2276 = vst [vmem:[#allocation2 + $0x1e8] sm:$0xff] %v2268
        %2277 = vst [vmem:[#allocation2 + $0x1f0] sm:$0xff] %v2269
        %2278 = vst [vmem:[#allocation2 + $0x1f8] sm:$0xff] %v2270
        %2279 = vrot.lane.b32.xlu0 %v1886, 95
        %v2280 = vpop.permute.xlu0 %2279
        %2281 = vrot.lane.b32.xlu0 %v1887, 95
        %v2282 = vpop.permute.xlu0 %2281
        %2283 = vrot.lane.b32.xlu0 %v1888, 95
        %v2284 = vpop.permute.xlu0 %2283
        %2285 = vrot.lane.b32.xlu0 %v1889, 95
        %v2286 = vpop.permute.xlu0 %2285
        %2287 = vrot.lane.b32.xlu0 %v1890, 95
        %v2288 = vpop.permute.xlu0 %2287
        %2289 = vrot.lane.b32.xlu0 %v1891, 95
        %v2290 = vpop.permute.xlu0 %2289
        %2291 = vrot.lane.b32.xlu0 %v1892, 95
        %v2292 = vpop.permute.xlu0 %2291
        %2293 = vrot.lane.b32.xlu0 %v1893, 95
        %v2294 = vpop.permute.xlu0 %2293
        %vm2295 = vcmp.lt.s32.totalorder %v1927, 95
        %v2296 = vsel %vm2295, %v2292, %v2294
        %v2297 = vsel %vm2295, %v2290, %v2292
        %v2298 = vsel %vm2295, %v2288, %v2290
        %v2299 = vsel %vm2295, %v2286, %v2288
        %v2300 = vsel %vm2295, %v2284, %v2286
        %v2301 = vsel %vm2295, %v2282, %v2284
        %v2302 = vsel %vm2295, %v2280, %v2282
        %v2303 = vsel %vm2295, %v2294, %v2280
        %v2304 = vperm.slane %v1902, 0
        %v2305 = vperm.slane %v1903, 0
        %v2306 = vperm.slane %v1904, 0
        %v2307 = vperm.slane %v1905, 0
        %v2308 = vperm.slane %v1906, 0
        %v2309 = vperm.slane %v1907, 0
        %v2310 = vperm.slane %v1908, 0
        %v2311 = vperm.slane %v1909, 0
        %v2312 = vmul.f32 %v2302, %v2304
        %v2313 = vmul.f32 %v2301, %v2305
        %v2314 = vmul.f32 %v2300, %v2306
        %v2315 = vmul.f32 %v2299, %v2307
        %v2316 = vmul.f32 %v2298, %v2308
        %v2317 = vmul.f32 %v2297, %v2309
        %v2318 = vmul.f32 %v2296, %v2310
        %v2319 = vmul.f32 %v2303, %v2311
        %2320 = vst [vmem:[#allocation2 + $0x200] sm:$0xff] %v2312
        %2321 = vst [vmem:[#allocation2 + $0x208] sm:$0xff] %v2313
        %2322 = vst [vmem:[#allocation2 + $0x210] sm:$0xff] %v2314
        %2323 = vst [vmem:[#allocation2 + $0x218] sm:$0xff] %v2315
        %2324 = vst [vmem:[#allocation2 + $0x220] sm:$0xff] %v2316
        %2325 = vst [vmem:[#allocation2 + $0x228] sm:$0xff] %v2317
        %2326 = vst [vmem:[#allocation2 + $0x230] sm:$0xff] %v2318
        %2327 = vst [vmem:[#allocation2 + $0x238] sm:$0xff] %v2319
        %v2328 = vld [vmem:[%s7] sm:$0xf]
        %v2329 = vld [vmem:[#allocation2] sm:$0xff]
        %v2330 = vld [vmem:[#allocation2 + $0x8] sm:$0xff]
        %v2331 = vld [vmem:[#allocation2 + $0x10] sm:$0xff]
        %v2332 = vld [vmem:[#allocation2 + $0x18] sm:$0xff]
        %v2333 = vld [vmem:[#allocation2 + $0x20] sm:$0xff]
        %v2334 = vld [vmem:[#allocation2 + $0x28] sm:$0xff]
        %v2335 = vld [vmem:[#allocation2 + $0x30] sm:$0xff]
        %v2336 = vld [vmem:[#allocation2 + $0x38] sm:$0xff]
        %v2337 = vld [vmem:[#allocation2 + $0x40] sm:$0xff]
        %v2338 = vld [vmem:[#allocation2 + $0x48] sm:$0xff]
        %v2339 = vld [vmem:[#allocation2 + $0x50] sm:$0xff]
        %v2340 = vld [vmem:[#allocation2 + $0x58] sm:$0xff]
        %v2341 = vld [vmem:[#allocation2 + $0x60] sm:$0xff]
        %v2342 = vld [vmem:[#allocation2 + $0x68] sm:$0xff]
        %v2343 = vld [vmem:[#allocation2 + $0x70] sm:$0xff]
        %v2344 = vld [vmem:[#allocation2 + $0x78] sm:$0xff]
        %v2345 = vld [vmem:[#allocation2 + $0x80] sm:$0xff]
        %v2346 = vld [vmem:[#allocation2 + $0x88] sm:$0xff]
        %v2347 = vld [vmem:[#allocation2 + $0x90] sm:$0xff]
        %v2348 = vld [vmem:[#allocation2 + $0x98] sm:$0xff]
        %v2349 = vld [vmem:[#allocation2 + $0xa0] sm:$0xff]
        %v2350 = vld [vmem:[#allocation2 + $0xa8] sm:$0xff]
        %v2351 = vld [vmem:[#allocation2 + $0xb0] sm:$0xff]
        %v2352 = vld [vmem:[#allocation2 + $0xb8] sm:$0xff]
        %v2353 = vld [vmem:[#allocation2 + $0xc0] sm:$0xff]
        %v2354 = vld [vmem:[#allocation2 + $0xc8] sm:$0xff]
        %v2355 = vld [vmem:[#allocation2 + $0xd0] sm:$0xff]
        %v2356 = vld [vmem:[#allocation2 + $0xd8] sm:$0xff]
        %v2357 = vld [vmem:[#allocation2 + $0xe0] sm:$0xff]
        %v2358 = vld [vmem:[#allocation2 + $0xe8] sm:$0xff]
        %v2359 = vld [vmem:[#allocation2 + $0xf0] sm:$0xff]
        %v2360 = vld [vmem:[#allocation2 + $0xf8] sm:$0xff]
        %v2361 = vld [vmem:[#allocation2 + $0x100] sm:$0xff]
        %v2362 = vld [vmem:[#allocation2 + $0x108] sm:$0xff]
        %v2363 = vld [vmem:[#allocation2 + $0x110] sm:$0xff]
        %v2364 = vld [vmem:[#allocation2 + $0x118] sm:$0xff]
        %v2365 = vld [vmem:[#allocation2 + $0x120] sm:$0xff]
        %v2366 = vld [vmem:[#allocation2 + $0x128] sm:$0xff]
        %v2367 = vld [vmem:[#allocation2 + $0x130] sm:$0xff]
        %v2368 = vld [vmem:[#allocation2 + $0x138] sm:$0xff]
        %v2369 = vld [vmem:[#allocation2 + $0x140] sm:$0xff]
        %v2370 = vld [vmem:[#allocation2 + $0x148] sm:$0xff]
        %v2371 = vld [vmem:[#allocation2 + $0x150] sm:$0xff]
        %v2372 = vld [vmem:[#allocation2 + $0x158] sm:$0xff]
        %v2373 = vld [vmem:[#allocation2 + $0x160] sm:$0xff]
        %v2374 = vld [vmem:[#allocation2 + $0x168] sm:$0xff]
        %v2375 = vld [vmem:[#allocation2 + $0x170] sm:$0xff]
        %v2376 = vld [vmem:[#allocation2 + $0x178] sm:$0xff]
        %v2377 = vld [vmem:[#allocation2 + $0x180] sm:$0xff]
        %v2378 = vld [vmem:[#allocation2 + $0x188] sm:$0xff]
        %v2379 = vld [vmem:[#allocation2 + $0x190] sm:$0xff]
        %v2380 = vld [vmem:[#allocation2 + $0x198] sm:$0xff]
        %v2381 = vld [vmem:[#allocation2 + $0x1a0] sm:$0xff]
        %v2382 = vld [vmem:[#allocation2 + $0x1a8] sm:$0xff]
        %v2383 = vld [vmem:[#allocation2 + $0x1b0] sm:$0xff]
        %v2384 = vld [vmem:[#allocation2 + $0x1b8] sm:$0xff]
        %v2385 = vld [vmem:[#allocation2 + $0x1c0] sm:$0xff]
        %v2386 = vld [vmem:[#allocation2 + $0x1c8] sm:$0xff]
        %v2387 = vld [vmem:[#allocation2 + $0x1d0] sm:$0xff]
        %v2388 = vld [vmem:[#allocation2 + $0x1d8] sm:$0xff]
        %v2389 = vld [vmem:[#allocation2 + $0x1e0] sm:$0xff]
        %v2390 = vld [vmem:[#allocation2 + $0x1e8] sm:$0xff]
        %v2391 = vld [vmem:[#allocation2 + $0x1f0] sm:$0xff]
        %v2392 = vld [vmem:[#allocation2 + $0x1f8] sm:$0xff]
        %v2393 = vld [vmem:[#allocation2 + $0x200] sm:$0xff]
        %v2394 = vld [vmem:[#allocation2 + $0x208] sm:$0xff]
        %v2395 = vld [vmem:[#allocation2 + $0x210] sm:$0xff]
        %v2396 = vld [vmem:[#allocation2 + $0x218] sm:$0xff]
        %v2397 = vld [vmem:[#allocation2 + $0x220] sm:$0xff]
        %v2398 = vld [vmem:[#allocation2 + $0x228] sm:$0xff]
        %v2399 = vld [vmem:[#allocation2 + $0x230] sm:$0xff]
        %v2400 = vld [vmem:[#allocation2 + $0x238] sm:$0xff]
        %vm2401 = vcmask 588800
        %v2403 = vsel %vm2401, %v2328, 0
        %2405 = vmatpush.msra.mxu0 0.0
        %2406 = vmatpush.msra.mxu0 0.0
        %2407 = vmatpush.msra.mxu0 0.0
        %2408 = vmatpush.msra.mxu0 0.0
        %2409 = vmatpush.msra.mxu0 0.0
        %2410 = vmatpush.msra.mxu0 0.0
        %2411 = vmatpush.msra.mxu0 0.0
        %2412 = vmatpush.msra.mxu0 %v2393
        %2413 = vmatpush.msra.mxu0 %v2385
        %2414 = vmatpush.msra.mxu0 %v2377
        %2415 = vmatpush.msra.mxu0 %v2369
        %2416 = vmatpush.msra.mxu0 %v2361
        %2417 = vmatpush.msra.mxu0 %v2353
        %2418 = vmatpush.msra.mxu0 %v2345
        %2419 = vmatpush.msra.mxu0 %v2337
        %2420 = vmatpush.msra.mxu0 %v2329
        %2421 = vmatmul.f32.gmra.mxu0 %v2403
        %v2422 = vpop.f32.mrf.mxu0
        %v2423 = vadd.f32 0.0, %v2422
        %2424 = vdwg.mxu0
        %2425 = vmatpush.msra.mxu0 0.0
        %2426 = vmatpush.msra.mxu0 0.0
        %2427 = vmatpush.msra.mxu0 0.0
        %2428 = vmatpush.msra.mxu0 0.0
        %2429 = vmatpush.msra.mxu0 0.0
        %2430 = vmatpush.msra.mxu0 0.0
        %2431 = vmatpush.msra.mxu0 0.0
        %2432 = vmatpush.msra.mxu0 %v2394
        %2433 = vmatpush.msra.mxu0 %v2386
        %2434 = vmatpush.msra.mxu0 %v2378
        %2435 = vmatpush.msra.mxu0 %v2370
        %2436 = vmatpush.msra.mxu0 %v2362
        %2437 = vmatpush.msra.mxu0 %v2354
        %2438 = vmatpush.msra.mxu0 %v2346
        %2439 = vmatpush.msra.mxu0 %v2338
        %2440 = vmatpush.msra.mxu0 %v2330
        %2441 = vmatmul.f32.gmra.mxu0 %v2403
        %v2442 = vpop.f32.mrf.mxu0
        %v2443 = vadd.f32 0.0, %v2442
        %2444 = vdwg.mxu0
        %2445 = vmatpush.msra.mxu0 0.0
        %2446 = vmatpush.msra.mxu0 0.0
        %2447 = vmatpush.msra.mxu0 0.0
        %2448 = vmatpush.msra.mxu0 0.0
        %2449 = vmatpush.msra.mxu0 0.0
        %2450 = vmatpush.msra.mxu0 0.0
        %2451 = vmatpush.msra.mxu0 0.0
        %2452 = vmatpush.msra.mxu0 %v2395
        %2453 = vmatpush.msra.mxu0 %v2387
        %2454 = vmatpush.msra.mxu0 %v2379
        %2455 = vmatpush.msra.mxu0 %v2371
        %2456 = vmatpush.msra.mxu0 %v2363
        %2457 = vmatpush.msra.mxu0 %v2355
        %2458 = vmatpush.msra.mxu0 %v2347
        %2459 = vmatpush.msra.mxu0 %v2339
        %2460 = vmatpush.msra.mxu0 %v2331
        %2461 = vmatmul.f32.gmra.mxu0 %v2403
        %v2462 = vpop.f32.mrf.mxu0
        %v2463 = vadd.f32 0.0, %v2462
        %2464 = vdwg.mxu0
        %2465 = vmatpush.msra.mxu0 0.0
        %2466 = vmatpush.msra.mxu0 0.0
        %2467 = vmatpush.msra.mxu0 0.0
        %2468 = vmatpush.msra.mxu0 0.0
        %2469 = vmatpush.msra.mxu0 0.0
        %2470 = vmatpush.msra.mxu0 0.0
        %2471 = vmatpush.msra.mxu0 0.0
        %2472 = vmatpush.msra.mxu0 %v2396
        %2473 = vmatpush.msra.mxu0 %v2388
        %2474 = vmatpush.msra.mxu0 %v2380
        %2475 = vmatpush.msra.mxu0 %v2372
        %2476 = vmatpush.msra.mxu0 %v2364
        %2477 = vmatpush.msra.mxu0 %v2356
        %2478 = vmatpush.msra.mxu0 %v2348
        %2479 = vmatpush.msra.mxu0 %v2340
        %2480 = vmatpush.msra.mxu0 %v2332
        %2481 = vmatmul.f32.gmra.mxu0 %v2403
        %v2482 = vpop.f32.mrf.mxu0
        %v2483 = vadd.f32 0.0, %v2482
        %2484 = vdwg.mxu0
        %2485 = vmatpush.msra.mxu0 0.0
        %2486 = vmatpush.msra.mxu0 0.0
        %2487 = vmatpush.msra.mxu0 0.0
        %2488 = vmatpush.msra.mxu0 0.0
        %2489 = vmatpush.msra.mxu0 0.0
        %2490 = vmatpush.msra.mxu0 0.0
        %2491 = vmatpush.msra.mxu0 0.0
        %2492 = vmatpush.msra.mxu0 %v2397
        %2493 = vmatpush.msra.mxu0 %v2389
        %2494 = vmatpush.msra.mxu0 %v2381
        %2495 = vmatpush.msra.mxu0 %v2373
        %2496 = vmatpush.msra.mxu0 %v2365
        %2497 = vmatpush.msra.mxu0 %v2357
        %2498 = vmatpush.msra.mxu0 %v2349
        %2499 = vmatpush.msra.mxu0 %v2341
        %2500 = vmatpush.msra.mxu0 %v2333
        %2501 = vmatmul.f32.gmra.mxu0 %v2403
        %v2502 = vpop.f32.mrf.mxu0
        %v2503 = vadd.f32 0.0, %v2502
        %2504 = vdwg.mxu0
        %2505 = vmatpush.msra.mxu0 0.0
        %2506 = vmatpush.msra.mxu0 0.0
        %2507 = vmatpush.msra.mxu0 0.0
        %2508 = vmatpush.msra.mxu0 0.0
        %2509 = vmatpush.msra.mxu0 0.0
        %2510 = vmatpush.msra.mxu0 0.0
        %2511 = vmatpush.msra.mxu0 0.0
        %2512 = vmatpush.msra.mxu0 %v2398
        %2513 = vmatpush.msra.mxu0 %v2390
        %2514 = vmatpush.msra.mxu0 %v2382
        %2515 = vmatpush.msra.mxu0 %v2374
        %2516 = vmatpush.msra.mxu0 %v2366
        %2517 = vmatpush.msra.mxu0 %v2358
        %2518 = vmatpush.msra.mxu0 %v2350
        %2519 = vmatpush.msra.mxu0 %v2342
        %2520 = vmatpush.msra.mxu0 %v2334
        %2521 = vmatmul.f32.gmra.mxu0 %v2403
        %v2522 = vpop.f32.mrf.mxu0
        %v2523 = vadd.f32 0.0, %v2522
        %2524 = vdwg.mxu0
        %2525 = vmatpush.msra.mxu0 0.0
        %2526 = vmatpush.msra.mxu0 0.0
        %2527 = vmatpush.msra.mxu0 0.0
        %2528 = vmatpush.msra.mxu0 0.0
        %2529 = vmatpush.msra.mxu0 0.0
        %2530 = vmatpush.msra.mxu0 0.0
        %2531 = vmatpush.msra.mxu0 0.0
        %2532 = vmatpush.msra.mxu0 %v2399
        %2533 = vmatpush.msra.mxu0 %v2391
        %2534 = vmatpush.msra.mxu0 %v2383
        %2535 = vmatpush.msra.mxu0 %v2375
        %2536 = vmatpush.msra.mxu0 %v2367
        %2537 = vmatpush.msra.mxu0 %v2359
        %2538 = vmatpush.msra.mxu0 %v2351
        %2539 = vmatpush.msra.mxu0 %v2343
        %2540 = vmatpush.msra.mxu0 %v2335
        %2541 = vmatmul.f32.gmra.mxu0 %v2403
        %v2542 = vpop.f32.mrf.mxu0
        %v2543 = vadd.f32 0.0, %v2542
        %2544 = vdwg.mxu0
        %2545 = vmatpush.msra.mxu0 0.0
        %2546 = vmatpush.msra.mxu0 0.0
        %2547 = vmatpush.msra.mxu0 0.0
        %2548 = vmatpush.msra.mxu0 0.0
        %2549 = vmatpush.msra.mxu0 0.0
        %2550 = vmatpush.msra.mxu0 0.0
        %2551 = vmatpush.msra.mxu0 0.0
        %2552 = vmatpush.msra.mxu0 %v2400
        %2553 = vmatpush.msra.mxu0 %v2392
        %2554 = vmatpush.msra.mxu0 %v2384
        %2555 = vmatpush.msra.mxu0 %v2376
        %2556 = vmatpush.msra.mxu0 %v2368
        %2557 = vmatpush.msra.mxu0 %v2360
        %2558 = vmatpush.msra.mxu0 %v2352
        %2559 = vmatpush.msra.mxu0 %v2344
        %2560 = vmatpush.msra.mxu0 %v2336
        %2561 = vmatmul.f32.gmra.mxu0 %v2403
        %v2562 = vpop.f32.mrf.mxu0
        %v2563 = vadd.f32 0.0, %v2562
        %2564 = vdwg.mxu0
        %v2573 = vrot.slane %v2443, 4
        %v2574 = vrot.slane %v2483, 4
        %v2575 = vrot.slane %v2523, 4
        %v2576 = vrot.slane %v2563, 4
        %v2577 = vsel %vm1885, %v2423, %v2573
        %v2578 = vsel %vm1885, %v2463, %v2574
        %v2579 = vsel %vm1885, %v2503, %v2575
        %v2580 = vsel %vm1885, %v2543, %v2576
        %2585 = vst [vmem:[%s409] sm:$0xff] %v2577
        %2586 = vst [vmem:[%s409 + $0x8] sm:$0xff] %v2578
        %2587 = vst [vmem:[%s409 + $0x10] sm:$0xff] %v2579
        %2588 = vst [vmem:[%s409 + $0x18] sm:$0xff] %v2580
        %v2589 = vsel %vm1885, %v2423, 0.0
        %v2590 = vsel %vm1885, %v2443, 0.0
        %v2591 = vadd.f32 %v2589, %v2590
        %v2592 = vsel %vm1885, %v2463, 0.0
        %v2593 = vadd.f32 %v2591, %v2592
        %v2594 = vsel %vm1885, %v2483, 0.0
        %v2595 = vadd.f32 %v2593, %v2594
        %v2596 = vsel %vm1885, %v2503, 0.0
        %v2597 = vadd.f32 %v2595, %v2596
        %v2598 = vsel %vm1885, %v2523, 0.0
        %v2599 = vadd.f32 %v2597, %v2598
        %v2600 = vsel %vm1885, %v2543, 0.0
        %v2601 = vadd.f32 %v2599, %v2600
        %v2602 = vsel %vm1885, %v2563, 0.0
        %v2603 = vadd.f32 %v2601, %v2602
        %2604 = vadd.xlane.f32.xlu0 %v2603
        %v2605 = vpop.xlane.xlu0 %2604
        %vm2606 = vcmask 3072
        %2607 = vst.msk [vmem:[%s413] sm:$0xf] %vm2606, %v2605
        %v2608 = vmul.f32 %v2423, %v2423
        %v2609 = vmul.f32 %v2443, %v2443
        %v2610 = vmul.f32 %v2463, %v2463
        %v2611 = vmul.f32 %v2483, %v2483
        %v2612 = vmul.f32 %v2503, %v2503
        %v2613 = vmul.f32 %v2523, %v2523
        %v2614 = vmul.f32 %v2543, %v2543
        %v2615 = vmul.f32 %v2563, %v2563
        %v2616 = vsel %vm1885, %v2608, 0.0
        %v2617 = vsel %vm1885, %v2609, 0.0
        %v2618 = vadd.f32 %v2616, %v2617
        %v2619 = vsel %vm1885, %v2610, 0.0
        %v2620 = vadd.f32 %v2618, %v2619
        %v2621 = vsel %vm1885, %v2611, 0.0
        %v2622 = vadd.f32 %v2620, %v2621
        %v2623 = vsel %vm1885, %v2612, 0.0
        %v2624 = vadd.f32 %v2622, %v2623
        %v2625 = vsel %vm1885, %v2613, 0.0
        %v2626 = vadd.f32 %v2624, %v2625
        %v2627 = vsel %vm1885, %v2614, 0.0
        %v2628 = vadd.f32 %v2626, %v2627
        %v2629 = vsel %vm1885, %v2615, 0.0
        %v2630 = vadd.f32 %v2628, %v2629
        %2631 = vadd.xlane.f32.xlu0 %v2630
        %v2632 = vpop.xlane.xlu0 %2631
        %2633 = vst.msk [vmem:[%s417] sm:$0xf] %vm2606, %v2632
        %p2634 = scmp.lt.s32.totalorder %s23, 1
        %s2635 = scalar_select %p2634, %s23, 1
        %s2636 = smul.addr %s2635, 8
        %s2637 = smul.addr %s2636, 4
        %s2638 = scalar_lea.vmem %s8, %s2637
        %p2639 = scmp.lt.s32.totalorder %s23, 1
        %s2640 = scalar_select %p2639, %s23, 1
        %s2641 = smul.addr %s2640, 4
        %s2642 = scalar_lea.vmem %s9, %s2641
        %p2643 = scmp.lt.s32.totalorder %s23, 1
        %s2644 = scalar_select %p2643, %s23, 1
        %s2645 = smul.addr %s2644, 4
        %s2646 = scalar_lea.vmem %s10, %s2645
        // Predicated region
        $region57: #{up_forward.2} parent=51 // pred_check
          %p2647 = pneg %p219
        $region58: #{up_forward.2} parent=51 // pred_check_branch
          %2649 = sbr.rel (%p2647) target = $region60
        $region59: #{up_forward.2} parent=51 // pred_region
          _
        $region60: #{up_forward.2} parent=51 // pred_fallthru
          _
        // Predicated region
        $region61: #{up_forward.2} parent=51 // pred_check
          %p2650 = pneg %p245
        $region62: #{up_forward.2} parent=51 // pred_check_branch
          %2652 = sbr.rel (%p2650) target = $region64
        $region63: #{up_forward.2} parent=51 // pred_region
          _
        $region64: #{up_forward.2} parent=51 // pred_fallthru
          _
        // Predicated region
        $region65: #{up_forward.2} parent=51 // pred_check
          %p2653 = pneg %p271
        $region66: #{up_forward.2} parent=51 // pred_check_branch
          %2655 = sbr.rel (%p2653) target = $region68
        $region67: #{up_forward.2} parent=51 // pred_region
          _
        $region68: #{up_forward.2} parent=51 // pred_fallthru
          _
      $region52: #{up_forward.2} parent=5 // pred_fallthru
        _
      %p2656 = scmp.le.s32.totalorder 2, %s18
      // Predicated region
      $region69: #{up_forward.2} parent=5 // pred_check
        %p2657 = pneg %p2656
      $region70: #{up_forward.2} parent=5 // pred_check_branch
        %2659 = sbr.rel (%p2657) target = $region72
      $region71: #{up_forward.2} parent=5 // pred_region
        %s2660 = ssub.s32 %s18, 2
        // Predicated region
        $region73: #{up_forward.2} parent=71 // pred_check
          %p2661 = pneg %p225
        $region74: #{up_forward.2} parent=71 // pred_check_branch
          %2663 = sbr.rel (%p2661) target = $region76
        $region75: #{up_forward.2} parent=71 // pred_region
          %p2664 = scmp.lt.s32.totalorder %s24, 1
          %s2665 = scalar_select %p2664, %s24, 1
          %s2666 = smul.addr %s2665, 8
          %s2667 = smul.addr %s2666, 4
          %s2668 = scalar_lea.vmem %s8, %s2667
        $region76: #{up_forward.2} parent=71 // pred_fallthru
          _
        // Predicated region
        $region77: #{up_forward.2} parent=71 // pred_check
          %p2669 = pneg %p251
        $region78: #{up_forward.2} parent=71 // pred_check_branch
          %2671 = sbr.rel (%p2669) target = $region80
        $region79: #{up_forward.2} parent=71 // pred_region
          %p2672 = scmp.lt.s32.totalorder %s24, 1
          %s2673 = scalar_select %p2672, %s24, 1
          %s2674 = smul.addr %s2673, 4
          %s2675 = scalar_lea.vmem %s9, %s2674
        $region80: #{up_forward.2} parent=71 // pred_fallthru
          _
        // Predicated region
        $region81: #{up_forward.2} parent=71 // pred_check
          %p2676 = pneg %p277
        $region82: #{up_forward.2} parent=71 // pred_check_branch
          %2678 = sbr.rel (%p2676) target = $region84
        $region83: #{up_forward.2} parent=71 // pred_region
          %p2679 = scmp.lt.s32.totalorder %s24, 1
          %s2680 = scalar_select %p2679, %s24, 1
          %s2681 = smul.addr %s2680, 4
          %s2682 = scalar_lea.vmem %s10, %s2681
        $region84: #{up_forward.2} parent=71 // pred_fallthru
          _
      $region72: #{up_forward.2} parent=5 // pred_fallthru
        _
    $region6: #{up_forward.2} parent=1 // loop_footer
      %s22 = sadd.s32 1, %s18
    $region7: #{up_forward.2} parent=1 // loop_footer_branch
      %17 = sbr.rel target = $region3
    $region8: #{up_forward.2} parent=1 // loop_exit
      _
    %2683 = vsyncpa [#allocation4], 1
    %s2684 = scalar_lea.sflag [#allocation4], 1
    %2685 = vsyncpa %s2684, 1

</llo_original>
